<compile_context>
chip_gen: v5e
topology: v5e:2x2
jax: 0.10.0
libtpu: 0.0.40
codegen_flags: <defaults>
</compile_context>

<pallas_src>
import math
import functools

import jax
import jax.numpy as jnp
from jax import lax
from jax.experimental import pallas as pl
from jax.experimental.pallas import tpu as pltpu


# ----------------------------------------------------------------------------
# Config (mirrors the DictConfig fields the module reads)
# ----------------------------------------------------------------------------
PATCH_SIZE = 48        # cfg.patch_size (also PE d_model)
OUTPUT_CHANNELS = 8    # len(cfg.number_of_different_edges) -> number of cls tokens
EMBED_SIZE = 64        # cfg.output_channels -> embedding size
POS_MAX_LEN = 128      # cfg.positional_max_length
ADD_ATTENTION = True   # cfg.add_attention
LN_EPS = 1e-5


# ----------------------------------------------------------------------------
# Parameter / PE construction (deterministic, synthetic)
# ----------------------------------------------------------------------------
def sinusoidal_pe(max_len, d_model):
    pos = jnp.arange(max_len, dtype=jnp.float32)[:, None]
    div = jnp.exp(jnp.arange(0, d_model, 2, dtype=jnp.float32)
                  * (-math.log(10000.0) / d_model))
    pe = jnp.zeros((max_len, d_model), jnp.float32)
    pe = pe.at[:, 0::2].set(jnp.sin(pos * div))
    pe = pe.at[:, 1::2].set(jnp.cos(pos * div))
    return pe


def init_params(key, *, F=PATCH_SIZE, E=EMBED_SIZE, A=OUTPUT_CHANNELS):
    keys = jax.random.split(key, 13)
    s = 0.05
    return {
        "pe":   sinusoidal_pe(POS_MAX_LEN, PATCH_SIZE),                    # (max_len, patch)
        # LayerNorm(input_attention_mechanism) - non-trivial affine so folding is exercised
        "g1":   1.0 + 0.1 * jax.random.normal(keys[0], (1, F), jnp.float32),
        "b1":   0.1 * jax.random.normal(keys[1], (1, F), jnp.float32),
        # Linear(input_attention_mechanism -> embedding_size), stored (in, out)
        "wemb": s * jax.random.normal(keys[2], (F, E), jnp.float32),
        "bemb": s * jax.random.normal(keys[3], (1, E), jnp.float32),
        # LayerNorm(embedding_size)
        "g2":   1.0 + 0.1 * jax.random.normal(keys[4], (1, E), jnp.float32),
        "b2":   0.1 * jax.random.normal(keys[5], (1, E), jnp.float32),
        # cls_token: torch shape (1, A, E) -> stored squeezed as (A, E)
        "cls":  jax.random.normal(keys[6], (A, E), jnp.float32),
        # Q / K / V linears (E -> E), stored (in, out)
        "wq":   s * jax.random.normal(keys[7], (E, E), jnp.float32),
        "bq":   s * jax.random.normal(keys[8], (1, E), jnp.float32),
        "wk":   s * jax.random.normal(keys[9], (E, E), jnp.float32),
        "bk":   s * jax.random.normal(keys[10], (1, E), jnp.float32),
        "wv":   s * jax.random.normal(keys[11], (E, E), jnp.float32),
        "bv":   s * jax.random.normal(keys[12], (1, E), jnp.float32),
    }


# ----------------------------------------------------------------------------
# Pallas kernel: one grid step processes a (BB, F, P) slab -> (BB, 3, E) output
#
# small_ref packing (8, 128) f32:
#   row 0: B1 (E)          folded LN1-affine + embedding bias
#   row 1: B2 (3+E)        folded LN2-affine + [score | V] projection bias
#   row 2..4: c_cls (3, E) precomputed cls-block value contribution
#   row 5: m0 (3)          precomputed cls-block score max
#   row 6: z_cls (3)       precomputed cls-block exp-sum
# ----------------------------------------------------------------------------
def _edge_tok_kernel(x_ref, pe_ref, w1_ref, w2_ref, small_ref, out_ref):
    bb, ff, pp = x_ref.shape
    e = out_ref.shape[2]
    np_ = w2_ref.shape[1]                              # 3 + E

    # --- PE add + LN1 statistics in the DMA-native (BB, F, P) layout (sublane reductions) ---
    raw = x_ref[...] + pe_ref[...]                     # (BB, F, P)
    mu1 = jnp.mean(raw, axis=1, keepdims=True)         # (BB, 1, P)
    rc = raw - mu1
    var1 = jnp.mean(rc * rc, axis=1, keepdims=True)
    xn_t = rc * lax.rsqrt(var1 + LN_EPS)               # (BB, F, P); LN1 affine folded into W1

    # --- in-VMEM layout change (XLU) replaces the old wrapper-side HBM rearrange ---
    xn = jnp.transpose(xn_t, (0, 2, 1)).reshape(bb * pp, ff)      # (BB*P, F)

    # --- embedding projection: one flat MXU matmul, M = BB*P ---
    b1 = small_ref[0:1, :e]                            # (1, E)
    emb = jnp.dot(xn, w1_ref[...], preferred_element_type=jnp.float32) + b1

    # --- LN2 (affine folded into W2) ---
    mu2 = jnp.mean(emb, axis=-1, keepdims=True)
    ec = emb - mu2
    var2 = jnp.mean(ec * ec, axis=-1, keepdims=True)
    en = ec * lax.rsqrt(var2 + LN_EPS)                 # (BB*P, E)

    # --- fused [scores | V] projection: single flat matmul, N = 3+E (lanes 0..2 = scores) ---
    b2 = small_ref[1:2, :np_]                          # (1, 3+E)
    pv = jnp.dot(en, w2_ref[...], preferred_element_type=jnp.float32) + b2   # (BB*P, 3+E)
    pv3 = pv.reshape(bb, pp, np_)                      # (BB, P, 3+E)

    # --- flash-style merge with the precomputed (batch-independent) cls-key block ---
    m0 = small_ref[5:6, 0:3]                           # (1, 3)
    z_cls = small_ref[6:7, 0:3]                        # (1, 3)
    c_cls = small_ref[2:5, 0:e]                        # (3, E)

    s3 = pv3[:, :, 0:3]                                # (BB, P, 3) low-lane slice, no rotate
    m = jnp.maximum(jnp.max(s3, axis=1), m0)           # (BB, 3)
    p_en = jnp.exp(s3 - m[:, None, :])                 # (BB, P, 3)  (EUP slot)
    alpha = jnp.exp(m0 - m)                            # (BB, 3)
    den = jnp.sum(p_en, axis=1) + alpha * z_cls        # (BB, 3)

    # --- 3-query attention numerator as unrolled weighted sublane reductions ---
    # (avoids per-batch M=3 batched matmuls that scale badly with BB)
    outs = []
    for q in range(3):
        wq = p_en[:, :, q:q + 1]                       # (BB, P, 1) lane-broadcast weight
        num_q = jnp.sum(wq * pv3, axis=1)              # (BB, 3+E); lanes 0..2 are garbage
        out_q = (num_q[:, 3:3 + e] + alpha[:, q:q + 1] * c_cls[q:q + 1, :]) \
            / den[:, q:q + 1]                          # exact divide on tiny denominator
        outs.append(out_q)
    out = jnp.stack(outs, axis=1)                      # (BB, 3, E)
    out_ref[...] = out.astype(out_ref.dtype)


# ----------------------------------------------------------------------------
# Wrapper: parameter folding / batch-independent precompute in JAX, hot path in Pallas
# ----------------------------------------------------------------------------
def edge_tokenizer_forward(x, params, *, add_attention=ADD_ATTENTION, block_batch=64):
    B, C, H, W = x.shape
    P = PATCH_SIZE
    assert W % P == 0, "einops rearrange '(w p)' needs W divisible by patch_size"
    w = W // P
    F = C * H * w
    N = (C * H * W) // P
    assert N == P, "PE broadcast needs C*H*W // patch_size == patch_size (== d_model)"

    E = params["wq"].shape[0]
    A = params["cls"].shape[0]
    assert A >= 3 and E <= 125 and (3 + E) <= 128

    if not add_attention:
        # Without attention the result is cat(cls, emb)[:, :3] == cls[:3] (batch independent).
        return jnp.broadcast_to(params["cls"][None, :3, :], (B, 3, E)).astype(x.dtype)

    NP = 3 + E

    # ---- FREE layout view (no HBM pass): (B,C,H,W) -> (B, F, P); f = (c*H + h)*w + w_idx ----
    x_r = x.reshape(B, F, P)

    # ---- PE in the same (F, P) layout (pure reshape of pe[:P, :N]) ----
    pe_r = params["pe"][:P, :N].reshape(1, F, P)

    # ---- fold LN1 affine into the embedding weights, permute rows to (c,h,w) order ----
    W1 = params["g1"].reshape(F, 1) * params["wemb"]            # (F, E), rows in einops (w,h,c) order
    B1 = params["b1"] @ params["wemb"] + params["bemb"]         # (1, E)
    W1 = W1.reshape(w, H, C, E).transpose(2, 1, 0, 3).reshape(F, E)   # -> kernel (c,h,w) row order

    # ---- fold LN2 affine into K/V; fuse K with the 3 surviving query rows -> score columns ----
    g2 = params["g2"].reshape(E, 1)
    Wk = g2 * params["wk"]
    Bk = params["b2"] @ params["wk"] + params["bk"]             # (1, E)
    Wv = g2 * params["wv"]
    Bv = params["b2"] @ params["wv"] + params["bv"]             # (1, E)

    scale = 1.0 / math.sqrt(E)
    cls = params["cls"]
    qs = (cls[:3] @ params["wq"] + params["bq"]) * scale        # (3, E), pre-scaled queries
    Ws = Wk @ qs.T                                              # (E, 3)  score columns
    Bs = Bk @ qs.T                                              # (1, 3)

    W2 = jnp.concatenate([Ws, Wv], axis=1)                      # (E, 3+E)  [scores | V]
    B2 = jnp.concatenate([Bs, Bv], axis=1)                      # (1, 3+E)

    # ---- batch-independent cls-token attention block (flash-merge constants) ----
    k_cls = cls @ params["wk"] + params["bk"]                   # (A, E)
    v_cls = cls @ params["wv"] + params["bv"]                   # (A, E)
    s_cls = qs @ k_cls.T                                        # (3, A)
    m0 = jnp.max(s_cls, axis=-1)                                # (3,)
    p_cls = jnp.exp(s_cls - m0[:, None])
    z_cls = jnp.sum(p_cls, axis=-1)                             # (3,)
    c_cls = p_cls @ v_cls                                       # (3, E)

    # ---- pack the small constants into a single (8, 128) VMEM ref ----
    small = jnp.zeros((8, 128), jnp.float32)
    small = small.at[0, :E].set(B1[0])
    small = small.at[1, :NP].set(B2[0])
    small = small.at[2:5, :E].set(c_cls)
    small = small.at[5, :3].set(m0)
    small = small.at[6, :3].set(z_cls)

    # ---- Pallas call: BB elements per grid step; ragged last block handled by masking ----
    BB = min(block_batch, B)
    nb = pl.cdiv(B, BB)

    def cspec(a):
        nd = a.ndim
        return pl.BlockSpec(a.shape, lambda b, _n=nd: (0,) * _n)

    consts = (pe_r, W1, W2, small)

    # VMEM (per step, BB=64): input 2x590KiB double-buffered, constants <80KiB,
    # live intermediates ~7MiB -> well below the 32MiB scoped limit on all generations.
    out = pl.pallas_call(
        _edge_tok_kernel,
        out_shape=jax.ShapeDtypeStruct((B, 3, E), x.dtype),
        grid_spec=pltpu.PrefetchScalarGridSpec(
            num_scalar_prefetch=0,
            grid=(nb,),
            in_specs=[pl.BlockSpec((BB, F, P), lambda b: (b, 0, 0))]
                     + [cspec(a) for a in consts],
            out_specs=pl.BlockSpec((BB, 3, E), lambda b: (b, 0, 0)),
        ),
        compiler_params=pltpu.CompilerParams(
            dimension_semantics=("parallel",),       # shards grid steps across v7x's 2 TCs
            vmem_limit_bytes=32 * 1024 * 1024,
        ),
    )(x_r, *consts)
    return out


# ----------------------------------------------------------------------------
# Pure-JAX reference (mirrors the PyTorch forward) for correctness checking
# ----------------------------------------------------------------------------
def reference_forward(x, params, *, add_attention=ADD_ATTENTION):
    B, C, H, W = x.shape
    P = PATCH_SIZE
    N = (C * H * W) // P
    xf = x.reshape(B, P, N) + params["pe"][None, :P, :N]
    xp = xf.reshape(B, C, H, W)
    w = W // P
    F = w * H * C
    patches = xp.reshape(B, C, H, w, P).transpose(0, 4, 3, 2, 1).reshape(B, P, F)

    def ln(t, g, b):
        mu = t.mean(-1, keepdims=True)
        var = ((t - mu) ** 2).mean(-1, keepdims=True)
        return (t - mu) / jnp.sqrt(var + LN_EPS) * g + b

    t = ln(patches, params["g1"][0], params["b1"][0])
    t = t @ params["wemb"] + params["bemb"][0]
    t = ln(t, params["g2"][0], params["b2"][0])
    cls = jnp.broadcast_to(params["cls"][None], (B,) + params["cls"].shape)
    tok = jnp.concatenate([cls, t], axis=1)
    if add_attention:
        E = params["wq"].shape[0]
        q = tok @ params["wq"] + params["bq"][0]
        k = tok @ params["wk"] + params["bk"][0]
        v = tok @ params["wv"] + params["bv"][0]
        sc = jnp.einsum("bqe,bke->bqk", q, k) / math.sqrt(E)
        attn = jax.nn.softmax(sc, axis=-1)
        tok = jnp.einsum("bqk,bke->bqe", attn, v)
    return tok[:, :3]


if __name__ == "__main__":
    key = jax.random.PRNGKey(0)
    kx1, kx2, kp = jax.random.split(key, 3)
    params = init_params(kp)

    fwd = jax.jit(functools.partial(edge_tokenizer_forward,
                                    add_attention=ADD_ATTENTION, block_batch=8))

    # Config 1: w = W//P = 1, B=16 -> grid (2,)
    B1_, C1, H1, W1_ = 16, 4, 12, 48
    x1 = jax.random.normal(kx1, (B1_, C1, H1, W1_), dtype=jnp.float32)
    out1 = jax.block_until_ready(fwd(x1, params))
    ref1 = reference_forward(x1, params)
    assert out1.shape == (B1_, 3, EMBED_SIZE), out1.shape
    err1 = float(jnp.max(jnp.abs(out1 - ref1)))
    assert jnp.allclose(out1, ref1, atol=1e-3, rtol=1e-3), f"config1 mismatch: {err1}"

    # Config 2: w = W//P = 2 (validates the (c,h,w) feature-order folding), B=8 -> grid (1,)
    B2_, C2, H2, W2_ = 8, 4, 6, 96
    x2 = jax.random.normal(kx2, (B2_, C2, H2, W2_), dtype=jnp.float32)
    out2 = jax.block_until_ready(fwd(x2, params))
    ref2 = reference_forward(x2, params)
    assert out2.shape == (B2_, 3, EMBED_SIZE), out2.shape
    err2 = float(jnp.max(jnp.abs(out2 - ref2)))
    assert jnp.allclose(out2, ref2, atol=1e-3, rtol=1e-3), f"config2 mismatch: {err2}"

    print("KERNEL_OK")
</pallas_src>

<mosaic_0001>
module attributes {stable_mosaic.version = 11 : i64} {
  func.func @_edge_tok_kernel(%arg0: i32, %arg1: memref<8x48x48xf32, #tpu.memory_space<vmem>>, %arg2: memref<1x48x48xf32, #tpu.memory_space<vmem>>, %arg3: memref<48x64xf32, #tpu.memory_space<vmem>>, %arg4: memref<64x67xf32, #tpu.memory_space<vmem>>, %arg5: memref<8x128xf32, #tpu.memory_space<vmem>>, %arg6: memref<8x3x64xf32, #tpu.memory_space<vmem>>) attributes {dimension_semantics = [#tpu.dimension_semantics<parallel>], iteration_bounds = array<i64: 2>, scalar_prefetch = 0 : i64, scratch_operands = 0 : i64, tpu.core_type = #tpu.core_type<tc>, window_params = [{transform_indices = @transform_0, window_bounds = array<i64: 8, 48, 48>}, {pipeline_mode = #tpu.pipeline_mode<synchronous>, transform_indices = @transform_1, window_bounds = array<i64: 1, 48, 48>}, {pipeline_mode = #tpu.pipeline_mode<synchronous>, transform_indices = @transform_2, window_bounds = array<i64: 48, 64>}, {pipeline_mode = #tpu.pipeline_mode<synchronous>, transform_indices = @transform_3, window_bounds = array<i64: 64, 67>}, {pipeline_mode = #tpu.pipeline_mode<synchronous>, transform_indices = @transform_4, window_bounds = array<i64: 8, 128>}, {transform_indices = @transform_5, window_bounds = array<i64: 8, 3, 64>}]} {
    %c0 = arith.constant 0 : index
    %c0_0 = arith.constant 0 : index
    %c0_1 = arith.constant 0 : index
    %0 = vector.load %arg1[%c0, %c0_0, %c0_1] : memref<8x48x48xf32, #tpu.memory_space<vmem>>, vector<8x48x48xf32>
    %c0_2 = arith.constant 0 : index
    %c0_3 = arith.constant 0 : index
    %c0_4 = arith.constant 0 : index
    %1 = vector.load %arg2[%c0_2, %c0_3, %c0_4] : memref<1x48x48xf32, #tpu.memory_space<vmem>>, vector<1x48x48xf32>
    %2 = vector.broadcast %1 : vector<1x48x48xf32> to vector<8x48x48xf32>
    %3 = arith.addf %0, %2 : vector<8x48x48xf32>
    %cst = arith.constant dense<0.000000e+00> : vector<8x48xf32>
    %4 = vector.multi_reduction <add>, %3, %cst [1] : vector<8x48x48xf32> to vector<8x48xf32>
    %5 = vector.shape_cast %4 : vector<8x48xf32> to vector<8x1x48xf32>
    %cst_5 = arith.constant 4.800000e+01 : f32
    %6 = vector.broadcast %cst_5 : f32 to vector<8x1x48xf32>
    %7 = arith.divf %5, %6 : vector<8x1x48xf32>
    %8 = vector.broadcast %7 : vector<8x1x48xf32> to vector<8x48x48xf32>
    %9 = arith.subf %3, %8 : vector<8x48x48xf32>
    %10 = arith.mulf %9, %9 : vector<8x48x48xf32>
    %cst_6 = arith.constant dense<0.000000e+00> : vector<8x48xf32>
    %11 = vector.multi_reduction <add>, %10, %cst_6 [1] : vector<8x48x48xf32> to vector<8x48xf32>
    %12 = vector.shape_cast %11 : vector<8x48xf32> to vector<8x1x48xf32>
    %cst_7 = arith.constant 4.800000e+01 : f32
    %13 = vector.broadcast %cst_7 : f32 to vector<8x1x48xf32>
    %14 = arith.divf %12, %13 : vector<8x1x48xf32>
    %cst_8 = arith.constant 9.99999974E-6 : f32
    %15 = vector.broadcast %cst_8 : f32 to vector<8x1x48xf32>
    %16 = arith.addf %14, %15 : vector<8x1x48xf32>
    %17 = math.rsqrt %16 : vector<8x1x48xf32>
    %18 = vector.broadcast %17 : vector<8x1x48xf32> to vector<8x48x48xf32>
    %19 = arith.mulf %9, %18 : vector<8x48x48xf32>
    %20 = tpu.transpose %19, [0, 2, 1] : vector<8x48x48xf32> -> vector<8x48x48xf32>
    %21 = vector.shape_cast %20 : vector<8x48x48xf32> to vector<384x48xf32>
    %c0_9 = arith.constant 0 : index
    %c0_10 = arith.constant 0 : index
    %22 = vector.load %arg5[%c0_9, %c0_10] : memref<8x128xf32, #tpu.memory_space<vmem>>, vector<1x64xf32>
    %c0_11 = arith.constant 0 : index
    %c0_12 = arith.constant 0 : index
    %23 = vector.load %arg3[%c0_11, %c0_12] : memref<48x64xf32, #tpu.memory_space<vmem>>, vector<48x64xf32>
    %cst_13 = arith.constant dense<0.000000e+00> : vector<384x64xf32>
    %24 = tpu.matmul %21, %23, %cst_13 {dimension_numbers = #tpu.dot_dimension_numbers<[1], [0], [0], [1], [0, 0, 1, 1], [], []>} : vector<384x48xf32>, vector<48x64xf32>, vector<384x64xf32> -> vector<384x64xf32>
    %25 = vector.broadcast %22 : vector<1x64xf32> to vector<384x64xf32>
    %26 = arith.addf %24, %25 : vector<384x64xf32>
    %cst_14 = arith.constant dense<0.000000e+00> : vector<384xf32>
    %27 = vector.multi_reduction <add>, %26, %cst_14 [1] : vector<384x64xf32> to vector<384xf32>
    %28 = vector.shape_cast %27 : vector<384xf32> to vector<384x1xf32>
    %cst_15 = arith.constant 6.400000e+01 : f32
    %29 = vector.broadcast %cst_15 : f32 to vector<384x1xf32>
    %30 = arith.divf %28, %29 : vector<384x1xf32>
    %31 = vector.broadcast %30 : vector<384x1xf32> to vector<384x64xf32>
    %32 = arith.subf %26, %31 : vector<384x64xf32>
    %33 = arith.mulf %32, %32 : vector<384x64xf32>
    %cst_16 = arith.constant dense<0.000000e+00> : vector<384xf32>
    %34 = vector.multi_reduction <add>, %33, %cst_16 [1] : vector<384x64xf32> to vector<384xf32>
    %35 = vector.shape_cast %34 : vector<384xf32> to vector<384x1xf32>
    %cst_17 = arith.constant 6.400000e+01 : f32
    %36 = vector.broadcast %cst_17 : f32 to vector<384x1xf32>
    %37 = arith.divf %35, %36 : vector<384x1xf32>
    %cst_18 = arith.constant 9.99999974E-6 : f32
    %38 = vector.broadcast %cst_18 : f32 to vector<384x1xf32>
    %39 = arith.addf %37, %38 : vector<384x1xf32>
    %40 = math.rsqrt %39 : vector<384x1xf32>
    %41 = vector.broadcast %40 : vector<384x1xf32> to vector<384x64xf32>
    %42 = arith.mulf %32, %41 : vector<384x64xf32>
    %c1 = arith.constant 1 : index
    %c0_19 = arith.constant 0 : index
    %43 = vector.load %arg5[%c1, %c0_19] : memref<8x128xf32, #tpu.memory_space<vmem>>, vector<1x67xf32>
    %c0_20 = arith.constant 0 : index
    %c0_21 = arith.constant 0 : index
    %44 = vector.load %arg4[%c0_20, %c0_21] : memref<64x67xf32, #tpu.memory_space<vmem>>, vector<64x67xf32>
    %cst_22 = arith.constant dense<0.000000e+00> : vector<384x67xf32>
    %45 = tpu.matmul %42, %44, %cst_22 {dimension_numbers = #tpu.dot_dimension_numbers<[1], [0], [0], [1], [0, 0, 1, 1], [], []>} : vector<384x64xf32>, vector<64x67xf32>, vector<384x67xf32> -> vector<384x67xf32>
    %46 = vector.broadcast %43 : vector<1x67xf32> to vector<384x67xf32>
    %47 = arith.addf %45, %46 : vector<384x67xf32>
    %48 = vector.shape_cast %47 : vector<384x67xf32> to vector<8x48x67xf32>
    %c5 = arith.constant 5 : index
    %c0_23 = arith.constant 0 : index
    %49 = vector.load %arg5[%c5, %c0_23] : memref<8x128xf32, #tpu.memory_space<vmem>>, vector<1x3xf32>
    %c6 = arith.constant 6 : index
    %c0_24 = arith.constant 0 : index
    %50 = vector.load %arg5[%c6, %c0_24] : memref<8x128xf32, #tpu.memory_space<vmem>>, vector<1x3xf32>
    %c2 = arith.constant 2 : index
    %c0_25 = arith.constant 0 : index
    %51 = vector.load %arg5[%c2, %c0_25] : memref<8x128xf32, #tpu.memory_space<vmem>>, vector<3x64xf32>
    %52 = vector.extract_strided_slice %48 {offsets = [0, 0, 0], sizes = [8, 48, 3], strides = [1, 1, 1]} : vector<8x48x67xf32> to vector<8x48x3xf32>
    %cst_26 = arith.constant dense<0xFF800000> : vector<8x3xf32>
    %53 = vector.multi_reduction <maximumf>, %52, %cst_26 [1] : vector<8x48x3xf32> to vector<8x3xf32>
    %54 = vector.broadcast %49 : vector<1x3xf32> to vector<8x3xf32>
    %55 = arith.maximumf %53, %54 : vector<8x3xf32>
    %56 = vector.shape_cast %55 : vector<8x3xf32> to vector<8x1x3xf32>
    %57 = vector.broadcast %56 : vector<8x1x3xf32> to vector<8x48x3xf32>
    %58 = arith.subf %52, %57 : vector<8x48x3xf32>
    %59 = math.exp %58 : vector<8x48x3xf32>
    %60 = vector.broadcast %49 : vector<1x3xf32> to vector<8x3xf32>
    %61 = arith.subf %60, %55 : vector<8x3xf32>
    %62 = math.exp %61 : vector<8x3xf32>
    %cst_27 = arith.constant dense<0.000000e+00> : vector<8x3xf32>
    %63 = vector.multi_reduction <add>, %59, %cst_27 [1] : vector<8x48x3xf32> to vector<8x3xf32>
    %64 = vector.broadcast %50 : vector<1x3xf32> to vector<8x3xf32>
    %65 = arith.mulf %62, %64 : vector<8x3xf32>
    %66 = arith.addf %63, %65 : vector<8x3xf32>
    %67 = vector.extract_strided_slice %59 {offsets = [0, 0, 0], sizes = [8, 48, 1], strides = [1, 1, 1]} : vector<8x48x3xf32> to vector<8x48x1xf32>
    %68 = vector.broadcast %67 : vector<8x48x1xf32> to vector<8x48x67xf32>
    %69 = arith.mulf %68, %48 : vector<8x48x67xf32>
    %cst_28 = arith.constant dense<0.000000e+00> : vector<8x67xf32>
    %70 = vector.multi_reduction <add>, %69, %cst_28 [1] : vector<8x48x67xf32> to vector<8x67xf32>
    %71 = vector.extract_strided_slice %70 {offsets = [0, 3], sizes = [8, 64], strides = [1, 1]} : vector<8x67xf32> to vector<8x64xf32>
    %72 = vector.extract_strided_slice %62 {offsets = [0, 0], sizes = [8, 1], strides = [1, 1]} : vector<8x3xf32> to vector<8x1xf32>
    %73 = vector.extract_strided_slice %51 {offsets = [0, 0], sizes = [1, 64], strides = [1, 1]} : vector<3x64xf32> to vector<1x64xf32>
    %74 = vector.broadcast %72 : vector<8x1xf32> to vector<8x64xf32>
    %75 = vector.broadcast %73 : vector<1x64xf32> to vector<8x64xf32>
    %76 = arith.mulf %74, %75 : vector<8x64xf32>
    %77 = arith.addf %71, %76 : vector<8x64xf32>
    %78 = vector.extract_strided_slice %66 {offsets = [0, 0], sizes = [8, 1], strides = [1, 1]} : vector<8x3xf32> to vector<8x1xf32>
    %79 = vector.broadcast %78 : vector<8x1xf32> to vector<8x64xf32>
    %80 = arith.divf %77, %79 : vector<8x64xf32>
    %81 = vector.extract_strided_slice %59 {offsets = [0, 0, 1], sizes = [8, 48, 1], strides = [1, 1, 1]} : vector<8x48x3xf32> to vector<8x48x1xf32>
    %82 = vector.broadcast %81 : vector<8x48x1xf32> to vector<8x48x67xf32>
    %83 = arith.mulf %82, %48 : vector<8x48x67xf32>
    %cst_29 = arith.constant dense<0.000000e+00> : vector<8x67xf32>
    %84 = vector.multi_reduction <add>, %83, %cst_29 [1] : vector<8x48x67xf32> to vector<8x67xf32>
    %85 = vector.extract_strided_slice %84 {offsets = [0, 3], sizes = [8, 64], strides = [1, 1]} : vector<8x67xf32> to vector<8x64xf32>
    %86 = vector.extract_strided_slice %62 {offsets = [0, 1], sizes = [8, 1], strides = [1, 1]} : vector<8x3xf32> to vector<8x1xf32>
    %87 = vector.extract_strided_slice %51 {offsets = [1, 0], sizes = [1, 64], strides = [1, 1]} : vector<3x64xf32> to vector<1x64xf32>
    %88 = vector.broadcast %86 : vector<8x1xf32> to vector<8x64xf32>
    %89 = vector.broadcast %87 : vector<1x64xf32> to vector<8x64xf32>
    %90 = arith.mulf %88, %89 : vector<8x64xf32>
    %91 = arith.addf %85, %90 : vector<8x64xf32>
    %92 = vector.extract_strided_slice %66 {offsets = [0, 1], sizes = [8, 1], strides = [1, 1]} : vector<8x3xf32> to vector<8x1xf32>
    %93 = vector.broadcast %92 : vector<8x1xf32> to vector<8x64xf32>
    %94 = arith.divf %91, %93 : vector<8x64xf32>
    %95 = vector.extract_strided_slice %59 {offsets = [0, 0, 2], sizes = [8, 48, 1], strides = [1, 1, 1]} : vector<8x48x3xf32> to vector<8x48x1xf32>
    %96 = vector.broadcast %95 : vector<8x48x1xf32> to vector<8x48x67xf32>
    %97 = arith.mulf %96, %48 : vector<8x48x67xf32>
    %cst_30 = arith.constant dense<0.000000e+00> : vector<8x67xf32>
    %98 = vector.multi_reduction <add>, %97, %cst_30 [1] : vector<8x48x67xf32> to vector<8x67xf32>
    %99 = vector.extract_strided_slice %98 {offsets = [0, 3], sizes = [8, 64], strides = [1, 1]} : vector<8x67xf32> to vector<8x64xf32>
    %100 = vector.extract_strided_slice %62 {offsets = [0, 2], sizes = [8, 1], strides = [1, 1]} : vector<8x3xf32> to vector<8x1xf32>
    %101 = vector.extract_strided_slice %51 {offsets = [2, 0], sizes = [1, 64], strides = [1, 1]} : vector<3x64xf32> to vector<1x64xf32>
    %102 = vector.broadcast %100 : vector<8x1xf32> to vector<8x64xf32>
    %103 = vector.broadcast %101 : vector<1x64xf32> to vector<8x64xf32>
    %104 = arith.mulf %102, %103 : vector<8x64xf32>
    %105 = arith.addf %99, %104 : vector<8x64xf32>
    %106 = vector.extract_strided_slice %66 {offsets = [0, 2], sizes = [8, 1], strides = [1, 1]} : vector<8x3xf32> to vector<8x1xf32>
    %107 = vector.broadcast %106 : vector<8x1xf32> to vector<8x64xf32>
    %108 = arith.divf %105, %107 : vector<8x64xf32>
    %109 = vector.shape_cast %80 : vector<8x64xf32> to vector<8x1x64xf32>
    %110 = vector.shape_cast %94 : vector<8x64xf32> to vector<8x1x64xf32>
    %111 = vector.shape_cast %108 : vector<8x64xf32> to vector<8x1x64xf32>
    %112 = tpu.concatenate %109, %110, %111 in 1 : vector<8x1x64xf32>, vector<8x1x64xf32>, vector<8x1x64xf32> -> vector<8x3x64xf32>
    %c0_31 = arith.constant 0 : index
    %c0_32 = arith.constant 0 : index
    %c0_33 = arith.constant 0 : index
    %113 = vector.load %arg6[%c0_31, %c0_32, %c0_33] : memref<8x3x64xf32, #tpu.memory_space<vmem>>, vector<8x3x64xf32>
    tpu.vector_store %arg6[%c0_31, %c0_32, %c0_33], %112 {strides = array<i32>} : memref<8x3x64xf32, #tpu.memory_space<vmem>>, vector<8x3x64xf32>,
    return
  }
  func.func @transform_0(%arg0: i32) -> (i32, i32, i32) {
    %c0_i32 = arith.constant 0 : i32
    %c0_i32_0 = arith.constant 0 : i32
    %c0_i32_1 = arith.constant 0 : i32
    return %arg0, %c0_i32, %c0_i32_0 : i32, i32, i32
  }
  func.func @transform_1(%arg0: i32) -> (i32, i32, i32) {
    %c0_i32 = arith.constant 0 : i32
    %c0_i32_0 = arith.constant 0 : i32
    %c0_i32_1 = arith.constant 0 : i32
    %c0_i32_2 = arith.constant 0 : i32
    return %c0_i32, %c0_i32_0, %c0_i32_1 : i32, i32, i32
  }
  func.func @transform_2(%arg0: i32) -> (i32, i32) {
    %c0_i32 = arith.constant 0 : i32
    %c0_i32_0 = arith.constant 0 : i32
    %c0_i32_1 = arith.constant 0 : i32
    return %c0_i32, %c0_i32_0 : i32, i32
  }
  func.func @transform_3(%arg0: i32) -> (i32, i32) {
    %c0_i32 = arith.constant 0 : i32
    %c0_i32_0 = arith.constant 0 : i32
    %c0_i32_1 = arith.constant 0 : i32
    return %c0_i32, %c0_i32_0 : i32, i32
  }
  func.func @transform_4(%arg0: i32) -> (i32, i32) {
    %c0_i32 = arith.constant 0 : i32
    %c0_i32_0 = arith.constant 0 : i32
    %c0_i32_1 = arith.constant 0 : i32
    return %c0_i32, %c0_i32_0 : i32, i32
  }
  func.func @transform_5(%arg0: i32) -> (i32, i32, i32) {
    %c0_i32 = arith.constant 0 : i32
    %c0_i32_0 = arith.constant 0 : i32
    %c0_i32_1 = arith.constant 0 : i32
    return %arg0, %c0_i32, %c0_i32_0 : i32, i32, i32
  }
}

</mosaic_0001>

<llo_original>
// kernel: edge_tokenizer_forward.1
$region0: #{edge_tokenizer_forward.1}
  #allocation0 [shape = 'u32[]', space=smem, size = 0x4, offset = 0x4, fixed_abs, tag = 'smem constant byte address 0x4 - core index']
  #allocation1 [shape = 'u32[72,128]{1,0:T(1,128)}', space=vmem, size = 0x9000, scoped, tag = 'internal scratch']
  %s0 = inlined_call_operand.vmem [shape: f32[16,48,48], index: 0, kind: input, shape index: {}]
  %s1 = inlined_call_operand.vmem [shape: f32[1,48,48], index: 1, kind: input, shape index: {}]
  %s2 = inlined_call_operand.vmem [shape: f32[48,64], index: 2, kind: input, shape index: {}]
  %s3 = inlined_call_operand.vmem [shape: f32[64,67], index: 3, kind: input, shape index: {}]
  %s4 = inlined_call_operand.vmem [shape: f32[8,128], index: 4, kind: input, shape index: {}]
  %s5 = inlined_call_operand.vmem [shape: f32[16,3,64], index: 5, kind: output, shape index: {}]
  %s6 = sld [smem:[#allocation0]]
  $region53: #{edge_tokenizer_forward.1} parent=0
    _
  %s8 = ssub.s32 1, %s6
  %s9 = scalar_select 0, %s8, %s6
  loop: start=0, step=1, limit=4
  $region2: #{edge_tokenizer_forward.1} parent=0 // loop_pre_header
    _
  $region3: #{edge_tokenizer_forward.1} parent=0 // loop_header
    %s11 = sphi 0, %s15
    %p12 = scmp.ge.s32.totalorder %s11, 4
    %s21 = sphi 0, %s23
    %s24 = sphi 0, %s21
    %s25 = sphi 0, %s24
    %s41 = sphi 0, %s25
    %s45 = sphi 0, %s45
    %s47 = sphi 0, %s45
    %s48 = sphi 0, %s47
    %s62 = sphi 0, %s48
    %s66 = sphi 0, %s66
    %s68 = sphi 0, %s66
    %s69 = sphi 0, %s68
    %s83 = sphi 0, %s69
    %s87 = sphi 0, %s87
    %s89 = sphi 0, %s87
    %s90 = sphi 0, %s89
    %s104 = sphi 0, %s90
    %s108 = sphi 0, %s108
    %s110 = sphi 0, %s108
    %s111 = sphi 0, %s110
    %s125 = sphi 0, %s111
    %s131 = sphi 0, %s133
    %s134 = sphi 0, %s131
    %s135 = sphi 0, %s134
    %s151 = sphi 0, %s135
  $region4: #{edge_tokenizer_forward.1} parent=0 // loop_header_branch
    %14 = sbr.rel (%p12) target = $region8
  $region5: #{edge_tokenizer_forward.1} parent=0 // loop_body
    %s16 = ssub.s32 %s11, 1
    %s17 = ssub.s32 %s11, 2
    %s18 = sadd.s32 %s11, 1
    %s19 = ssub.s32 %s11, %s18
    %p20 = scmp.eq.s32.totalorder %s19, 0
    %s22 = sadd.s32 %s21, 1
    %s23 = scalar_select %p20, %s21, %s22
    %p26 = pneg %p20
    %p27 = scmp.eq.s32.totalorder %s11, 1
    %p28 = por %p26, %p27
    %p29 = scmp.ne.s32.totalorder %s21, %s24
    %p30 = scmp.eq.s32.totalorder %s11, 0
    %p31 = por %p29, %p30
    %p32 = scmp.ne.s32.totalorder %s21, %s24
    %p33 = scmp.eq.s32.totalorder %s16, 1
    %p34 = por %p32, %p33
    %p35 = scmp.ne.s32.totalorder %s24, %s25
    %p36 = scmp.eq.s32.totalorder %s16, 0
    %p37 = por %p35, %p36
    %p38 = scmp.ne.s32.totalorder %s24, %s25
    %p39 = scmp.eq.s32.totalorder %s17, 1
    %p40 = por %p38, %p39
    %p42 = scmp.ne.s32.totalorder %s25, %s41
    %p43 = scmp.eq.s32.totalorder %s17, 0
    %p44 = por %p42, %p43
    %s46 = sadd.s32 %s45, 1
    %p49 = scmp.eq.s32.totalorder %s11, 1
    %p50 = scmp.ne.s32.totalorder %s45, %s47
    %p51 = scmp.eq.s32.totalorder %s11, 0
    %p52 = por %p50, %p51
    %p53 = scmp.ne.s32.totalorder %s45, %s47
    %p54 = scmp.eq.s32.totalorder %s16, 1
    %p55 = por %p53, %p54
    %p56 = scmp.ne.s32.totalorder %s47, %s48
    %p57 = scmp.eq.s32.totalorder %s16, 0
    %p58 = por %p56, %p57
    %p59 = scmp.ne.s32.totalorder %s47, %s48
    %p60 = scmp.eq.s32.totalorder %s17, 1
    %p61 = por %p59, %p60
    %p63 = scmp.ne.s32.totalorder %s48, %s62
    %p64 = scmp.eq.s32.totalorder %s17, 0
    %p65 = por %p63, %p64
    %s67 = sadd.s32 %s66, 1
    %p70 = scmp.eq.s32.totalorder %s11, 1
    %p71 = scmp.ne.s32.totalorder %s66, %s68
    %p72 = scmp.eq.s32.totalorder %s11, 0
    %p73 = por %p71, %p72
    %p74 = scmp.ne.s32.totalorder %s66, %s68
    %p75 = scmp.eq.s32.totalorder %s16, 1
    %p76 = por %p74, %p75
    %p77 = scmp.ne.s32.totalorder %s68, %s69
    %p78 = scmp.eq.s32.totalorder %s16, 0
    %p79 = por %p77, %p78
    %p80 = scmp.ne.s32.totalorder %s68, %s69
    %p81 = scmp.eq.s32.totalorder %s17, 1
    %p82 = por %p80, %p81
    %p84 = scmp.ne.s32.totalorder %s69, %s83
    %p85 = scmp.eq.s32.totalorder %s17, 0
    %p86 = por %p84, %p85
    %s88 = sadd.s32 %s87, 1
    %p91 = scmp.eq.s32.totalorder %s11, 1
    %p92 = scmp.ne.s32.totalorder %s87, %s89
    %p93 = scmp.eq.s32.totalorder %s11, 0
    %p94 = por %p92, %p93
    %p95 = scmp.ne.s32.totalorder %s87, %s89
    %p96 = scmp.eq.s32.totalorder %s16, 1
    %p97 = por %p95, %p96
    %p98 = scmp.ne.s32.totalorder %s89, %s90
    %p99 = scmp.eq.s32.totalorder %s16, 0
    %p100 = por %p98, %p99
    %p101 = scmp.ne.s32.totalorder %s89, %s90
    %p102 = scmp.eq.s32.totalorder %s17, 1
    %p103 = por %p101, %p102
    %p105 = scmp.ne.s32.totalorder %s90, %s104
    %p106 = scmp.eq.s32.totalorder %s17, 0
    %p107 = por %p105, %p106
    %s109 = sadd.s32 %s108, 1
    %p112 = scmp.eq.s32.totalorder %s11, 1
    %p113 = scmp.ne.s32.totalorder %s108, %s110
    %p114 = scmp.eq.s32.totalorder %s11, 0
    %p115 = por %p113, %p114
    %p116 = scmp.ne.s32.totalorder %s108, %s110
    %p117 = scmp.eq.s32.totalorder %s16, 1
    %p118 = por %p116, %p117
    %p119 = scmp.ne.s32.totalorder %s110, %s111
    %p120 = scmp.eq.s32.totalorder %s16, 0
    %p121 = por %p119, %p120
    %p122 = scmp.ne.s32.totalorder %s110, %s111
    %p123 = scmp.eq.s32.totalorder %s17, 1
    %p124 = por %p122, %p123
    %p126 = scmp.ne.s32.totalorder %s111, %s125
    %p127 = scmp.eq.s32.totalorder %s17, 0
    %p128 = por %p126, %p127
    %s129 = ssub.s32 %s11, %s18
    %p130 = scmp.eq.s32.totalorder %s129, 0
    %s132 = sadd.s32 %s131, 1
    %s133 = scalar_select %p130, %s131, %s132
    %p136 = pneg %p130
    %p137 = scmp.eq.s32.totalorder %s11, 1
    %p138 = por %p136, %p137
    %p139 = scmp.ne.s32.totalorder %s131, %s134
    %p140 = scmp.eq.s32.totalorder %s11, 0
    %p141 = por %p139, %p140
    %p142 = scmp.ne.s32.totalorder %s131, %s134
    %p143 = scmp.eq.s32.totalorder %s16, 1
    %p144 = por %p142, %p143
    %p145 = scmp.ne.s32.totalorder %s134, %s135
    %p146 = scmp.eq.s32.totalorder %s16, 0
    %p147 = por %p145, %p146
    %p148 = scmp.ne.s32.totalorder %s134, %s135
    %p149 = scmp.eq.s32.totalorder %s17, 1
    %p150 = por %p148, %p149
    %p152 = scmp.ne.s32.totalorder %s135, %s151
    %p153 = scmp.eq.s32.totalorder %s17, 0
    %p154 = por %p152, %p153
    %p155 = scmp.le.s32.totalorder 1, %s11
    %p156 = scmp.lt.s32.totalorder %s11, 3
    %p157 = pnand %p155, %p156
    %p158 = pneg %p157
    // Predicated region
    $region9: #{edge_tokenizer_forward.1} parent=5 // pred_check
      _
    $region10: #{edge_tokenizer_forward.1} parent=5 // pred_check_branch
      %160 = sbr.rel (%p157) target = $region12
    $region11: #{edge_tokenizer_forward.1} parent=5 // pred_region
      %s161 = ssub.s32 %s11, 1
      // Predicated region
      $region13: #{edge_tokenizer_forward.1} parent=11 // pred_check
        %p162 = pneg %p58
      $region14: #{edge_tokenizer_forward.1} parent=11 // pred_check_branch
        %164 = sbr.rel (%p162) target = $region16
      $region15: #{edge_tokenizer_forward.1} parent=11 // pred_region
        _
      $region16: #{edge_tokenizer_forward.1} parent=11 // pred_fallthru
        _
      // Predicated region
      $region17: #{edge_tokenizer_forward.1} parent=11 // pred_check
        %p165 = pneg %p79
      $region18: #{edge_tokenizer_forward.1} parent=11 // pred_check_branch
        %167 = sbr.rel (%p165) target = $region20
      $region19: #{edge_tokenizer_forward.1} parent=11 // pred_region
        _
      $region20: #{edge_tokenizer_forward.1} parent=11 // pred_fallthru
        _
      // Predicated region
      $region21: #{edge_tokenizer_forward.1} parent=11 // pred_check
        %p168 = pneg %p100
      $region22: #{edge_tokenizer_forward.1} parent=11 // pred_check_branch
        %170 = sbr.rel (%p168) target = $region24
      $region23: #{edge_tokenizer_forward.1} parent=11 // pred_region
        _
      $region24: #{edge_tokenizer_forward.1} parent=11 // pred_fallthru
        _
      // Predicated region
      $region25: #{edge_tokenizer_forward.1} parent=11 // pred_check
        %p171 = pneg %p121
      $region26: #{edge_tokenizer_forward.1} parent=11 // pred_check_branch
        %173 = sbr.rel (%p171) target = $region28
      $region27: #{edge_tokenizer_forward.1} parent=11 // pred_region
        _
      $region28: #{edge_tokenizer_forward.1} parent=11 // pred_fallthru
        _
    $region12: #{edge_tokenizer_forward.1} parent=5 // pred_fallthru
      _
    %p174 = scmp.lt.s32.totalorder %s11, 2
    // Predicated region
    $region29: #{edge_tokenizer_forward.1} parent=5 // pred_check
      %p175 = pneg %p174
    $region30: #{edge_tokenizer_forward.1} parent=5 // pred_check_branch
      %177 = sbr.rel (%p175) target = $region32
    $region31: #{edge_tokenizer_forward.1} parent=5 // pred_region
      // Predicated region
      $region33: #{edge_tokenizer_forward.1} parent=31 // pred_check
        %p178 = pneg %p31
      $region34: #{edge_tokenizer_forward.1} parent=31 // pred_check_branch
        %180 = sbr.rel (%p178) target = $region36
      $region35: #{edge_tokenizer_forward.1} parent=31 // pred_region
        %s181 = smul.u32 8, %s11
        %p182 = scmp.lt.s32.totalorder %s181, 15
        %s183 = scalar_select %p182, %s181, 15
        %s184 = smul.addr %s183, 6
        %s185 = smul.addr %s184, 8
        %s186 = scalar_lea.vmem %s0, %s185
        %s187 = smul.u32 8, %s11
      $region36: #{edge_tokenizer_forward.1} parent=31 // pred_fallthru
        _
    $region32: #{edge_tokenizer_forward.1} parent=5 // pred_fallthru
      _
    %p188 = scmp.le.s32.totalorder 1, %s11
    %p189 = scmp.lt.s32.totalorder %s11, 3
    %p190 = pnand %p188, %p189
    %p191 = pneg %p190
    // Predicated region
    $region37: #{edge_tokenizer_forward.1} parent=5 // pred_check
      _
    $region38: #{edge_tokenizer_forward.1} parent=5 // pred_check_branch
      %193 = sbr.rel (%p190) target = $region40
    $region39: #{edge_tokenizer_forward.1} parent=5 // pred_region
      %s194 = ssub.s32 %s11, 1
      %s195 = smul.u32 8, %s16
      %p196 = scmp.lt.s32.totalorder %s195, 15
      %s197 = scalar_select %p196, %s195, 15
      %s198 = smul.addr %s197, 6
      %s199 = smul.addr %s198, 8
      %s200 = scalar_lea.vmem %s0, %s199
      %p201 = pneg %p37
      %p202 = pneg %p34
      %p203 = pneg %p58
      %p204 = pneg %p55
      %p205 = pneg %p79
      %p206 = pneg %p76
      %p207 = pneg %p100
      %p208 = pneg %p97
      %p209 = pneg %p121
      %p210 = pneg %p118
      %p211 = pneg %p147
      %p212 = pneg %p144
      %s213 = smul.u32 8, %s16
      %p214 = scmp.lt.s32.totalorder %s213, 15
      %s215 = scalar_select %p214, %s213, 15
      %s216 = smul.addr %s215, 4
      %s217 = scalar_lea.vmem %s5, %s216
      %s218 = smul.u32 8, %s16
      %p219 = scmp.lt.s32.totalorder %s218, 15
      %s220 = scalar_select %p219, %s218, 15
      %s221 = smul.addr %s220, 6
      %s222 = smul.addr %s221, 8
      %s223 = scalar_lea.vmem %s0, %s222
      %s224 = smul.u32 8, %s16
      %s225 = smul.u32 8, %s16
      %p226 = scmp.lt.s32.totalorder %s225, 15
      %s227 = scalar_select %p226, %s225, 15
      %s228 = smul.addr %s227, 4
      %s229 = scalar_lea.vmem %s5, %s228
      %s230 = smul.u32 8, %s16
      %v231 = vld [vmem:[%s223] sm:$0xff]
      %v232 = vld [vmem:[%s223 + $0x8] sm:$0xff]
      %v233 = vld [vmem:[%s223 + $0x10] sm:$0xff]
      %v234 = vld [vmem:[%s223 + $0x18] sm:$0xff]
      %v235 = vld [vmem:[%s223 + $0x20] sm:$0xff]
      %v236 = vld [vmem:[%s223 + $0x28] sm:$0xff]
      %v237 = vld [vmem:[%s223 + $0x30] sm:$0xff]
      %v238 = vld [vmem:[%s223 + $0x38] sm:$0xff]
      %v239 = vld [vmem:[%s223 + $0x40] sm:$0xff]
      %v240 = vld [vmem:[%s223 + $0x48] sm:$0xff]
      %v241 = vld [vmem:[%s223 + $0x50] sm:$0xff]
      %v242 = vld [vmem:[%s223 + $0x58] sm:$0xff]
      %v243 = vld [vmem:[%s223 + $0x60] sm:$0xff]
      %v244 = vld [vmem:[%s223 + $0x68] sm:$0xff]
      %v245 = vld [vmem:[%s223 + $0x70] sm:$0xff]
      %v246 = vld [vmem:[%s223 + $0x78] sm:$0xff]
      %v247 = vld [vmem:[%s223 + $0x80] sm:$0xff]
      %v248 = vld [vmem:[%s223 + $0x88] sm:$0xff]
      %v249 = vld [vmem:[%s223 + $0x90] sm:$0xff]
      %v250 = vld [vmem:[%s223 + $0x98] sm:$0xff]
      %v251 = vld [vmem:[%s223 + $0xa0] sm:$0xff]
      %v252 = vld [vmem:[%s223 + $0xa8] sm:$0xff]
      %v253 = vld [vmem:[%s223 + $0xb0] sm:$0xff]
      %v254 = vld [vmem:[%s223 + $0xb8] sm:$0xff]
      %v255 = vld [vmem:[%s223 + $0xc0] sm:$0xff]
      %v256 = vld [vmem:[%s223 + $0xc8] sm:$0xff]
      %v257 = vld [vmem:[%s223 + $0xd0] sm:$0xff]
      %v258 = vld [vmem:[%s223 + $0xd8] sm:$0xff]
      %v259 = vld [vmem:[%s223 + $0xe0] sm:$0xff]
      %v260 = vld [vmem:[%s223 + $0xe8] sm:$0xff]
      %v261 = vld [vmem:[%s223 + $0xf0] sm:$0xff]
      %v262 = vld [vmem:[%s223 + $0xf8] sm:$0xff]
      %v263 = vld [vmem:[%s223 + $0x100] sm:$0xff]
      %v264 = vld [vmem:[%s223 + $0x108] sm:$0xff]
      %v265 = vld [vmem:[%s223 + $0x110] sm:$0xff]
      %v266 = vld [vmem:[%s223 + $0x118] sm:$0xff]
      %v267 = vld [vmem:[%s223 + $0x120] sm:$0xff]
      %v268 = vld [vmem:[%s223 + $0x128] sm:$0xff]
      %v269 = vld [vmem:[%s223 + $0x130] sm:$0xff]
      %v270 = vld [vmem:[%s223 + $0x138] sm:$0xff]
      %v271 = vld [vmem:[%s223 + $0x140] sm:$0xff]
      %v272 = vld [vmem:[%s223 + $0x148] sm:$0xff]
      %v273 = vld [vmem:[%s223 + $0x150] sm:$0xff]
      %v274 = vld [vmem:[%s223 + $0x158] sm:$0xff]
      %v275 = vld [vmem:[%s223 + $0x160] sm:$0xff]
      %v276 = vld [vmem:[%s223 + $0x168] sm:$0xff]
      %v277 = vld [vmem:[%s223 + $0x170] sm:$0xff]
      %v278 = vld [vmem:[%s223 + $0x178] sm:$0xff]
      %v279 = vld [vmem:[%s1] sm:$0xff]
      %v280 = vld [vmem:[%s1 + $0x8] sm:$0xff]
      %v281 = vld [vmem:[%s1 + $0x10] sm:$0xff]
      %v282 = vld [vmem:[%s1 + $0x18] sm:$0xff]
      %v283 = vld [vmem:[%s1 + $0x20] sm:$0xff]
      %v284 = vld [vmem:[%s1 + $0x28] sm:$0xff]
      %v285 = vadd.f32 %v231, %v279
      %v286 = vadd.f32 %v232, %v280
      %v287 = vadd.f32 %v233, %v281
      %v288 = vadd.f32 %v234, %v282
      %v289 = vadd.f32 %v235, %v283
      %v290 = vadd.f32 %v236, %v284
      %v291 = vadd.f32 %v237, %v279
      %v292 = vadd.f32 %v238, %v280
      %v293 = vadd.f32 %v239, %v281
      %v294 = vadd.f32 %v240, %v282
      %v295 = vadd.f32 %v241, %v283
      %v296 = vadd.f32 %v242, %v284
      %v297 = vadd.f32 %v243, %v279
      %v298 = vadd.f32 %v244, %v280
      %v299 = vadd.f32 %v245, %v281
      %v300 = vadd.f32 %v246, %v282
      %v301 = vadd.f32 %v247, %v283
      %v302 = vadd.f32 %v248, %v284
      %v303 = vadd.f32 %v249, %v279
      %v304 = vadd.f32 %v250, %v280
      %v305 = vadd.f32 %v251, %v281
      %v306 = vadd.f32 %v252, %v282
      %v307 = vadd.f32 %v253, %v283
      %v308 = vadd.f32 %v254, %v284
      %v309 = vadd.f32 %v255, %v279
      %v310 = vadd.f32 %v256, %v280
      %v311 = vadd.f32 %v257, %v281
      %v312 = vadd.f32 %v258, %v282
      %v313 = vadd.f32 %v259, %v283
      %v314 = vadd.f32 %v260, %v284
      %v315 = vadd.f32 %v261, %v279
      %v316 = vadd.f32 %v262, %v280
      %v317 = vadd.f32 %v263, %v281
      %v318 = vadd.f32 %v264, %v282
      %v319 = vadd.f32 %v265, %v283
      %v320 = vadd.f32 %v266, %v284
      %v321 = vadd.f32 %v267, %v279
      %v322 = vadd.f32 %v268, %v280
      %v323 = vadd.f32 %v269, %v281
      %v324 = vadd.f32 %v270, %v282
      %v325 = vadd.f32 %v271, %v283
      %v326 = vadd.f32 %v272, %v284
      %v327 = vadd.f32 %v273, %v279
      %v328 = vadd.f32 %v274, %v280
      %v329 = vadd.f32 %v275, %v281
      %v330 = vadd.f32 %v276, %v282
      %v331 = vadd.f32 %v277, %v283
      %v332 = vadd.f32 %v278, %v284
      %vm333 = vcmask 392192
      %v334 = vsel %vm333, %v285, 0.0
      %v335 = vsel %vm333, %v286, 0.0
      %v336 = vadd.f32 %v334, %v335
      %v337 = vsel %vm333, %v287, 0.0
      %v338 = vadd.f32 %v336, %v337
      %v339 = vsel %vm333, %v288, 0.0
      %v340 = vadd.f32 %v338, %v339
      %v341 = vsel %vm333, %v289, 0.0
      %v342 = vadd.f32 %v340, %v341
      %v343 = vsel %vm333, %v290, 0.0
      %v344 = vadd.f32 %v342, %v343
      %v345 = vrot.slane %v344, 4
      %v346 = vadd.f32 %v344, %v345
      %v347 = vrot.slane %v346, 2
      %v348 = vadd.f32 %v346, %v347
      %v349 = vrot.slane %v348, 1
      %v350 = vadd.f32 %v348, %v349
      %v351 = vsel %vm333, %v291, 0.0
      %v352 = vsel %vm333, %v292, 0.0
      %v353 = vadd.f32 %v351, %v352
      %v354 = vsel %vm333, %v293, 0.0
      %v355 = vadd.f32 %v353, %v354
      %v356 = vsel %vm333, %v294, 0.0
      %v357 = vadd.f32 %v355, %v356
      %v358 = vsel %vm333, %v295, 0.0
      %v359 = vadd.f32 %v357, %v358
      %v360 = vsel %vm333, %v296, 0.0
      %v361 = vadd.f32 %v359, %v360
      %v362 = vrot.slane %v361, 4
      %v363 = vadd.f32 %v361, %v362
      %v364 = vrot.slane %v363, 2
      %v365 = vadd.f32 %v363, %v364
      %v366 = vrot.slane %v365, 1
      %v367 = vadd.f32 %v365, %v366
      %v368 = vsel %vm333, %v297, 0.0
      %v369 = vsel %vm333, %v298, 0.0
      %v370 = vadd.f32 %v368, %v369
      %v371 = vsel %vm333, %v299, 0.0
      %v372 = vadd.f32 %v370, %v371
      %v373 = vsel %vm333, %v300, 0.0
      %v374 = vadd.f32 %v372, %v373
      %v375 = vsel %vm333, %v301, 0.0
      %v376 = vadd.f32 %v374, %v375
      %v377 = vsel %vm333, %v302, 0.0
      %v378 = vadd.f32 %v376, %v377
      %v379 = vrot.slane %v378, 4
      %v380 = vadd.f32 %v378, %v379
      %v381 = vrot.slane %v380, 2
      %v382 = vadd.f32 %v380, %v381
      %v383 = vrot.slane %v382, 1
      %v384 = vadd.f32 %v382, %v383
      %v385 = vsel %vm333, %v303, 0.0
      %v386 = vsel %vm333, %v304, 0.0
      %v387 = vadd.f32 %v385, %v386
      %v388 = vsel %vm333, %v305, 0.0
      %v389 = vadd.f32 %v387, %v388
      %v390 = vsel %vm333, %v306, 0.0
      %v391 = vadd.f32 %v389, %v390
      %v392 = vsel %vm333, %v307, 0.0
      %v393 = vadd.f32 %v391, %v392
      %v394 = vsel %vm333, %v308, 0.0
      %v395 = vadd.f32 %v393, %v394
      %v396 = vrot.slane %v395, 4
      %v397 = vadd.f32 %v395, %v396
      %v398 = vrot.slane %v397, 2
      %v399 = vadd.f32 %v397, %v398
      %v400 = vrot.slane %v399, 1
      %v401 = vadd.f32 %v399, %v400
      %v402 = vsel %vm333, %v309, 0.0
      %v403 = vsel %vm333, %v310, 0.0
      %v404 = vadd.f32 %v402, %v403
      %v405 = vsel %vm333, %v311, 0.0
      %v406 = vadd.f32 %v404, %v405
      %v407 = vsel %vm333, %v312, 0.0
      %v408 = vadd.f32 %v406, %v407
      %v409 = vsel %vm333, %v313, 0.0
      %v410 = vadd.f32 %v408, %v409
      %v411 = vsel %vm333, %v314, 0.0
      %v412 = vadd.f32 %v410, %v411
      %v413 = vrot.slane %v412, 4
      %v414 = vadd.f32 %v412, %v413
      %v415 = vrot.slane %v414, 2
      %v416 = vadd.f32 %v414, %v415
      %v417 = vrot.slane %v416, 1
      %v418 = vadd.f32 %v416, %v417
      %v419 = vsel %vm333, %v315, 0.0
      %v420 = vsel %vm333, %v316, 0.0
      %v421 = vadd.f32 %v419, %v420
      %v422 = vsel %vm333, %v317, 0.0
      %v423 = vadd.f32 %v421, %v422
      %v424 = vsel %vm333, %v318, 0.0
      %v425 = vadd.f32 %v423, %v424
      %v426 = vsel %vm333, %v319, 0.0
      %v427 = vadd.f32 %v425, %v426
      %v428 = vsel %vm333, %v320, 0.0
      %v429 = vadd.f32 %v427, %v428
      %v430 = vrot.slane %v429, 4
      %v431 = vadd.f32 %v429, %v430
      %v432 = vrot.slane %v431, 2
      %v433 = vadd.f32 %v431, %v432
      %v434 = vrot.slane %v433, 1
      %v435 = vadd.f32 %v433, %v434
      %v436 = vsel %vm333, %v321, 0.0
      %v437 = vsel %vm333, %v322, 0.0
      %v438 = vadd.f32 %v436, %v437
      %v439 = vsel %vm333, %v323, 0.0
      %v440 = vadd.f32 %v438, %v439
      %v441 = vsel %vm333, %v324, 0.0
      %v442 = vadd.f32 %v440, %v441
      %v443 = vsel %vm333, %v325, 0.0
      %v444 = vadd.f32 %v442, %v443
      %v445 = vsel %vm333, %v326, 0.0
      %v446 = vadd.f32 %v444, %v445
      %v447 = vrot.slane %v446, 4
      %v448 = vadd.f32 %v446, %v447
      %v449 = vrot.slane %v448, 2
      %v450 = vadd.f32 %v448, %v449
      %v451 = vrot.slane %v450, 1
      %v452 = vadd.f32 %v450, %v451
      %v453 = vsel %vm333, %v327, 0.0
      %v454 = vsel %vm333, %v328, 0.0
      %v455 = vadd.f32 %v453, %v454
      %v456 = vsel %vm333, %v329, 0.0
      %v457 = vadd.f32 %v455, %v456
      %v458 = vsel %vm333, %v330, 0.0
      %v459 = vadd.f32 %v457, %v458
      %v460 = vsel %vm333, %v331, 0.0
      %v461 = vadd.f32 %v459, %v460
      %v462 = vsel %vm333, %v332, 0.0
      %v463 = vadd.f32 %v461, %v462
      %v464 = vrot.slane %v463, 4
      %v465 = vadd.f32 %v463, %v464
      %v466 = vrot.slane %v465, 2
      %v467 = vadd.f32 %v465, %v466
      %v468 = vrot.slane %v467, 1
      %v469 = vadd.f32 %v467, %v468
      %v470 = vrcp.pop 48.0
      %v471 = vmul.f32 48.0, %v470
      %v472 = vsub.f32 1.0, %v471
      %v473 = vmul.f32 %v470, %v472
      %v474 = vadd.f32 %v470, %v473
      %vm475 = vweird.f32 %v470
      %v476 = vsel %vm475, %v470, %v474
      %v477 = vmul.f32 %v350, %v476
      %v478 = vmul.f32 %v367, %v476
      %v479 = vmul.f32 %v384, %v476
      %v480 = vmul.f32 %v401, %v476
      %v481 = vmul.f32 %v418, %v476
      %v482 = vmul.f32 %v435, %v476
      %v483 = vmul.f32 %v452, %v476
      %v484 = vmul.f32 %v469, %v476
      %v485 = vsub.f32 %v285, %v477
      %v486 = vsub.f32 %v286, %v477
      %v487 = vsub.f32 %v287, %v477
      %v488 = vsub.f32 %v288, %v477
      %v489 = vsub.f32 %v289, %v477
      %v490 = vsub.f32 %v290, %v477
      %v491 = vsub.f32 %v291, %v478
      %v492 = vsub.f32 %v292, %v478
      %v493 = vsub.f32 %v293, %v478
      %v494 = vsub.f32 %v294, %v478
      %v495 = vsub.f32 %v295, %v478
      %v496 = vsub.f32 %v296, %v478
      %v497 = vsub.f32 %v297, %v479
      %v498 = vsub.f32 %v298, %v479
      %v499 = vsub.f32 %v299, %v479
      %v500 = vsub.f32 %v300, %v479
      %v501 = vsub.f32 %v301, %v479
      %v502 = vsub.f32 %v302, %v479
      %v503 = vsub.f32 %v303, %v480
      %v504 = vsub.f32 %v304, %v480
      %v505 = vsub.f32 %v305, %v480
      %v506 = vsub.f32 %v306, %v480
      %v507 = vsub.f32 %v307, %v480
      %v508 = vsub.f32 %v308, %v480
      %v509 = vsub.f32 %v309, %v481
      %v510 = vsub.f32 %v310, %v481
      %v511 = vsub.f32 %v311, %v481
      %v512 = vsub.f32 %v312, %v481
      %v513 = vsub.f32 %v313, %v481
      %v514 = vsub.f32 %v314, %v481
      %v515 = vsub.f32 %v315, %v482
      %v516 = vsub.f32 %v316, %v482
      %v517 = vsub.f32 %v317, %v482
      %v518 = vsub.f32 %v318, %v482
      %v519 = vsub.f32 %v319, %v482
      %v520 = vsub.f32 %v320, %v482
      %v521 = vsub.f32 %v321, %v483
      %v522 = vsub.f32 %v322, %v483
      %v523 = vsub.f32 %v323, %v483
      %v524 = vsub.f32 %v324, %v483
      %v525 = vsub.f32 %v325, %v483
      %v526 = vsub.f32 %v326, %v483
      %v527 = vsub.f32 %v327, %v484
      %v528 = vsub.f32 %v328, %v484
      %v529 = vsub.f32 %v329, %v484
      %v530 = vsub.f32 %v330, %v484
      %v531 = vsub.f32 %v331, %v484
      %v532 = vsub.f32 %v332, %v484
      %v533 = vmul.f32 %v485, %v485
      %v534 = vmul.f32 %v486, %v486
      %v535 = vmul.f32 %v487, %v487
      %v536 = vmul.f32 %v488, %v488
      %v537 = vmul.f32 %v489, %v489
      %v538 = vmul.f32 %v490, %v490
      %v539 = vmul.f32 %v491, %v491
      %v540 = vmul.f32 %v492, %v492
      %v541 = vmul.f32 %v493, %v493
      %v542 = vmul.f32 %v494, %v494
      %v543 = vmul.f32 %v495, %v495
      %v544 = vmul.f32 %v496, %v496
      %v545 = vmul.f32 %v497, %v497
      %v546 = vmul.f32 %v498, %v498
      %v547 = vmul.f32 %v499, %v499
      %v548 = vmul.f32 %v500, %v500
      %v549 = vmul.f32 %v501, %v501
      %v550 = vmul.f32 %v502, %v502
      %v551 = vmul.f32 %v503, %v503
      %v552 = vmul.f32 %v504, %v504
      %v553 = vmul.f32 %v505, %v505
      %v554 = vmul.f32 %v506, %v506
      %v555 = vmul.f32 %v507, %v507
      %v556 = vmul.f32 %v508, %v508
      %v557 = vmul.f32 %v509, %v509
      %v558 = vmul.f32 %v510, %v510
      %v559 = vmul.f32 %v511, %v511
      %v560 = vmul.f32 %v512, %v512
      %v561 = vmul.f32 %v513, %v513
      %v562 = vmul.f32 %v514, %v514
      %v563 = vmul.f32 %v515, %v515
      %v564 = vmul.f32 %v516, %v516
      %v565 = vmul.f32 %v517, %v517
      %v566 = vmul.f32 %v518, %v518
      %v567 = vmul.f32 %v519, %v519
      %v568 = vmul.f32 %v520, %v520
      %v569 = vmul.f32 %v521, %v521
      %v570 = vmul.f32 %v522, %v522
      %v571 = vmul.f32 %v523, %v523
      %v572 = vmul.f32 %v524, %v524
      %v573 = vmul.f32 %v525, %v525
      %v574 = vmul.f32 %v526, %v526
      %v575 = vmul.f32 %v527, %v527
      %v576 = vmul.f32 %v528, %v528
      %v577 = vmul.f32 %v529, %v529
      %v578 = vmul.f32 %v530, %v530
      %v579 = vmul.f32 %v531, %v531
      %v580 = vmul.f32 %v532, %v532
      %v581 = vsel %vm333, %v533, 0.0
      %v582 = vsel %vm333, %v534, 0.0
      %v583 = vadd.f32 %v581, %v582
      %v584 = vsel %vm333, %v535, 0.0
      %v585 = vadd.f32 %v583, %v584
      %v586 = vsel %vm333, %v536, 0.0
      %v587 = vadd.f32 %v585, %v586
      %v588 = vsel %vm333, %v537, 0.0
      %v589 = vadd.f32 %v587, %v588
      %v590 = vsel %vm333, %v538, 0.0
      %v591 = vadd.f32 %v589, %v590
      %v592 = vrot.slane %v591, 4
      %v593 = vadd.f32 %v591, %v592
      %v594 = vrot.slane %v593, 2
      %v595 = vadd.f32 %v593, %v594
      %v596 = vrot.slane %v595, 1
      %v597 = vadd.f32 %v595, %v596
      %v598 = vsel %vm333, %v539, 0.0
      %v599 = vsel %vm333, %v540, 0.0
      %v600 = vadd.f32 %v598, %v599
      %v601 = vsel %vm333, %v541, 0.0
      %v602 = vadd.f32 %v600, %v601
      %v603 = vsel %vm333, %v542, 0.0
      %v604 = vadd.f32 %v602, %v603
      %v605 = vsel %vm333, %v543, 0.0
      %v606 = vadd.f32 %v604, %v605
      %v607 = vsel %vm333, %v544, 0.0
      %v608 = vadd.f32 %v606, %v607
      %v609 = vrot.slane %v608, 4
      %v610 = vadd.f32 %v608, %v609
      %v611 = vrot.slane %v610, 2
      %v612 = vadd.f32 %v610, %v611
      %v613 = vrot.slane %v612, 1
      %v614 = vadd.f32 %v612, %v613
      %v615 = vsel %vm333, %v545, 0.0
      %v616 = vsel %vm333, %v546, 0.0
      %v617 = vadd.f32 %v615, %v616
      %v618 = vsel %vm333, %v547, 0.0
      %v619 = vadd.f32 %v617, %v618
      %v620 = vsel %vm333, %v548, 0.0
      %v621 = vadd.f32 %v619, %v620
      %v622 = vsel %vm333, %v549, 0.0
      %v623 = vadd.f32 %v621, %v622
      %v624 = vsel %vm333, %v550, 0.0
      %v625 = vadd.f32 %v623, %v624
      %v626 = vrot.slane %v625, 4
      %v627 = vadd.f32 %v625, %v626
      %v628 = vrot.slane %v627, 2
      %v629 = vadd.f32 %v627, %v628
      %v630 = vrot.slane %v629, 1
      %v631 = vadd.f32 %v629, %v630
      %v632 = vsel %vm333, %v551, 0.0
      %v633 = vsel %vm333, %v552, 0.0
      %v634 = vadd.f32 %v632, %v633
      %v635 = vsel %vm333, %v553, 0.0
      %v636 = vadd.f32 %v634, %v635
      %v637 = vsel %vm333, %v554, 0.0
      %v638 = vadd.f32 %v636, %v637
      %v639 = vsel %vm333, %v555, 0.0
      %v640 = vadd.f32 %v638, %v639
      %v641 = vsel %vm333, %v556, 0.0
      %v642 = vadd.f32 %v640, %v641
      %v643 = vrot.slane %v642, 4
      %v644 = vadd.f32 %v642, %v643
      %v645 = vrot.slane %v644, 2
      %v646 = vadd.f32 %v644, %v645
      %v647 = vrot.slane %v646, 1
      %v648 = vadd.f32 %v646, %v647
      %v649 = vsel %vm333, %v557, 0.0
      %v650 = vsel %vm333, %v558, 0.0
      %v651 = vadd.f32 %v649, %v650
      %v652 = vsel %vm333, %v559, 0.0
      %v653 = vadd.f32 %v651, %v652
      %v654 = vsel %vm333, %v560, 0.0
      %v655 = vadd.f32 %v653, %v654
      %v656 = vsel %vm333, %v561, 0.0
      %v657 = vadd.f32 %v655, %v656
      %v658 = vsel %vm333, %v562, 0.0
      %v659 = vadd.f32 %v657, %v658
      %v660 = vrot.slane %v659, 4
      %v661 = vadd.f32 %v659, %v660
      %v662 = vrot.slane %v661, 2
      %v663 = vadd.f32 %v661, %v662
      %v664 = vrot.slane %v663, 1
      %v665 = vadd.f32 %v663, %v664
      %v666 = vsel %vm333, %v563, 0.0
      %v667 = vsel %vm333, %v564, 0.0
      %v668 = vadd.f32 %v666, %v667
      %v669 = vsel %vm333, %v565, 0.0
      %v670 = vadd.f32 %v668, %v669
      %v671 = vsel %vm333, %v566, 0.0
      %v672 = vadd.f32 %v670, %v671
      %v673 = vsel %vm333, %v567, 0.0
      %v674 = vadd.f32 %v672, %v673
      %v675 = vsel %vm333, %v568, 0.0
      %v676 = vadd.f32 %v674, %v675
      %v677 = vrot.slane %v676, 4
      %v678 = vadd.f32 %v676, %v677
      %v679 = vrot.slane %v678, 2
      %v680 = vadd.f32 %v678, %v679
      %v681 = vrot.slane %v680, 1
      %v682 = vadd.f32 %v680, %v681
      %v683 = vsel %vm333, %v569, 0.0
      %v684 = vsel %vm333, %v570, 0.0
      %v685 = vadd.f32 %v683, %v684
      %v686 = vsel %vm333, %v571, 0.0
      %v687 = vadd.f32 %v685, %v686
      %v688 = vsel %vm333, %v572, 0.0
      %v689 = vadd.f32 %v687, %v688
      %v690 = vsel %vm333, %v573, 0.0
      %v691 = vadd.f32 %v689, %v690
      %v692 = vsel %vm333, %v574, 0.0
      %v693 = vadd.f32 %v691, %v692
      %v694 = vrot.slane %v693, 4
      %v695 = vadd.f32 %v693, %v694
      %v696 = vrot.slane %v695, 2
      %v697 = vadd.f32 %v695, %v696
      %v698 = vrot.slane %v697, 1
      %v699 = vadd.f32 %v697, %v698
      %v700 = vsel %vm333, %v575, 0.0
      %v701 = vsel %vm333, %v576, 0.0
      %v702 = vadd.f32 %v700, %v701
      %v703 = vsel %vm333, %v577, 0.0
      %v704 = vadd.f32 %v702, %v703
      %v705 = vsel %vm333, %v578, 0.0
      %v706 = vadd.f32 %v704, %v705
      %v707 = vsel %vm333, %v579, 0.0
      %v708 = vadd.f32 %v706, %v707
      %v709 = vsel %vm333, %v580, 0.0
      %v710 = vadd.f32 %v708, %v709
      %v711 = vrot.slane %v710, 4
      %v712 = vadd.f32 %v710, %v711
      %v713 = vrot.slane %v712, 2
      %v714 = vadd.f32 %v712, %v713
      %v715 = vrot.slane %v714, 1
      %v716 = vadd.f32 %v714, %v715
      %v717 = vmul.f32 %v597, %v476
      %v718 = vmul.f32 %v614, %v476
      %v719 = vmul.f32 %v631, %v476
      %v720 = vmul.f32 %v648, %v476
      %v721 = vmul.f32 %v665, %v476
      %v722 = vmul.f32 %v682, %v476
      %v723 = vmul.f32 %v699, %v476
      %v724 = vmul.f32 %v716, %v476
      %v725 = vadd.f32 %v717, 1e-05
      %v726 = vadd.f32 %v718, 1e-05
      %v727 = vadd.f32 %v719, 1e-05
      %v728 = vadd.f32 %v720, 1e-05
      %v729 = vadd.f32 %v721, 1e-05
      %v730 = vadd.f32 %v722, 1e-05
      %v731 = vadd.f32 %v723, 1e-05
      %v732 = vadd.f32 %v724, 1e-05
      %v733 = vrsqrt.pop %v725
      %v734 = vmul.f32 %v733, %v725
      %v735 = vmul.f32 %v734, %v733
      %v736 = vmul.f32 0.5, %v735
      %v737 = vsub.f32 1.5, %v736
      %v738 = vmul.f32 %v733, %v737
      %vm739 = vweird.f32 %v725
      %vm740 = vweird.f32 %v733
      %vm741 = vmor %vm739, %vm740
      %v742 = vsel %vm741, %v733, %v738
      %v743 = vrsqrt.pop %v726
      %v744 = vmul.f32 %v743, %v726
      %v745 = vmul.f32 %v744, %v743
      %v746 = vmul.f32 0.5, %v745
      %v747 = vsub.f32 1.5, %v746
      %v748 = vmul.f32 %v743, %v747
      %vm749 = vweird.f32 %v726
      %vm750 = vweird.f32 %v743
      %vm751 = vmor %vm749, %vm750
      %v752 = vsel %vm751, %v743, %v748
      %v753 = vrsqrt.pop %v727
      %v754 = vmul.f32 %v753, %v727
      %v755 = vmul.f32 %v754, %v753
      %v756 = vmul.f32 0.5, %v755
      %v757 = vsub.f32 1.5, %v756
      %v758 = vmul.f32 %v753, %v757
      %vm759 = vweird.f32 %v727
      %vm760 = vweird.f32 %v753
      %vm761 = vmor %vm759, %vm760
      %v762 = vsel %vm761, %v753, %v758
      %v763 = vrsqrt.pop %v728
      %v764 = vmul.f32 %v763, %v728
      %v765 = vmul.f32 %v764, %v763
      %v766 = vmul.f32 0.5, %v765
      %v767 = vsub.f32 1.5, %v766
      %v768 = vmul.f32 %v763, %v767
      %vm769 = vweird.f32 %v728
      %vm770 = vweird.f32 %v763
      %vm771 = vmor %vm769, %vm770
      %v772 = vsel %vm771, %v763, %v768
      %v773 = vrsqrt.pop %v729
      %v774 = vmul.f32 %v773, %v729
      %v775 = vmul.f32 %v774, %v773
      %v776 = vmul.f32 0.5, %v775
      %v777 = vsub.f32 1.5, %v776
      %v778 = vmul.f32 %v773, %v777
      %vm779 = vweird.f32 %v729
      %vm780 = vweird.f32 %v773
      %vm781 = vmor %vm779, %vm780
      %v782 = vsel %vm781, %v773, %v778
      %v783 = vrsqrt.pop %v730
      %v784 = vmul.f32 %v783, %v730
      %v785 = vmul.f32 %v784, %v783
      %v786 = vmul.f32 0.5, %v785
      %v787 = vsub.f32 1.5, %v786
      %v788 = vmul.f32 %v783, %v787
      %vm789 = vweird.f32 %v730
      %vm790 = vweird.f32 %v783
      %vm791 = vmor %vm789, %vm790
      %v792 = vsel %vm791, %v783, %v788
      %v793 = vrsqrt.pop %v731
      %v794 = vmul.f32 %v793, %v731
      %v795 = vmul.f32 %v794, %v793
      %v796 = vmul.f32 0.5, %v795
      %v797 = vsub.f32 1.5, %v796
      %v798 = vmul.f32 %v793, %v797
      %vm799 = vweird.f32 %v731
      %vm800 = vweird.f32 %v793
      %vm801 = vmor %vm799, %vm800
      %v802 = vsel %vm801, %v793, %v798
      %v803 = vrsqrt.pop %v732
      %v804 = vmul.f32 %v803, %v732
      %v805 = vmul.f32 %v804, %v803
      %v806 = vmul.f32 0.5, %v805
      %v807 = vsub.f32 1.5, %v806
      %v808 = vmul.f32 %v803, %v807
      %vm809 = vweird.f32 %v732
      %vm810 = vweird.f32 %v803
      %vm811 = vmor %vm809, %vm810
      %v812 = vsel %vm811, %v803, %v808
      %v813 = vmul.f32 %v485, %v742
      %v814 = vmul.f32 %v486, %v742
      %v815 = vmul.f32 %v487, %v742
      %v816 = vmul.f32 %v488, %v742
      %v817 = vmul.f32 %v489, %v742
      %v818 = vmul.f32 %v490, %v742
      %v819 = vmul.f32 %v491, %v752
      %v820 = vmul.f32 %v492, %v752
      %v821 = vmul.f32 %v493, %v752
      %v822 = vmul.f32 %v494, %v752
      %v823 = vmul.f32 %v495, %v752
      %v824 = vmul.f32 %v496, %v752
      %v825 = vmul.f32 %v497, %v762
      %v826 = vmul.f32 %v498, %v762
      %v827 = vmul.f32 %v499, %v762
      %v828 = vmul.f32 %v500, %v762
      %v829 = vmul.f32 %v501, %v762
      %v830 = vmul.f32 %v502, %v762
      %v831 = vmul.f32 %v503, %v772
      %v832 = vmul.f32 %v504, %v772
      %v833 = vmul.f32 %v505, %v772
      %v834 = vmul.f32 %v506, %v772
      %v835 = vmul.f32 %v507, %v772
      %v836 = vmul.f32 %v508, %v772
      %v837 = vmul.f32 %v509, %v782
      %v838 = vmul.f32 %v510, %v782
      %v839 = vmul.f32 %v511, %v782
      %v840 = vmul.f32 %v512, %v782
      %v841 = vmul.f32 %v513, %v782
      %v842 = vmul.f32 %v514, %v782
      %v843 = vmul.f32 %v515, %v792
      %v844 = vmul.f32 %v516, %v792
      %v845 = vmul.f32 %v517, %v792
      %v846 = vmul.f32 %v518, %v792
      %v847 = vmul.f32 %v519, %v792
      %v848 = vmul.f32 %v520, %v792
      %v849 = vmul.f32 %v521, %v802
      %v850 = vmul.f32 %v522, %v802
      %v851 = vmul.f32 %v523, %v802
      %v852 = vmul.f32 %v524, %v802
      %v853 = vmul.f32 %v525, %v802
      %v854 = vmul.f32 %v526, %v802
      %v855 = vmul.f32 %v527, %v812
      %v856 = vmul.f32 %v528, %v812
      %v857 = vmul.f32 %v529, %v812
      %v858 = vmul.f32 %v530, %v812
      %v859 = vmul.f32 %v531, %v812
      %v860 = vmul.f32 %v532, %v812
      %861 = vxpose.xlu0.b32.start [1/16] %v813, 128
      %862 = vxpose.xlu0.b32.cont [2/16] %v814, 128
      %863 = vxpose.xlu0.b32.cont [3/16] %v815, 128
      %864 = vxpose.xlu0.b32.cont [4/16] %v816, 128
      %865 = vxpose.xlu0.b32.cont [5/16] %v817, 128
      %866 = vxpose.xlu0.b32.cont [6/16] %v818, 128
      %867 = vxpose.xlu0.b32.cont [7/16] 0.0, 128
      %868 = vxpose.xlu0.b32.cont [8/16] 0.0, 128
      %869 = vxpose.xlu0.b32.cont [9/16] 0.0, 128
      %870 = vxpose.xlu0.b32.cont [10/16] 0.0, 128
      %871 = vxpose.xlu0.b32.cont [11/16] 0.0, 128
      %872 = vxpose.xlu0.b32.cont [12/16] 0.0, 128
      %873 = vxpose.xlu0.b32.cont [13/16] 0.0, 128
      %874 = vxpose.xlu0.b32.cont [14/16] 0.0, 128
      %875 = vxpose.xlu0.b32.cont [15/16] 0.0, 128
      %876 = vxpose.xlu0.b32.end [16/16] 0.0, 128
      %v877 = vpop.trf.xlu0
      %v878 = vpop.trf.xlu0
      %v879 = vpop.trf.xlu0
      %v880 = vpop.trf.xlu0
      %v881 = vpop.trf.xlu0
      %v882 = vpop.trf.xlu0
      %v883 = vpop.trf.xlu0
      %v884 = vpop.trf.xlu0
      %v885 = vpop.trf.xlu0
      %v886 = vpop.trf.xlu0
      %v887 = vpop.trf.xlu0
      %v888 = vpop.trf.xlu0
      %v889 = vpop.trf.xlu0
      %v890 = vpop.trf.xlu0
      %v891 = vpop.trf.xlu0
      %v892 = vpop.trf.xlu0
      %893 = vxpose.xlu0.b32.start [1/16] %v819, 128
      %894 = vxpose.xlu0.b32.cont [2/16] %v820, 128
      %895 = vxpose.xlu0.b32.cont [3/16] %v821, 128
      %896 = vxpose.xlu0.b32.cont [4/16] %v822, 128
      %897 = vxpose.xlu0.b32.cont [5/16] %v823, 128
      %898 = vxpose.xlu0.b32.cont [6/16] %v824, 128
      %899 = vxpose.xlu0.b32.cont [7/16] 0.0, 128
      %900 = vxpose.xlu0.b32.cont [8/16] 0.0, 128
      %901 = vxpose.xlu0.b32.cont [9/16] 0.0, 128
      %902 = vxpose.xlu0.b32.cont [10/16] 0.0, 128
      %903 = vxpose.xlu0.b32.cont [11/16] 0.0, 128
      %904 = vxpose.xlu0.b32.cont [12/16] 0.0, 128
      %905 = vxpose.xlu0.b32.cont [13/16] 0.0, 128
      %906 = vxpose.xlu0.b32.cont [14/16] 0.0, 128
      %907 = vxpose.xlu0.b32.cont [15/16] 0.0, 128
      %908 = vxpose.xlu0.b32.end [16/16] 0.0, 128
      %v909 = vpop.trf.xlu0
      %v910 = vpop.trf.xlu0
      %v911 = vpop.trf.xlu0
      %v912 = vpop.trf.xlu0
      %v913 = vpop.trf.xlu0
      %v914 = vpop.trf.xlu0
      %v915 = vpop.trf.xlu0
      %v916 = vpop.trf.xlu0
      %v917 = vpop.trf.xlu0
      %v918 = vpop.trf.xlu0
      %v919 = vpop.trf.xlu0
      %v920 = vpop.trf.xlu0
      %v921 = vpop.trf.xlu0
      %v922 = vpop.trf.xlu0
      %v923 = vpop.trf.xlu0
      %v924 = vpop.trf.xlu0
      %925 = vxpose.xlu0.b32.start [1/16] %v825, 128
      %926 = vxpose.xlu0.b32.cont [2/16] %v826, 128
      %927 = vxpose.xlu0.b32.cont [3/16] %v827, 128
      %928 = vxpose.xlu0.b32.cont [4/16] %v828, 128
      %929 = vxpose.xlu0.b32.cont [5/16] %v829, 128
      %930 = vxpose.xlu0.b32.cont [6/16] %v830, 128
      %931 = vxpose.xlu0.b32.cont [7/16] 0.0, 128
      %932 = vxpose.xlu0.b32.cont [8/16] 0.0, 128
      %933 = vxpose.xlu0.b32.cont [9/16] 0.0, 128
      %934 = vxpose.xlu0.b32.cont [10/16] 0.0, 128
      %935 = vxpose.xlu0.b32.cont [11/16] 0.0, 128
      %936 = vxpose.xlu0.b32.cont [12/16] 0.0, 128
      %937 = vxpose.xlu0.b32.cont [13/16] 0.0, 128
      %938 = vxpose.xlu0.b32.cont [14/16] 0.0, 128
      %939 = vxpose.xlu0.b32.cont [15/16] 0.0, 128
      %940 = vxpose.xlu0.b32.end [16/16] 0.0, 128
      %v941 = vpop.trf.xlu0
      %v942 = vpop.trf.xlu0
      %v943 = vpop.trf.xlu0
      %v944 = vpop.trf.xlu0
      %v945 = vpop.trf.xlu0
      %v946 = vpop.trf.xlu0
      %v947 = vpop.trf.xlu0
      %v948 = vpop.trf.xlu0
      %v949 = vpop.trf.xlu0
      %v950 = vpop.trf.xlu0
      %v951 = vpop.trf.xlu0
      %v952 = vpop.trf.xlu0
      %v953 = vpop.trf.xlu0
      %v954 = vpop.trf.xlu0
      %v955 = vpop.trf.xlu0
      %v956 = vpop.trf.xlu0
      %957 = vxpose.xlu0.b32.start [1/16] %v831, 128
      %958 = vxpose.xlu0.b32.cont [2/16] %v832, 128
      %959 = vxpose.xlu0.b32.cont [3/16] %v833, 128
      %960 = vxpose.xlu0.b32.cont [4/16] %v834, 128
      %961 = vxpose.xlu0.b32.cont [5/16] %v835, 128
      %962 = vxpose.xlu0.b32.cont [6/16] %v836, 128
      %963 = vxpose.xlu0.b32.cont [7/16] 0.0, 128
      %964 = vxpose.xlu0.b32.cont [8/16] 0.0, 128
      %965 = vxpose.xlu0.b32.cont [9/16] 0.0, 128
      %966 = vxpose.xlu0.b32.cont [10/16] 0.0, 128
      %967 = vxpose.xlu0.b32.cont [11/16] 0.0, 128
      %968 = vxpose.xlu0.b32.cont [12/16] 0.0, 128
      %969 = vxpose.xlu0.b32.cont [13/16] 0.0, 128
      %970 = vxpose.xlu0.b32.cont [14/16] 0.0, 128
      %971 = vxpose.xlu0.b32.cont [15/16] 0.0, 128
      %972 = vxpose.xlu0.b32.end [16/16] 0.0, 128
      %v973 = vpop.trf.xlu0
      %v974 = vpop.trf.xlu0
      %v975 = vpop.trf.xlu0
      %v976 = vpop.trf.xlu0
      %v977 = vpop.trf.xlu0
      %v978 = vpop.trf.xlu0
      %v979 = vpop.trf.xlu0
      %v980 = vpop.trf.xlu0
      %v981 = vpop.trf.xlu0
      %v982 = vpop.trf.xlu0
      %v983 = vpop.trf.xlu0
      %v984 = vpop.trf.xlu0
      %v985 = vpop.trf.xlu0
      %v986 = vpop.trf.xlu0
      %v987 = vpop.trf.xlu0
      %v988 = vpop.trf.xlu0
      %989 = vxpose.xlu0.b32.start [1/16] %v837, 128
      %990 = vxpose.xlu0.b32.cont [2/16] %v838, 128
      %991 = vxpose.xlu0.b32.cont [3/16] %v839, 128
      %992 = vxpose.xlu0.b32.cont [4/16] %v840, 128
      %993 = vxpose.xlu0.b32.cont [5/16] %v841, 128
      %994 = vxpose.xlu0.b32.cont [6/16] %v842, 128
      %995 = vxpose.xlu0.b32.cont [7/16] 0.0, 128
      %996 = vxpose.xlu0.b32.cont [8/16] 0.0, 128
      %997 = vxpose.xlu0.b32.cont [9/16] 0.0, 128
      %998 = vxpose.xlu0.b32.cont [10/16] 0.0, 128
      %999 = vxpose.xlu0.b32.cont [11/16] 0.0, 128
      %1000 = vxpose.xlu0.b32.cont [12/16] 0.0, 128
      %1001 = vxpose.xlu0.b32.cont [13/16] 0.0, 128
      %1002 = vxpose.xlu0.b32.cont [14/16] 0.0, 128
      %1003 = vxpose.xlu0.b32.cont [15/16] 0.0, 128
      %1004 = vxpose.xlu0.b32.end [16/16] 0.0, 128
      %v1005 = vpop.trf.xlu0
      %v1006 = vpop.trf.xlu0
      %v1007 = vpop.trf.xlu0
      %v1008 = vpop.trf.xlu0
      %v1009 = vpop.trf.xlu0
      %v1010 = vpop.trf.xlu0
      %v1011 = vpop.trf.xlu0
      %v1012 = vpop.trf.xlu0
      %v1013 = vpop.trf.xlu0
      %v1014 = vpop.trf.xlu0
      %v1015 = vpop.trf.xlu0
      %v1016 = vpop.trf.xlu0
      %v1017 = vpop.trf.xlu0
      %v1018 = vpop.trf.xlu0
      %v1019 = vpop.trf.xlu0
      %v1020 = vpop.trf.xlu0
      %1021 = vxpose.xlu0.b32.start [1/16] %v843, 128
      %1022 = vxpose.xlu0.b32.cont [2/16] %v844, 128
      %1023 = vxpose.xlu0.b32.cont [3/16] %v845, 128
      %1024 = vxpose.xlu0.b32.cont [4/16] %v846, 128
      %1025 = vxpose.xlu0.b32.cont [5/16] %v847, 128
      %1026 = vxpose.xlu0.b32.cont [6/16] %v848, 128
      %1027 = vxpose.xlu0.b32.cont [7/16] 0.0, 128
      %1028 = vxpose.xlu0.b32.cont [8/16] 0.0, 128
      %1029 = vxpose.xlu0.b32.cont [9/16] 0.0, 128
      %1030 = vxpose.xlu0.b32.cont [10/16] 0.0, 128
      %1031 = vxpose.xlu0.b32.cont [11/16] 0.0, 128
      %1032 = vxpose.xlu0.b32.cont [12/16] 0.0, 128
      %1033 = vxpose.xlu0.b32.cont [13/16] 0.0, 128
      %1034 = vxpose.xlu0.b32.cont [14/16] 0.0, 128
      %1035 = vxpose.xlu0.b32.cont [15/16] 0.0, 128
      %1036 = vxpose.xlu0.b32.end [16/16] 0.0, 128
      %v1037 = vpop.trf.xlu0
      %v1038 = vpop.trf.xlu0
      %v1039 = vpop.trf.xlu0
      %v1040 = vpop.trf.xlu0
      %v1041 = vpop.trf.xlu0
      %v1042 = vpop.trf.xlu0
      %v1043 = vpop.trf.xlu0
      %v1044 = vpop.trf.xlu0
      %v1045 = vpop.trf.xlu0
      %v1046 = vpop.trf.xlu0
      %v1047 = vpop.trf.xlu0
      %v1048 = vpop.trf.xlu0
      %v1049 = vpop.trf.xlu0
      %v1050 = vpop.trf.xlu0
      %v1051 = vpop.trf.xlu0
      %v1052 = vpop.trf.xlu0
      %1053 = vxpose.xlu0.b32.start [1/16] %v849, 128
      %1054 = vxpose.xlu0.b32.cont [2/16] %v850, 128
      %1055 = vxpose.xlu0.b32.cont [3/16] %v851, 128
      %1056 = vxpose.xlu0.b32.cont [4/16] %v852, 128
      %1057 = vxpose.xlu0.b32.cont [5/16] %v853, 128
      %1058 = vxpose.xlu0.b32.cont [6/16] %v854, 128
      %1059 = vxpose.xlu0.b32.cont [7/16] 0.0, 128
      %1060 = vxpose.xlu0.b32.cont [8/16] 0.0, 128
      %1061 = vxpose.xlu0.b32.cont [9/16] 0.0, 128
      %1062 = vxpose.xlu0.b32.cont [10/16] 0.0, 128
      %1063 = vxpose.xlu0.b32.cont [11/16] 0.0, 128
      %1064 = vxpose.xlu0.b32.cont [12/16] 0.0, 128
      %1065 = vxpose.xlu0.b32.cont [13/16] 0.0, 128
      %1066 = vxpose.xlu0.b32.cont [14/16] 0.0, 128
      %1067 = vxpose.xlu0.b32.cont [15/16] 0.0, 128
      %1068 = vxpose.xlu0.b32.end [16/16] 0.0, 128
      %v1069 = vpop.trf.xlu0
      %v1070 = vpop.trf.xlu0
      %v1071 = vpop.trf.xlu0
      %v1072 = vpop.trf.xlu0
      %v1073 = vpop.trf.xlu0
      %v1074 = vpop.trf.xlu0
      %v1075 = vpop.trf.xlu0
      %v1076 = vpop.trf.xlu0
      %v1077 = vpop.trf.xlu0
      %v1078 = vpop.trf.xlu0
      %v1079 = vpop.trf.xlu0
      %v1080 = vpop.trf.xlu0
      %v1081 = vpop.trf.xlu0
      %v1082 = vpop.trf.xlu0
      %v1083 = vpop.trf.xlu0
      %v1084 = vpop.trf.xlu0
      %1085 = vxpose.xlu0.b32.start [1/16] %v855, 128
      %1086 = vxpose.xlu0.b32.cont [2/16] %v856, 128
      %1087 = vxpose.xlu0.b32.cont [3/16] %v857, 128
      %1088 = vxpose.xlu0.b32.cont [4/16] %v858, 128
      %1089 = vxpose.xlu0.b32.cont [5/16] %v859, 128
      %1090 = vxpose.xlu0.b32.cont [6/16] %v860, 128
      %1091 = vxpose.xlu0.b32.cont [7/16] 0.0, 128
      %1092 = vxpose.xlu0.b32.cont [8/16] 0.0, 128
      %1093 = vxpose.xlu0.b32.cont [9/16] 0.0, 128
      %1094 = vxpose.xlu0.b32.cont [10/16] 0.0, 128
      %1095 = vxpose.xlu0.b32.cont [11/16] 0.0, 128
      %1096 = vxpose.xlu0.b32.cont [12/16] 0.0, 128
      %1097 = vxpose.xlu0.b32.cont [13/16] 0.0, 128
      %1098 = vxpose.xlu0.b32.cont [14/16] 0.0, 128
      %1099 = vxpose.xlu0.b32.cont [15/16] 0.0, 128
      %1100 = vxpose.xlu0.b32.end [16/16] 0.0, 128
      %v1101 = vpop.trf.xlu0
      %v1102 = vpop.trf.xlu0
      %v1103 = vpop.trf.xlu0
      %v1104 = vpop.trf.xlu0
      %v1105 = vpop.trf.xlu0
      %v1106 = vpop.trf.xlu0
      %v1107 = vpop.trf.xlu0
      %v1108 = vpop.trf.xlu0
      %v1109 = vpop.trf.xlu0
      %v1110 = vpop.trf.xlu0
      %v1111 = vpop.trf.xlu0
      %v1112 = vpop.trf.xlu0
      %v1113 = vpop.trf.xlu0
      %v1114 = vpop.trf.xlu0
      %v1115 = vpop.trf.xlu0
      %v1116 = vpop.trf.xlu0
      %v1117 = vld [vmem:[%s4] sm:$0x1]
      %v1118 = vld [vmem:[%s2] sm:$0xff]
      %v1119 = vld [vmem:[%s2 + $0x8] sm:$0xff]
      %v1120 = vld [vmem:[%s2 + $0x10] sm:$0xff]
      %v1121 = vld [vmem:[%s2 + $0x18] sm:$0xff]
      %v1122 = vld [vmem:[%s2 + $0x20] sm:$0xff]
      %v1123 = vld [vmem:[%s2 + $0x28] sm:$0xff]
      %v1124 = vperm.slane %v1117, 0
      %v1126 = vsel %vm333, %v877, 0
      %v1129 = vsel %vm333, %v878, 0
      %v1132 = vsel %vm333, %v879, 0
      %v1135 = vsel %vm333, %v880, 0
      %v1138 = vsel %vm333, %v881, 0
      %v1141 = vsel %vm333, %v882, 0
      %v1144 = vsel %vm333, %v909, 0
      %v1147 = vsel %vm333, %v910, 0
      %v1150 = vsel %vm333, %v911, 0
      %v1153 = vsel %vm333, %v912, 0
      %v1156 = vsel %vm333, %v913, 0
      %v1159 = vsel %vm333, %v914, 0
      %v1162 = vsel %vm333, %v941, 0
      %v1165 = vsel %vm333, %v942, 0
      %v1168 = vsel %vm333, %v943, 0
      %v1171 = vsel %vm333, %v944, 0
      %v1174 = vsel %vm333, %v945, 0
      %v1177 = vsel %vm333, %v946, 0
      %v1180 = vsel %vm333, %v973, 0
      %v1183 = vsel %vm333, %v974, 0
      %v1186 = vsel %vm333, %v975, 0
      %v1189 = vsel %vm333, %v976, 0
      %v1192 = vsel %vm333, %v977, 0
      %v1195 = vsel %vm333, %v978, 0
      %v1198 = vsel %vm333, %v1005, 0
      %v1201 = vsel %vm333, %v1006, 0
      %v1204 = vsel %vm333, %v1007, 0
      %v1207 = vsel %vm333, %v1008, 0
      %v1210 = vsel %vm333, %v1009, 0
      %v1213 = vsel %vm333, %v1010, 0
      %v1216 = vsel %vm333, %v1037, 0
      %v1219 = vsel %vm333, %v1038, 0
      %v1222 = vsel %vm333, %v1039, 0
      %v1225 = vsel %vm333, %v1040, 0
      %v1228 = vsel %vm333, %v1041, 0
      %v1231 = vsel %vm333, %v1042, 0
      %v1234 = vsel %vm333, %v1069, 0
      %v1237 = vsel %vm333, %v1070, 0
      %v1240 = vsel %vm333, %v1071, 0
      %v1243 = vsel %vm333, %v1072, 0
      %v1246 = vsel %vm333, %v1073, 0
      %v1249 = vsel %vm333, %v1074, 0
      %v1252 = vsel %vm333, %v1101, 0
      %v1255 = vsel %vm333, %v1102, 0
      %v1258 = vsel %vm333, %v1103, 0
      %v1261 = vsel %vm333, %v1104, 0
      %v1264 = vsel %vm333, %v1105, 0
      %v1267 = vsel %vm333, %v1106, 0
      %1269 = vmatpush.msra.mxu0 0.0
      %1270 = vmatpush.msra.mxu0 0.0
      %1271 = vmatpush.msra.mxu0 0.0
      %1272 = vmatpush.msra.mxu0 0.0
      %1273 = vmatpush.msra.mxu0 0.0
      %1274 = vmatpush.msra.mxu0 0.0
      %1275 = vmatpush.msra.mxu0 0.0
      %1276 = vmatpush.msra.mxu0 0.0
      %1277 = vmatpush.msra.mxu0 0.0
      %1278 = vmatpush.msra.mxu0 0.0
      %1279 = vmatpush.msra.mxu0 %v1123
      %1280 = vmatpush.msra.mxu0 %v1122
      %1281 = vmatpush.msra.mxu0 %v1121
      %1282 = vmatpush.msra.mxu0 %v1120
      %1283 = vmatpush.msra.mxu0 %v1119
      %1284 = vmatpush.msra.mxu0 %v1118
      %1285 = vmatmul.f32.gmra.mxu0 %v1126
      %v1286 = vpop.f32.mrf.mxu0
      %v1287 = vadd.f32 %v1124, %v1286
      %1288 = vmatmul.f32.gmra.mxu0 %v1129
      %v1289 = vpop.f32.mrf.mxu0
      %v1290 = vadd.f32 %v1124, %v1289
      %1291 = vmatmul.f32.gmra.mxu0 %v1132
      %v1292 = vpop.f32.mrf.mxu0
      %v1293 = vadd.f32 %v1124, %v1292
      %1294 = vmatmul.f32.gmra.mxu0 %v1135
      %v1295 = vpop.f32.mrf.mxu0
      %v1296 = vadd.f32 %v1124, %v1295
      %1297 = vmatmul.f32.gmra.mxu0 %v1138
      %v1298 = vpop.f32.mrf.mxu0
      %v1299 = vadd.f32 %v1124, %v1298
      %1300 = vmatmul.f32.gmra.mxu0 %v1141
      %v1301 = vpop.f32.mrf.mxu0
      %v1302 = vadd.f32 %v1124, %v1301
      %1303 = vmatmul.f32.gmra.mxu0 %v1144
      %v1304 = vpop.f32.mrf.mxu0
      %v1305 = vadd.f32 %v1124, %v1304
      %1306 = vmatmul.f32.gmra.mxu0 %v1147
      %v1307 = vpop.f32.mrf.mxu0
      %v1308 = vadd.f32 %v1124, %v1307
      %1309 = vmatmul.f32.gmra.mxu0 %v1150
      %v1310 = vpop.f32.mrf.mxu0
      %v1311 = vadd.f32 %v1124, %v1310
      %1312 = vmatmul.f32.gmra.mxu0 %v1153
      %v1313 = vpop.f32.mrf.mxu0
      %v1314 = vadd.f32 %v1124, %v1313
      %1315 = vmatmul.f32.gmra.mxu0 %v1156
      %v1316 = vpop.f32.mrf.mxu0
      %v1317 = vadd.f32 %v1124, %v1316
      %1318 = vmatmul.f32.gmra.mxu0 %v1159
      %v1319 = vpop.f32.mrf.mxu0
      %v1320 = vadd.f32 %v1124, %v1319
      %1321 = vmatmul.f32.gmra.mxu0 %v1162
      %v1322 = vpop.f32.mrf.mxu0
      %v1323 = vadd.f32 %v1124, %v1322
      %1324 = vmatmul.f32.gmra.mxu0 %v1165
      %v1325 = vpop.f32.mrf.mxu0
      %v1326 = vadd.f32 %v1124, %v1325
      %1327 = vmatmul.f32.gmra.mxu0 %v1168
      %v1328 = vpop.f32.mrf.mxu0
      %v1329 = vadd.f32 %v1124, %v1328
      %1330 = vmatmul.f32.gmra.mxu0 %v1171
      %v1331 = vpop.f32.mrf.mxu0
      %v1332 = vadd.f32 %v1124, %v1331
      %1333 = vmatmul.f32.gmra.mxu0 %v1174
      %v1334 = vpop.f32.mrf.mxu0
      %v1335 = vadd.f32 %v1124, %v1334
      %1336 = vmatmul.f32.gmra.mxu0 %v1177
      %v1337 = vpop.f32.mrf.mxu0
      %v1338 = vadd.f32 %v1124, %v1337
      %1339 = vmatmul.f32.gmra.mxu0 %v1180
      %v1340 = vpop.f32.mrf.mxu0
      %v1341 = vadd.f32 %v1124, %v1340
      %1342 = vmatmul.f32.gmra.mxu0 %v1183
      %v1343 = vpop.f32.mrf.mxu0
      %v1344 = vadd.f32 %v1124, %v1343
      %1345 = vmatmul.f32.gmra.mxu0 %v1186
      %v1346 = vpop.f32.mrf.mxu0
      %v1347 = vadd.f32 %v1124, %v1346
      %1348 = vmatmul.f32.gmra.mxu0 %v1189
      %v1349 = vpop.f32.mrf.mxu0
      %v1350 = vadd.f32 %v1124, %v1349
      %1351 = vmatmul.f32.gmra.mxu0 %v1192
      %v1352 = vpop.f32.mrf.mxu0
      %v1353 = vadd.f32 %v1124, %v1352
      %1354 = vmatmul.f32.gmra.mxu0 %v1195
      %v1355 = vpop.f32.mrf.mxu0
      %v1356 = vadd.f32 %v1124, %v1355
      %1357 = vmatmul.f32.gmra.mxu0 %v1198
      %v1358 = vpop.f32.mrf.mxu0
      %v1359 = vadd.f32 %v1124, %v1358
      %1360 = vmatmul.f32.gmra.mxu0 %v1201
      %v1361 = vpop.f32.mrf.mxu0
      %v1362 = vadd.f32 %v1124, %v1361
      %1363 = vmatmul.f32.gmra.mxu0 %v1204
      %v1364 = vpop.f32.mrf.mxu0
      %v1365 = vadd.f32 %v1124, %v1364
      %1366 = vmatmul.f32.gmra.mxu0 %v1207
      %v1367 = vpop.f32.mrf.mxu0
      %v1368 = vadd.f32 %v1124, %v1367
      %1369 = vmatmul.f32.gmra.mxu0 %v1210
      %v1370 = vpop.f32.mrf.mxu0
      %v1371 = vadd.f32 %v1124, %v1370
      %1372 = vmatmul.f32.gmra.mxu0 %v1213
      %v1373 = vpop.f32.mrf.mxu0
      %v1374 = vadd.f32 %v1124, %v1373
      %1375 = vmatmul.f32.gmra.mxu0 %v1216
      %v1376 = vpop.f32.mrf.mxu0
      %v1377 = vadd.f32 %v1124, %v1376
      %1378 = vmatmul.f32.gmra.mxu0 %v1219
      %v1379 = vpop.f32.mrf.mxu0
      %v1380 = vadd.f32 %v1124, %v1379
      %1381 = vmatmul.f32.gmra.mxu0 %v1222
      %v1382 = vpop.f32.mrf.mxu0
      %v1383 = vadd.f32 %v1124, %v1382
      %1384 = vmatmul.f32.gmra.mxu0 %v1225
      %v1385 = vpop.f32.mrf.mxu0
      %v1386 = vadd.f32 %v1124, %v1385
      %1387 = vmatmul.f32.gmra.mxu0 %v1228
      %v1388 = vpop.f32.mrf.mxu0
      %v1389 = vadd.f32 %v1124, %v1388
      %1390 = vmatmul.f32.gmra.mxu0 %v1231
      %v1391 = vpop.f32.mrf.mxu0
      %v1392 = vadd.f32 %v1124, %v1391
      %1393 = vmatmul.f32.gmra.mxu0 %v1234
      %v1394 = vpop.f32.mrf.mxu0
      %v1395 = vadd.f32 %v1124, %v1394
      %1396 = vmatmul.f32.gmra.mxu0 %v1237
      %v1397 = vpop.f32.mrf.mxu0
      %v1398 = vadd.f32 %v1124, %v1397
      %1399 = vmatmul.f32.gmra.mxu0 %v1240
      %v1400 = vpop.f32.mrf.mxu0
      %v1401 = vadd.f32 %v1124, %v1400
      %1402 = vmatmul.f32.gmra.mxu0 %v1243
      %v1403 = vpop.f32.mrf.mxu0
      %v1404 = vadd.f32 %v1124, %v1403
      %1405 = vmatmul.f32.gmra.mxu0 %v1246
      %v1406 = vpop.f32.mrf.mxu0
      %v1407 = vadd.f32 %v1124, %v1406
      %1408 = vmatmul.f32.gmra.mxu0 %v1249
      %v1409 = vpop.f32.mrf.mxu0
      %v1410 = vadd.f32 %v1124, %v1409
      %1411 = vmatmul.f32.gmra.mxu0 %v1252
      %v1412 = vpop.f32.mrf.mxu0
      %v1413 = vadd.f32 %v1124, %v1412
      %1414 = vmatmul.f32.gmra.mxu0 %v1255
      %v1415 = vpop.f32.mrf.mxu0
      %v1416 = vadd.f32 %v1124, %v1415
      %1417 = vmatmul.f32.gmra.mxu0 %v1258
      %v1418 = vpop.f32.mrf.mxu0
      %v1419 = vadd.f32 %v1124, %v1418
      %1420 = vmatmul.f32.gmra.mxu0 %v1261
      %v1421 = vpop.f32.mrf.mxu0
      %v1422 = vadd.f32 %v1124, %v1421
      %1423 = vmatmul.f32.gmra.mxu0 %v1264
      %v1424 = vpop.f32.mrf.mxu0
      %v1425 = vadd.f32 %v1124, %v1424
      %1426 = vmatmul.f32.gmra.mxu0 %v1267
      %v1427 = vpop.f32.mrf.mxu0
      %v1428 = vadd.f32 %v1124, %v1427
      %1429 = vdwg.mxu0
      %vm1430 = vcmask 523264
      %v1431 = vsel %vm1430, %v1287, 0.0
      %1432 = vadd.xlane.f32.xlu0 %v1431
      %v1433 = vpop.xlane.xlu0 %1432
      %v1434 = vsel %vm1430, %v1290, 0.0
      %1435 = vadd.xlane.f32.xlu0 %v1434
      %v1436 = vpop.xlane.xlu0 %1435
      %v1437 = vsel %vm1430, %v1293, 0.0
      %1438 = vadd.xlane.f32.xlu0 %v1437
      %v1439 = vpop.xlane.xlu0 %1438
      %v1440 = vsel %vm1430, %v1296, 0.0
      %1441 = vadd.xlane.f32.xlu0 %v1440
      %v1442 = vpop.xlane.xlu0 %1441
      %v1443 = vsel %vm1430, %v1299, 0.0
      %1444 = vadd.xlane.f32.xlu0 %v1443
      %v1445 = vpop.xlane.xlu0 %1444
      %v1446 = vsel %vm1430, %v1302, 0.0
      %1447 = vadd.xlane.f32.xlu0 %v1446
      %v1448 = vpop.xlane.xlu0 %1447
      %v1449 = vsel %vm1430, %v1305, 0.0
      %1450 = vadd.xlane.f32.xlu0 %v1449
      %v1451 = vpop.xlane.xlu0 %1450
      %v1452 = vsel %vm1430, %v1308, 0.0
      %1453 = vadd.xlane.f32.xlu0 %v1452
      %v1454 = vpop.xlane.xlu0 %1453
      %v1455 = vsel %vm1430, %v1311, 0.0
      %1456 = vadd.xlane.f32.xlu0 %v1455
      %v1457 = vpop.xlane.xlu0 %1456
      %v1458 = vsel %vm1430, %v1314, 0.0
      %1459 = vadd.xlane.f32.xlu0 %v1458
      %v1460 = vpop.xlane.xlu0 %1459
      %v1461 = vsel %vm1430, %v1317, 0.0
      %1462 = vadd.xlane.f32.xlu0 %v1461
      %v1463 = vpop.xlane.xlu0 %1462
      %v1464 = vsel %vm1430, %v1320, 0.0
      %1465 = vadd.xlane.f32.xlu0 %v1464
      %v1466 = vpop.xlane.xlu0 %1465
      %v1467 = vsel %vm1430, %v1323, 0.0
      %1468 = vadd.xlane.f32.xlu0 %v1467
      %v1469 = vpop.xlane.xlu0 %1468
      %v1470 = vsel %vm1430, %v1326, 0.0
      %1471 = vadd.xlane.f32.xlu0 %v1470
      %v1472 = vpop.xlane.xlu0 %1471
      %v1473 = vsel %vm1430, %v1329, 0.0
      %1474 = vadd.xlane.f32.xlu0 %v1473
      %v1475 = vpop.xlane.xlu0 %1474
      %v1476 = vsel %vm1430, %v1332, 0.0
      %1477 = vadd.xlane.f32.xlu0 %v1476
      %v1478 = vpop.xlane.xlu0 %1477
      %v1479 = vsel %vm1430, %v1335, 0.0
      %1480 = vadd.xlane.f32.xlu0 %v1479
      %v1481 = vpop.xlane.xlu0 %1480
      %v1482 = vsel %vm1430, %v1338, 0.0
      %1483 = vadd.xlane.f32.xlu0 %v1482
      %v1484 = vpop.xlane.xlu0 %1483
      %v1485 = vsel %vm1430, %v1341, 0.0
      %1486 = vadd.xlane.f32.xlu0 %v1485
      %v1487 = vpop.xlane.xlu0 %1486
      %v1488 = vsel %vm1430, %v1344, 0.0
      %1489 = vadd.xlane.f32.xlu0 %v1488
      %v1490 = vpop.xlane.xlu0 %1489
      %v1491 = vsel %vm1430, %v1347, 0.0
      %1492 = vadd.xlane.f32.xlu0 %v1491
      %v1493 = vpop.xlane.xlu0 %1492
      %v1494 = vsel %vm1430, %v1350, 0.0
      %1495 = vadd.xlane.f32.xlu0 %v1494
      %v1496 = vpop.xlane.xlu0 %1495
      %v1497 = vsel %vm1430, %v1353, 0.0
      %1498 = vadd.xlane.f32.xlu0 %v1497
      %v1499 = vpop.xlane.xlu0 %1498
      %v1500 = vsel %vm1430, %v1356, 0.0
      %1501 = vadd.xlane.f32.xlu0 %v1500
      %v1502 = vpop.xlane.xlu0 %1501
      %v1503 = vsel %vm1430, %v1359, 0.0
      %1504 = vadd.xlane.f32.xlu0 %v1503
      %v1505 = vpop.xlane.xlu0 %1504
      %v1506 = vsel %vm1430, %v1362, 0.0
      %1507 = vadd.xlane.f32.xlu0 %v1506
      %v1508 = vpop.xlane.xlu0 %1507
      %v1509 = vsel %vm1430, %v1365, 0.0
      %1510 = vadd.xlane.f32.xlu0 %v1509
      %v1511 = vpop.xlane.xlu0 %1510
      %v1512 = vsel %vm1430, %v1368, 0.0
      %1513 = vadd.xlane.f32.xlu0 %v1512
      %v1514 = vpop.xlane.xlu0 %1513
      %v1515 = vsel %vm1430, %v1371, 0.0
      %1516 = vadd.xlane.f32.xlu0 %v1515
      %v1517 = vpop.xlane.xlu0 %1516
      %v1518 = vsel %vm1430, %v1374, 0.0
      %1519 = vadd.xlane.f32.xlu0 %v1518
      %v1520 = vpop.xlane.xlu0 %1519
      %v1521 = vsel %vm1430, %v1377, 0.0
      %1522 = vadd.xlane.f32.xlu0 %v1521
      %v1523 = vpop.xlane.xlu0 %1522
      %v1524 = vsel %vm1430, %v1380, 0.0
      %1525 = vadd.xlane.f32.xlu0 %v1524
      %v1526 = vpop.xlane.xlu0 %1525
      %v1527 = vsel %vm1430, %v1383, 0.0
      %1528 = vadd.xlane.f32.xlu0 %v1527
      %v1529 = vpop.xlane.xlu0 %1528
      %v1530 = vsel %vm1430, %v1386, 0.0
      %1531 = vadd.xlane.f32.xlu0 %v1530
      %v1532 = vpop.xlane.xlu0 %1531
      %v1533 = vsel %vm1430, %v1389, 0.0
      %1534 = vadd.xlane.f32.xlu0 %v1533
      %v1535 = vpop.xlane.xlu0 %1534
      %v1536 = vsel %vm1430, %v1392, 0.0
      %1537 = vadd.xlane.f32.xlu0 %v1536
      %v1538 = vpop.xlane.xlu0 %1537
      %v1539 = vsel %vm1430, %v1395, 0.0
      %1540 = vadd.xlane.f32.xlu0 %v1539
      %v1541 = vpop.xlane.xlu0 %1540
      %v1542 = vsel %vm1430, %v1398, 0.0
      %1543 = vadd.xlane.f32.xlu0 %v1542
      %v1544 = vpop.xlane.xlu0 %1543
      %v1545 = vsel %vm1430, %v1401, 0.0
      %1546 = vadd.xlane.f32.xlu0 %v1545
      %v1547 = vpop.xlane.xlu0 %1546
      %v1548 = vsel %vm1430, %v1404, 0.0
      %1549 = vadd.xlane.f32.xlu0 %v1548
      %v1550 = vpop.xlane.xlu0 %1549
      %v1551 = vsel %vm1430, %v1407, 0.0
      %1552 = vadd.xlane.f32.xlu0 %v1551
      %v1553 = vpop.xlane.xlu0 %1552
      %v1554 = vsel %vm1430, %v1410, 0.0
      %1555 = vadd.xlane.f32.xlu0 %v1554
      %v1556 = vpop.xlane.xlu0 %1555
      %v1557 = vsel %vm1430, %v1413, 0.0
      %1558 = vadd.xlane.f32.xlu0 %v1557
      %v1559 = vpop.xlane.xlu0 %1558
      %v1560 = vsel %vm1430, %v1416, 0.0
      %1561 = vadd.xlane.f32.xlu0 %v1560
      %v1562 = vpop.xlane.xlu0 %1561
      %v1563 = vsel %vm1430, %v1419, 0.0
      %1564 = vadd.xlane.f32.xlu0 %v1563
      %v1565 = vpop.xlane.xlu0 %1564
      %v1566 = vsel %vm1430, %v1422, 0.0
      %1567 = vadd.xlane.f32.xlu0 %v1566
      %v1568 = vpop.xlane.xlu0 %1567
      %v1569 = vsel %vm1430, %v1425, 0.0
      %1570 = vadd.xlane.f32.xlu0 %v1569
      %v1571 = vpop.xlane.xlu0 %1570
      %v1572 = vsel %vm1430, %v1428, 0.0
      %1573 = vadd.xlane.f32.xlu0 %v1572
      %v1574 = vpop.xlane.xlu0 %1573
      %v1575 = vrcp.pop 64.0
      %v1576 = vmul.f32 64.0, %v1575
      %v1577 = vsub.f32 1.0, %v1576
      %v1578 = vmul.f32 %v1575, %v1577
      %v1579 = vadd.f32 %v1575, %v1578
      %vm1580 = vweird.f32 %v1575
      %v1581 = vsel %vm1580, %v1575, %v1579
      %v1582 = vmul.f32 %v1433, %v1581
      %v1583 = vmul.f32 %v1436, %v1581
      %v1584 = vmul.f32 %v1439, %v1581
      %v1585 = vmul.f32 %v1442, %v1581
      %v1586 = vmul.f32 %v1445, %v1581
      %v1587 = vmul.f32 %v1448, %v1581
      %v1588 = vmul.f32 %v1451, %v1581
      %v1589 = vmul.f32 %v1454, %v1581
      %v1590 = vmul.f32 %v1457, %v1581
      %v1591 = vmul.f32 %v1460, %v1581
      %v1592 = vmul.f32 %v1463, %v1581
      %v1593 = vmul.f32 %v1466, %v1581
      %v1594 = vmul.f32 %v1469, %v1581
      %v1595 = vmul.f32 %v1472, %v1581
      %v1596 = vmul.f32 %v1475, %v1581
      %v1597 = vmul.f32 %v1478, %v1581
      %v1598 = vmul.f32 %v1481, %v1581
      %v1599 = vmul.f32 %v1484, %v1581
      %v1600 = vmul.f32 %v1487, %v1581
      %v1601 = vmul.f32 %v1490, %v1581
      %v1602 = vmul.f32 %v1493, %v1581
      %v1603 = vmul.f32 %v1496, %v1581
      %v1604 = vmul.f32 %v1499, %v1581
      %v1605 = vmul.f32 %v1502, %v1581
      %v1606 = vmul.f32 %v1505, %v1581
      %v1607 = vmul.f32 %v1508, %v1581
      %v1608 = vmul.f32 %v1511, %v1581
      %v1609 = vmul.f32 %v1514, %v1581
      %v1610 = vmul.f32 %v1517, %v1581
      %v1611 = vmul.f32 %v1520, %v1581
      %v1612 = vmul.f32 %v1523, %v1581
      %v1613 = vmul.f32 %v1526, %v1581
      %v1614 = vmul.f32 %v1529, %v1581
      %v1615 = vmul.f32 %v1532, %v1581
      %v1616 = vmul.f32 %v1535, %v1581
      %v1617 = vmul.f32 %v1538, %v1581
      %v1618 = vmul.f32 %v1541, %v1581
      %v1619 = vmul.f32 %v1544, %v1581
      %v1620 = vmul.f32 %v1547, %v1581
      %v1621 = vmul.f32 %v1550, %v1581
      %v1622 = vmul.f32 %v1553, %v1581
      %v1623 = vmul.f32 %v1556, %v1581
      %v1624 = vmul.f32 %v1559, %v1581
      %v1625 = vmul.f32 %v1562, %v1581
      %v1626 = vmul.f32 %v1565, %v1581
      %v1627 = vmul.f32 %v1568, %v1581
      %v1628 = vmul.f32 %v1571, %v1581
      %v1629 = vmul.f32 %v1574, %v1581
      %v1630 = vsub.f32 %v1287, %v1582
      %v1631 = vsub.f32 %v1290, %v1583
      %v1632 = vsub.f32 %v1293, %v1584
      %v1633 = vsub.f32 %v1296, %v1585
      %v1634 = vsub.f32 %v1299, %v1586
      %v1635 = vsub.f32 %v1302, %v1587
      %v1636 = vsub.f32 %v1305, %v1588
      %v1637 = vsub.f32 %v1308, %v1589
      %v1638 = vsub.f32 %v1311, %v1590
      %v1639 = vsub.f32 %v1314, %v1591
      %v1640 = vsub.f32 %v1317, %v1592
      %v1641 = vsub.f32 %v1320, %v1593
      %v1642 = vsub.f32 %v1323, %v1594
      %v1643 = vsub.f32 %v1326, %v1595
      %v1644 = vsub.f32 %v1329, %v1596
      %v1645 = vsub.f32 %v1332, %v1597
      %v1646 = vsub.f32 %v1335, %v1598
      %v1647 = vsub.f32 %v1338, %v1599
      %v1648 = vsub.f32 %v1341, %v1600
      %v1649 = vsub.f32 %v1344, %v1601
      %v1650 = vsub.f32 %v1347, %v1602
      %v1651 = vsub.f32 %v1350, %v1603
      %v1652 = vsub.f32 %v1353, %v1604
      %v1653 = vsub.f32 %v1356, %v1605
      %v1654 = vsub.f32 %v1359, %v1606
      %v1655 = vsub.f32 %v1362, %v1607
      %v1656 = vsub.f32 %v1365, %v1608
      %v1657 = vsub.f32 %v1368, %v1609
      %v1658 = vsub.f32 %v1371, %v1610
      %v1659 = vsub.f32 %v1374, %v1611
      %v1660 = vsub.f32 %v1377, %v1612
      %v1661 = vsub.f32 %v1380, %v1613
      %v1662 = vsub.f32 %v1383, %v1614
      %v1663 = vsub.f32 %v1386, %v1615
      %v1664 = vsub.f32 %v1389, %v1616
      %v1665 = vsub.f32 %v1392, %v1617
      %v1666 = vsub.f32 %v1395, %v1618
      %v1667 = vsub.f32 %v1398, %v1619
      %v1668 = vsub.f32 %v1401, %v1620
      %v1669 = vsub.f32 %v1404, %v1621
      %v1670 = vsub.f32 %v1407, %v1622
      %v1671 = vsub.f32 %v1410, %v1623
      %v1672 = vsub.f32 %v1413, %v1624
      %v1673 = vsub.f32 %v1416, %v1625
      %v1674 = vsub.f32 %v1419, %v1626
      %v1675 = vsub.f32 %v1422, %v1627
      %v1676 = vsub.f32 %v1425, %v1628
      %v1677 = vsub.f32 %v1428, %v1629
      %v1678 = vmul.f32 %v1630, %v1630
      %v1679 = vmul.f32 %v1631, %v1631
      %v1680 = vmul.f32 %v1632, %v1632
      %v1681 = vmul.f32 %v1633, %v1633
      %v1682 = vmul.f32 %v1634, %v1634
      %v1683 = vmul.f32 %v1635, %v1635
      %v1684 = vmul.f32 %v1636, %v1636
      %v1685 = vmul.f32 %v1637, %v1637
      %v1686 = vmul.f32 %v1638, %v1638
      %v1687 = vmul.f32 %v1639, %v1639
      %v1688 = vmul.f32 %v1640, %v1640
      %v1689 = vmul.f32 %v1641, %v1641
      %v1690 = vmul.f32 %v1642, %v1642
      %v1691 = vmul.f32 %v1643, %v1643
      %v1692 = vmul.f32 %v1644, %v1644
      %v1693 = vmul.f32 %v1645, %v1645
      %v1694 = vmul.f32 %v1646, %v1646
      %v1695 = vmul.f32 %v1647, %v1647
      %v1696 = vmul.f32 %v1648, %v1648
      %v1697 = vmul.f32 %v1649, %v1649
      %v1698 = vmul.f32 %v1650, %v1650
      %v1699 = vmul.f32 %v1651, %v1651
      %v1700 = vmul.f32 %v1652, %v1652
      %v1701 = vmul.f32 %v1653, %v1653
      %v1702 = vmul.f32 %v1654, %v1654
      %v1703 = vmul.f32 %v1655, %v1655
      %v1704 = vmul.f32 %v1656, %v1656
      %v1705 = vmul.f32 %v1657, %v1657
      %v1706 = vmul.f32 %v1658, %v1658
      %v1707 = vmul.f32 %v1659, %v1659
      %v1708 = vmul.f32 %v1660, %v1660
      %v1709 = vmul.f32 %v1661, %v1661
      %v1710 = vmul.f32 %v1662, %v1662
      %v1711 = vmul.f32 %v1663, %v1663
      %v1712 = vmul.f32 %v1664, %v1664
      %v1713 = vmul.f32 %v1665, %v1665
      %v1714 = vmul.f32 %v1666, %v1666
      %v1715 = vmul.f32 %v1667, %v1667
      %v1716 = vmul.f32 %v1668, %v1668
      %v1717 = vmul.f32 %v1669, %v1669
      %v1718 = vmul.f32 %v1670, %v1670
      %v1719 = vmul.f32 %v1671, %v1671
      %v1720 = vmul.f32 %v1672, %v1672
      %v1721 = vmul.f32 %v1673, %v1673
      %v1722 = vmul.f32 %v1674, %v1674
      %v1723 = vmul.f32 %v1675, %v1675
      %v1724 = vmul.f32 %v1676, %v1676
      %v1725 = vmul.f32 %v1677, %v1677
      %v1726 = vsel %vm1430, %v1678, 0.0
      %1727 = vadd.xlane.f32.xlu0 %v1726
      %v1728 = vpop.xlane.xlu0 %1727
      %v1729 = vsel %vm1430, %v1679, 0.0
      %1730 = vadd.xlane.f32.xlu0 %v1729
      %v1731 = vpop.xlane.xlu0 %1730
      %v1732 = vsel %vm1430, %v1680, 0.0
      %1733 = vadd.xlane.f32.xlu0 %v1732
      %v1734 = vpop.xlane.xlu0 %1733
      %v1735 = vsel %vm1430, %v1681, 0.0
      %1736 = vadd.xlane.f32.xlu0 %v1735
      %v1737 = vpop.xlane.xlu0 %1736
      %v1738 = vsel %vm1430, %v1682, 0.0
      %1739 = vadd.xlane.f32.xlu0 %v1738
      %v1740 = vpop.xlane.xlu0 %1739
      %v1741 = vsel %vm1430, %v1683, 0.0
      %1742 = vadd.xlane.f32.xlu0 %v1741
      %v1743 = vpop.xlane.xlu0 %1742
      %v1744 = vsel %vm1430, %v1684, 0.0
      %1745 = vadd.xlane.f32.xlu0 %v1744
      %v1746 = vpop.xlane.xlu0 %1745
      %v1747 = vsel %vm1430, %v1685, 0.0
      %1748 = vadd.xlane.f32.xlu0 %v1747
      %v1749 = vpop.xlane.xlu0 %1748
      %v1750 = vsel %vm1430, %v1686, 0.0
      %1751 = vadd.xlane.f32.xlu0 %v1750
      %v1752 = vpop.xlane.xlu0 %1751
      %v1753 = vsel %vm1430, %v1687, 0.0
      %1754 = vadd.xlane.f32.xlu0 %v1753
      %v1755 = vpop.xlane.xlu0 %1754
      %v1756 = vsel %vm1430, %v1688, 0.0
      %1757 = vadd.xlane.f32.xlu0 %v1756
      %v1758 = vpop.xlane.xlu0 %1757
      %v1759 = vsel %vm1430, %v1689, 0.0
      %1760 = vadd.xlane.f32.xlu0 %v1759
      %v1761 = vpop.xlane.xlu0 %1760
      %v1762 = vsel %vm1430, %v1690, 0.0
      %1763 = vadd.xlane.f32.xlu0 %v1762
      %v1764 = vpop.xlane.xlu0 %1763
      %v1765 = vsel %vm1430, %v1691, 0.0
      %1766 = vadd.xlane.f32.xlu0 %v1765
      %v1767 = vpop.xlane.xlu0 %1766
      %v1768 = vsel %vm1430, %v1692, 0.0
      %1769 = vadd.xlane.f32.xlu0 %v1768
      %v1770 = vpop.xlane.xlu0 %1769
      %v1771 = vsel %vm1430, %v1693, 0.0
      %1772 = vadd.xlane.f32.xlu0 %v1771
      %v1773 = vpop.xlane.xlu0 %1772
      %v1774 = vsel %vm1430, %v1694, 0.0
      %1775 = vadd.xlane.f32.xlu0 %v1774
      %v1776 = vpop.xlane.xlu0 %1775
      %v1777 = vsel %vm1430, %v1695, 0.0
      %1778 = vadd.xlane.f32.xlu0 %v1777
      %v1779 = vpop.xlane.xlu0 %1778
      %v1780 = vsel %vm1430, %v1696, 0.0
      %1781 = vadd.xlane.f32.xlu0 %v1780
      %v1782 = vpop.xlane.xlu0 %1781
      %v1783 = vsel %vm1430, %v1697, 0.0
      %1784 = vadd.xlane.f32.xlu0 %v1783
      %v1785 = vpop.xlane.xlu0 %1784
      %v1786 = vsel %vm1430, %v1698, 0.0
      %1787 = vadd.xlane.f32.xlu0 %v1786
      %v1788 = vpop.xlane.xlu0 %1787
      %v1789 = vsel %vm1430, %v1699, 0.0
      %1790 = vadd.xlane.f32.xlu0 %v1789
      %v1791 = vpop.xlane.xlu0 %1790
      %v1792 = vsel %vm1430, %v1700, 0.0
      %1793 = vadd.xlane.f32.xlu0 %v1792
      %v1794 = vpop.xlane.xlu0 %1793
      %v1795 = vsel %vm1430, %v1701, 0.0
      %1796 = vadd.xlane.f32.xlu0 %v1795
      %v1797 = vpop.xlane.xlu0 %1796
      %v1798 = vsel %vm1430, %v1702, 0.0
      %1799 = vadd.xlane.f32.xlu0 %v1798
      %v1800 = vpop.xlane.xlu0 %1799
      %v1801 = vsel %vm1430, %v1703, 0.0
      %1802 = vadd.xlane.f32.xlu0 %v1801
      %v1803 = vpop.xlane.xlu0 %1802
      %v1804 = vsel %vm1430, %v1704, 0.0
      %1805 = vadd.xlane.f32.xlu0 %v1804
      %v1806 = vpop.xlane.xlu0 %1805
      %v1807 = vsel %vm1430, %v1705, 0.0
      %1808 = vadd.xlane.f32.xlu0 %v1807
      %v1809 = vpop.xlane.xlu0 %1808
      %v1810 = vsel %vm1430, %v1706, 0.0
      %1811 = vadd.xlane.f32.xlu0 %v1810
      %v1812 = vpop.xlane.xlu0 %1811
      %v1813 = vsel %vm1430, %v1707, 0.0
      %1814 = vadd.xlane.f32.xlu0 %v1813
      %v1815 = vpop.xlane.xlu0 %1814
      %v1816 = vsel %vm1430, %v1708, 0.0
      %1817 = vadd.xlane.f32.xlu0 %v1816
      %v1818 = vpop.xlane.xlu0 %1817
      %v1819 = vsel %vm1430, %v1709, 0.0
      %1820 = vadd.xlane.f32.xlu0 %v1819
      %v1821 = vpop.xlane.xlu0 %1820
      %v1822 = vsel %vm1430, %v1710, 0.0
      %1823 = vadd.xlane.f32.xlu0 %v1822
      %v1824 = vpop.xlane.xlu0 %1823
      %v1825 = vsel %vm1430, %v1711, 0.0
      %1826 = vadd.xlane.f32.xlu0 %v1825
      %v1827 = vpop.xlane.xlu0 %1826
      %v1828 = vsel %vm1430, %v1712, 0.0
      %1829 = vadd.xlane.f32.xlu0 %v1828
      %v1830 = vpop.xlane.xlu0 %1829
      %v1831 = vsel %vm1430, %v1713, 0.0
      %1832 = vadd.xlane.f32.xlu0 %v1831
      %v1833 = vpop.xlane.xlu0 %1832
      %v1834 = vsel %vm1430, %v1714, 0.0
      %1835 = vadd.xlane.f32.xlu0 %v1834
      %v1836 = vpop.xlane.xlu0 %1835
      %v1837 = vsel %vm1430, %v1715, 0.0
      %1838 = vadd.xlane.f32.xlu0 %v1837
      %v1839 = vpop.xlane.xlu0 %1838
      %v1840 = vsel %vm1430, %v1716, 0.0
      %1841 = vadd.xlane.f32.xlu0 %v1840
      %v1842 = vpop.xlane.xlu0 %1841
      %v1843 = vsel %vm1430, %v1717, 0.0
      %1844 = vadd.xlane.f32.xlu0 %v1843
      %v1845 = vpop.xlane.xlu0 %1844
      %v1846 = vsel %vm1430, %v1718, 0.0
      %1847 = vadd.xlane.f32.xlu0 %v1846
      %v1848 = vpop.xlane.xlu0 %1847
      %v1849 = vsel %vm1430, %v1719, 0.0
      %1850 = vadd.xlane.f32.xlu0 %v1849
      %v1851 = vpop.xlane.xlu0 %1850
      %v1852 = vsel %vm1430, %v1720, 0.0
      %1853 = vadd.xlane.f32.xlu0 %v1852
      %v1854 = vpop.xlane.xlu0 %1853
      %v1855 = vsel %vm1430, %v1721, 0.0
      %1856 = vadd.xlane.f32.xlu0 %v1855
      %v1857 = vpop.xlane.xlu0 %1856
      %v1858 = vsel %vm1430, %v1722, 0.0
      %1859 = vadd.xlane.f32.xlu0 %v1858
      %v1860 = vpop.xlane.xlu0 %1859
      %v1861 = vsel %vm1430, %v1723, 0.0
      %1862 = vadd.xlane.f32.xlu0 %v1861
      %v1863 = vpop.xlane.xlu0 %1862
      %v1864 = vsel %vm1430, %v1724, 0.0
      %1865 = vadd.xlane.f32.xlu0 %v1864
      %v1866 = vpop.xlane.xlu0 %1865
      %v1867 = vsel %vm1430, %v1725, 0.0
      %1868 = vadd.xlane.f32.xlu0 %v1867
      %v1869 = vpop.xlane.xlu0 %1868
      %v1870 = vmul.f32 %v1728, %v1581
      %v1871 = vmul.f32 %v1731, %v1581
      %v1872 = vmul.f32 %v1734, %v1581
      %v1873 = vmul.f32 %v1737, %v1581
      %v1874 = vmul.f32 %v1740, %v1581
      %v1875 = vmul.f32 %v1743, %v1581
      %v1876 = vmul.f32 %v1746, %v1581
      %v1877 = vmul.f32 %v1749, %v1581
      %v1878 = vmul.f32 %v1752, %v1581
      %v1879 = vmul.f32 %v1755, %v1581
      %v1880 = vmul.f32 %v1758, %v1581
      %v1881 = vmul.f32 %v1761, %v1581
      %v1882 = vmul.f32 %v1764, %v1581
      %v1883 = vmul.f32 %v1767, %v1581
      %v1884 = vmul.f32 %v1770, %v1581
      %v1885 = vmul.f32 %v1773, %v1581
      %v1886 = vmul.f32 %v1776, %v1581
      %v1887 = vmul.f32 %v1779, %v1581
      %v1888 = vmul.f32 %v1782, %v1581
      %v1889 = vmul.f32 %v1785, %v1581
      %v1890 = vmul.f32 %v1788, %v1581
      %v1891 = vmul.f32 %v1791, %v1581
      %v1892 = vmul.f32 %v1794, %v1581
      %v1893 = vmul.f32 %v1797, %v1581
      %v1894 = vmul.f32 %v1800, %v1581
      %v1895 = vmul.f32 %v1803, %v1581
      %v1896 = vmul.f32 %v1806, %v1581
      %v1897 = vmul.f32 %v1809, %v1581
      %v1898 = vmul.f32 %v1812, %v1581
      %v1899 = vmul.f32 %v1815, %v1581
      %v1900 = vmul.f32 %v1818, %v1581
      %v1901 = vmul.f32 %v1821, %v1581
      %v1902 = vmul.f32 %v1824, %v1581
      %v1903 = vmul.f32 %v1827, %v1581
      %v1904 = vmul.f32 %v1830, %v1581
      %v1905 = vmul.f32 %v1833, %v1581
      %v1906 = vmul.f32 %v1836, %v1581
      %v1907 = vmul.f32 %v1839, %v1581
      %v1908 = vmul.f32 %v1842, %v1581
      %v1909 = vmul.f32 %v1845, %v1581
      %v1910 = vmul.f32 %v1848, %v1581
      %v1911 = vmul.f32 %v1851, %v1581
      %v1912 = vmul.f32 %v1854, %v1581
      %v1913 = vmul.f32 %v1857, %v1581
      %v1914 = vmul.f32 %v1860, %v1581
      %v1915 = vmul.f32 %v1863, %v1581
      %v1916 = vmul.f32 %v1866, %v1581
      %v1917 = vmul.f32 %v1869, %v1581
      %v1918 = vadd.f32 %v1870, 1e-05
      %v1919 = vadd.f32 %v1871, 1e-05
      %v1920 = vadd.f32 %v1872, 1e-05
      %v1921 = vadd.f32 %v1873, 1e-05
      %v1922 = vadd.f32 %v1874, 1e-05
      %v1923 = vadd.f32 %v1875, 1e-05
      %v1924 = vadd.f32 %v1876, 1e-05
      %v1925 = vadd.f32 %v1877, 1e-05
      %v1926 = vadd.f32 %v1878, 1e-05
      %v1927 = vadd.f32 %v1879, 1e-05
      %v1928 = vadd.f32 %v1880, 1e-05
      %v1929 = vadd.f32 %v1881, 1e-05
      %v1930 = vadd.f32 %v1882, 1e-05
      %v1931 = vadd.f32 %v1883, 1e-05
      %v1932 = vadd.f32 %v1884, 1e-05
      %v1933 = vadd.f32 %v1885, 1e-05
      %v1934 = vadd.f32 %v1886, 1e-05
      %v1935 = vadd.f32 %v1887, 1e-05
      %v1936 = vadd.f32 %v1888, 1e-05
      %v1937 = vadd.f32 %v1889, 1e-05
      %v1938 = vadd.f32 %v1890, 1e-05
      %v1939 = vadd.f32 %v1891, 1e-05
      %v1940 = vadd.f32 %v1892, 1e-05
      %v1941 = vadd.f32 %v1893, 1e-05
      %v1942 = vadd.f32 %v1894, 1e-05
      %v1943 = vadd.f32 %v1895, 1e-05
      %v1944 = vadd.f32 %v1896, 1e-05
      %v1945 = vadd.f32 %v1897, 1e-05
      %v1946 = vadd.f32 %v1898, 1e-05
      %v1947 = vadd.f32 %v1899, 1e-05
      %v1948 = vadd.f32 %v1900, 1e-05
      %v1949 = vadd.f32 %v1901, 1e-05
      %v1950 = vadd.f32 %v1902, 1e-05
      %v1951 = vadd.f32 %v1903, 1e-05
      %v1952 = vadd.f32 %v1904, 1e-05
      %v1953 = vadd.f32 %v1905, 1e-05
      %v1954 = vadd.f32 %v1906, 1e-05
      %v1955 = vadd.f32 %v1907, 1e-05
      %v1956 = vadd.f32 %v1908, 1e-05
      %v1957 = vadd.f32 %v1909, 1e-05
      %v1958 = vadd.f32 %v1910, 1e-05
      %v1959 = vadd.f32 %v1911, 1e-05
      %v1960 = vadd.f32 %v1912, 1e-05
      %v1961 = vadd.f32 %v1913, 1e-05
      %v1962 = vadd.f32 %v1914, 1e-05
      %v1963 = vadd.f32 %v1915, 1e-05
      %v1964 = vadd.f32 %v1916, 1e-05
      %v1965 = vadd.f32 %v1917, 1e-05
      %v1966 = vrsqrt.pop %v1918
      %v1967 = vmul.f32 %v1966, %v1918
      %v1968 = vmul.f32 %v1967, %v1966
      %v1969 = vmul.f32 0.5, %v1968
      %v1970 = vsub.f32 1.5, %v1969
      %v1971 = vmul.f32 %v1966, %v1970
      %vm1972 = vweird.f32 %v1918
      %vm1973 = vweird.f32 %v1966
      %vm1974 = vmor %vm1972, %vm1973
      %v1975 = vsel %vm1974, %v1966, %v1971
      %v1976 = vrsqrt.pop %v1919
      %v1977 = vmul.f32 %v1976, %v1919
      %v1978 = vmul.f32 %v1977, %v1976
      %v1979 = vmul.f32 0.5, %v1978
      %v1980 = vsub.f32 1.5, %v1979
      %v1981 = vmul.f32 %v1976, %v1980
      %vm1982 = vweird.f32 %v1919
      %vm1983 = vweird.f32 %v1976
      %vm1984 = vmor %vm1982, %vm1983
      %v1985 = vsel %vm1984, %v1976, %v1981
      %v1986 = vrsqrt.pop %v1920
      %v1987 = vmul.f32 %v1986, %v1920
      %v1988 = vmul.f32 %v1987, %v1986
      %v1989 = vmul.f32 0.5, %v1988
      %v1990 = vsub.f32 1.5, %v1989
      %v1991 = vmul.f32 %v1986, %v1990
      %vm1992 = vweird.f32 %v1920
      %vm1993 = vweird.f32 %v1986
      %vm1994 = vmor %vm1992, %vm1993
      %v1995 = vsel %vm1994, %v1986, %v1991
      %v1996 = vrsqrt.pop %v1921
      %v1997 = vmul.f32 %v1996, %v1921
      %v1998 = vmul.f32 %v1997, %v1996
      %v1999 = vmul.f32 0.5, %v1998
      %v2000 = vsub.f32 1.5, %v1999
      %v2001 = vmul.f32 %v1996, %v2000
      %vm2002 = vweird.f32 %v1921
      %vm2003 = vweird.f32 %v1996
      %vm2004 = vmor %vm2002, %vm2003
      %v2005 = vsel %vm2004, %v1996, %v2001
      %v2006 = vrsqrt.pop %v1922
      %v2007 = vmul.f32 %v2006, %v1922
      %v2008 = vmul.f32 %v2007, %v2006
      %v2009 = vmul.f32 0.5, %v2008
      %v2010 = vsub.f32 1.5, %v2009
      %v2011 = vmul.f32 %v2006, %v2010
      %vm2012 = vweird.f32 %v1922
      %vm2013 = vweird.f32 %v2006
      %vm2014 = vmor %vm2012, %vm2013
      %v2015 = vsel %vm2014, %v2006, %v2011
      %v2016 = vrsqrt.pop %v1923
      %v2017 = vmul.f32 %v2016, %v1923
      %v2018 = vmul.f32 %v2017, %v2016
      %v2019 = vmul.f32 0.5, %v2018
      %v2020 = vsub.f32 1.5, %v2019
      %v2021 = vmul.f32 %v2016, %v2020
      %vm2022 = vweird.f32 %v1923
      %vm2023 = vweird.f32 %v2016
      %vm2024 = vmor %vm2022, %vm2023
      %v2025 = vsel %vm2024, %v2016, %v2021
      %v2026 = vrsqrt.pop %v1924
      %v2027 = vmul.f32 %v2026, %v1924
      %v2028 = vmul.f32 %v2027, %v2026
      %v2029 = vmul.f32 0.5, %v2028
      %v2030 = vsub.f32 1.5, %v2029
      %v2031 = vmul.f32 %v2026, %v2030
      %vm2032 = vweird.f32 %v1924
      %vm2033 = vweird.f32 %v2026
      %vm2034 = vmor %vm2032, %vm2033
      %v2035 = vsel %vm2034, %v2026, %v2031
      %v2036 = vrsqrt.pop %v1925
      %v2037 = vmul.f32 %v2036, %v1925
      %v2038 = vmul.f32 %v2037, %v2036
      %v2039 = vmul.f32 0.5, %v2038
      %v2040 = vsub.f32 1.5, %v2039
      %v2041 = vmul.f32 %v2036, %v2040
      %vm2042 = vweird.f32 %v1925
      %vm2043 = vweird.f32 %v2036
      %vm2044 = vmor %vm2042, %vm2043
      %v2045 = vsel %vm2044, %v2036, %v2041
      %v2046 = vrsqrt.pop %v1926
      %v2047 = vmul.f32 %v2046, %v1926
      %v2048 = vmul.f32 %v2047, %v2046
      %v2049 = vmul.f32 0.5, %v2048
      %v2050 = vsub.f32 1.5, %v2049
      %v2051 = vmul.f32 %v2046, %v2050
      %vm2052 = vweird.f32 %v1926
      %vm2053 = vweird.f32 %v2046
      %vm2054 = vmor %vm2052, %vm2053
      %v2055 = vsel %vm2054, %v2046, %v2051
      %v2056 = vrsqrt.pop %v1927
      %v2057 = vmul.f32 %v2056, %v1927
      %v2058 = vmul.f32 %v2057, %v2056
      %v2059 = vmul.f32 0.5, %v2058
      %v2060 = vsub.f32 1.5, %v2059
      %v2061 = vmul.f32 %v2056, %v2060
      %vm2062 = vweird.f32 %v1927
      %vm2063 = vweird.f32 %v2056
      %vm2064 = vmor %vm2062, %vm2063
      %v2065 = vsel %vm2064, %v2056, %v2061
      %v2066 = vrsqrt.pop %v1928
      %v2067 = vmul.f32 %v2066, %v1928
      %v2068 = vmul.f32 %v2067, %v2066
      %v2069 = vmul.f32 0.5, %v2068
      %v2070 = vsub.f32 1.5, %v2069
      %v2071 = vmul.f32 %v2066, %v2070
      %vm2072 = vweird.f32 %v1928
      %vm2073 = vweird.f32 %v2066
      %vm2074 = vmor %vm2072, %vm2073
      %v2075 = vsel %vm2074, %v2066, %v2071
      %v2076 = vrsqrt.pop %v1929
      %v2077 = vmul.f32 %v2076, %v1929
      %v2078 = vmul.f32 %v2077, %v2076
      %v2079 = vmul.f32 0.5, %v2078
      %v2080 = vsub.f32 1.5, %v2079
      %v2081 = vmul.f32 %v2076, %v2080
      %vm2082 = vweird.f32 %v1929
      %vm2083 = vweird.f32 %v2076
      %vm2084 = vmor %vm2082, %vm2083
      %v2085 = vsel %vm2084, %v2076, %v2081
      %v2086 = vrsqrt.pop %v1930
      %v2087 = vmul.f32 %v2086, %v1930
      %v2088 = vmul.f32 %v2087, %v2086
      %v2089 = vmul.f32 0.5, %v2088
      %v2090 = vsub.f32 1.5, %v2089
      %v2091 = vmul.f32 %v2086, %v2090
      %vm2092 = vweird.f32 %v1930
      %vm2093 = vweird.f32 %v2086
      %vm2094 = vmor %vm2092, %vm2093
      %v2095 = vsel %vm2094, %v2086, %v2091
      %v2096 = vrsqrt.pop %v1931
      %v2097 = vmul.f32 %v2096, %v1931
      %v2098 = vmul.f32 %v2097, %v2096
      %v2099 = vmul.f32 0.5, %v2098
      %v2100 = vsub.f32 1.5, %v2099
      %v2101 = vmul.f32 %v2096, %v2100
      %vm2102 = vweird.f32 %v1931
      %vm2103 = vweird.f32 %v2096
      %vm2104 = vmor %vm2102, %vm2103
      %v2105 = vsel %vm2104, %v2096, %v2101
      %v2106 = vrsqrt.pop %v1932
      %v2107 = vmul.f32 %v2106, %v1932
      %v2108 = vmul.f32 %v2107, %v2106
      %v2109 = vmul.f32 0.5, %v2108
      %v2110 = vsub.f32 1.5, %v2109
      %v2111 = vmul.f32 %v2106, %v2110
      %vm2112 = vweird.f32 %v1932
      %vm2113 = vweird.f32 %v2106
      %vm2114 = vmor %vm2112, %vm2113
      %v2115 = vsel %vm2114, %v2106, %v2111
      %v2116 = vrsqrt.pop %v1933
      %v2117 = vmul.f32 %v2116, %v1933
      %v2118 = vmul.f32 %v2117, %v2116
      %v2119 = vmul.f32 0.5, %v2118
      %v2120 = vsub.f32 1.5, %v2119
      %v2121 = vmul.f32 %v2116, %v2120
      %vm2122 = vweird.f32 %v1933
      %vm2123 = vweird.f32 %v2116
      %vm2124 = vmor %vm2122, %vm2123
      %v2125 = vsel %vm2124, %v2116, %v2121
      %v2126 = vrsqrt.pop %v1934
      %v2127 = vmul.f32 %v2126, %v1934
      %v2128 = vmul.f32 %v2127, %v2126
      %v2129 = vmul.f32 0.5, %v2128
      %v2130 = vsub.f32 1.5, %v2129
      %v2131 = vmul.f32 %v2126, %v2130
      %vm2132 = vweird.f32 %v1934
      %vm2133 = vweird.f32 %v2126
      %vm2134 = vmor %vm2132, %vm2133
      %v2135 = vsel %vm2134, %v2126, %v2131
      %v2136 = vrsqrt.pop %v1935
      %v2137 = vmul.f32 %v2136, %v1935
      %v2138 = vmul.f32 %v2137, %v2136
      %v2139 = vmul.f32 0.5, %v2138
      %v2140 = vsub.f32 1.5, %v2139
      %v2141 = vmul.f32 %v2136, %v2140
      %vm2142 = vweird.f32 %v1935
      %vm2143 = vweird.f32 %v2136
      %vm2144 = vmor %vm2142, %vm2143
      %v2145 = vsel %vm2144, %v2136, %v2141
      %v2146 = vrsqrt.pop %v1936
      %v2147 = vmul.f32 %v2146, %v1936
      %v2148 = vmul.f32 %v2147, %v2146
      %v2149 = vmul.f32 0.5, %v2148
      %v2150 = vsub.f32 1.5, %v2149
      %v2151 = vmul.f32 %v2146, %v2150
      %vm2152 = vweird.f32 %v1936
      %vm2153 = vweird.f32 %v2146
      %vm2154 = vmor %vm2152, %vm2153
      %v2155 = vsel %vm2154, %v2146, %v2151
      %v2156 = vrsqrt.pop %v1937
      %v2157 = vmul.f32 %v2156, %v1937
      %v2158 = vmul.f32 %v2157, %v2156
      %v2159 = vmul.f32 0.5, %v2158
      %v2160 = vsub.f32 1.5, %v2159
      %v2161 = vmul.f32 %v2156, %v2160
      %vm2162 = vweird.f32 %v1937
      %vm2163 = vweird.f32 %v2156
      %vm2164 = vmor %vm2162, %vm2163
      %v2165 = vsel %vm2164, %v2156, %v2161
      %v2166 = vrsqrt.pop %v1938
      %v2167 = vmul.f32 %v2166, %v1938
      %v2168 = vmul.f32 %v2167, %v2166
      %v2169 = vmul.f32 0.5, %v2168
      %v2170 = vsub.f32 1.5, %v2169
      %v2171 = vmul.f32 %v2166, %v2170
      %vm2172 = vweird.f32 %v1938
      %vm2173 = vweird.f32 %v2166
      %vm2174 = vmor %vm2172, %vm2173
      %v2175 = vsel %vm2174, %v2166, %v2171
      %v2176 = vrsqrt.pop %v1939
      %v2177 = vmul.f32 %v2176, %v1939
      %v2178 = vmul.f32 %v2177, %v2176
      %v2179 = vmul.f32 0.5, %v2178
      %v2180 = vsub.f32 1.5, %v2179
      %v2181 = vmul.f32 %v2176, %v2180
      %vm2182 = vweird.f32 %v1939
      %vm2183 = vweird.f32 %v2176
      %vm2184 = vmor %vm2182, %vm2183
      %v2185 = vsel %vm2184, %v2176, %v2181
      %v2186 = vrsqrt.pop %v1940
      %v2187 = vmul.f32 %v2186, %v1940
      %v2188 = vmul.f32 %v2187, %v2186
      %v2189 = vmul.f32 0.5, %v2188
      %v2190 = vsub.f32 1.5, %v2189
      %v2191 = vmul.f32 %v2186, %v2190
      %vm2192 = vweird.f32 %v1940
      %vm2193 = vweird.f32 %v2186
      %vm2194 = vmor %vm2192, %vm2193
      %v2195 = vsel %vm2194, %v2186, %v2191
      %v2196 = vrsqrt.pop %v1941
      %v2197 = vmul.f32 %v2196, %v1941
      %v2198 = vmul.f32 %v2197, %v2196
      %v2199 = vmul.f32 0.5, %v2198
      %v2200 = vsub.f32 1.5, %v2199
      %v2201 = vmul.f32 %v2196, %v2200
      %vm2202 = vweird.f32 %v1941
      %vm2203 = vweird.f32 %v2196
      %vm2204 = vmor %vm2202, %vm2203
      %v2205 = vsel %vm2204, %v2196, %v2201
      %v2206 = vrsqrt.pop %v1942
      %v2207 = vmul.f32 %v2206, %v1942
      %v2208 = vmul.f32 %v2207, %v2206
      %v2209 = vmul.f32 0.5, %v2208
      %v2210 = vsub.f32 1.5, %v2209
      %v2211 = vmul.f32 %v2206, %v2210
      %vm2212 = vweird.f32 %v1942
      %vm2213 = vweird.f32 %v2206
      %vm2214 = vmor %vm2212, %vm2213
      %v2215 = vsel %vm2214, %v2206, %v2211
      %v2216 = vrsqrt.pop %v1943
      %v2217 = vmul.f32 %v2216, %v1943
      %v2218 = vmul.f32 %v2217, %v2216
      %v2219 = vmul.f32 0.5, %v2218
      %v2220 = vsub.f32 1.5, %v2219
      %v2221 = vmul.f32 %v2216, %v2220
      %vm2222 = vweird.f32 %v1943
      %vm2223 = vweird.f32 %v2216
      %vm2224 = vmor %vm2222, %vm2223
      %v2225 = vsel %vm2224, %v2216, %v2221
      %v2226 = vrsqrt.pop %v1944
      %v2227 = vmul.f32 %v2226, %v1944
      %v2228 = vmul.f32 %v2227, %v2226
      %v2229 = vmul.f32 0.5, %v2228
      %v2230 = vsub.f32 1.5, %v2229
      %v2231 = vmul.f32 %v2226, %v2230
      %vm2232 = vweird.f32 %v1944
      %vm2233 = vweird.f32 %v2226
      %vm2234 = vmor %vm2232, %vm2233
      %v2235 = vsel %vm2234, %v2226, %v2231
      %v2236 = vrsqrt.pop %v1945
      %v2237 = vmul.f32 %v2236, %v1945
      %v2238 = vmul.f32 %v2237, %v2236
      %v2239 = vmul.f32 0.5, %v2238
      %v2240 = vsub.f32 1.5, %v2239
      %v2241 = vmul.f32 %v2236, %v2240
      %vm2242 = vweird.f32 %v1945
      %vm2243 = vweird.f32 %v2236
      %vm2244 = vmor %vm2242, %vm2243
      %v2245 = vsel %vm2244, %v2236, %v2241
      %v2246 = vrsqrt.pop %v1946
      %v2247 = vmul.f32 %v2246, %v1946
      %v2248 = vmul.f32 %v2247, %v2246
      %v2249 = vmul.f32 0.5, %v2248
      %v2250 = vsub.f32 1.5, %v2249
      %v2251 = vmul.f32 %v2246, %v2250
      %vm2252 = vweird.f32 %v1946
      %vm2253 = vweird.f32 %v2246
      %vm2254 = vmor %vm2252, %vm2253
      %v2255 = vsel %vm2254, %v2246, %v2251
      %v2256 = vrsqrt.pop %v1947
      %v2257 = vmul.f32 %v2256, %v1947
      %v2258 = vmul.f32 %v2257, %v2256
      %v2259 = vmul.f32 0.5, %v2258
      %v2260 = vsub.f32 1.5, %v2259
      %v2261 = vmul.f32 %v2256, %v2260
      %vm2262 = vweird.f32 %v1947
      %vm2263 = vweird.f32 %v2256
      %vm2264 = vmor %vm2262, %vm2263
      %v2265 = vsel %vm2264, %v2256, %v2261
      %v2266 = vrsqrt.pop %v1948
      %v2267 = vmul.f32 %v2266, %v1948
      %v2268 = vmul.f32 %v2267, %v2266
      %v2269 = vmul.f32 0.5, %v2268
      %v2270 = vsub.f32 1.5, %v2269
      %v2271 = vmul.f32 %v2266, %v2270
      %vm2272 = vweird.f32 %v1948
      %vm2273 = vweird.f32 %v2266
      %vm2274 = vmor %vm2272, %vm2273
      %v2275 = vsel %vm2274, %v2266, %v2271
      %v2276 = vrsqrt.pop %v1949
      %v2277 = vmul.f32 %v2276, %v1949
      %v2278 = vmul.f32 %v2277, %v2276
      %v2279 = vmul.f32 0.5, %v2278
      %v2280 = vsub.f32 1.5, %v2279
      %v2281 = vmul.f32 %v2276, %v2280
      %vm2282 = vweird.f32 %v1949
      %vm2283 = vweird.f32 %v2276
      %vm2284 = vmor %vm2282, %vm2283
      %v2285 = vsel %vm2284, %v2276, %v2281
      %v2286 = vrsqrt.pop %v1950
      %v2287 = vmul.f32 %v2286, %v1950
      %v2288 = vmul.f32 %v2287, %v2286
      %v2289 = vmul.f32 0.5, %v2288
      %v2290 = vsub.f32 1.5, %v2289
      %v2291 = vmul.f32 %v2286, %v2290
      %vm2292 = vweird.f32 %v1950
      %vm2293 = vweird.f32 %v2286
      %vm2294 = vmor %vm2292, %vm2293
      %v2295 = vsel %vm2294, %v2286, %v2291
      %v2296 = vrsqrt.pop %v1951
      %v2297 = vmul.f32 %v2296, %v1951
      %v2298 = vmul.f32 %v2297, %v2296
      %v2299 = vmul.f32 0.5, %v2298
      %v2300 = vsub.f32 1.5, %v2299
      %v2301 = vmul.f32 %v2296, %v2300
      %vm2302 = vweird.f32 %v1951
      %vm2303 = vweird.f32 %v2296
      %vm2304 = vmor %vm2302, %vm2303
      %v2305 = vsel %vm2304, %v2296, %v2301
      %v2306 = vrsqrt.pop %v1952
      %v2307 = vmul.f32 %v2306, %v1952
      %v2308 = vmul.f32 %v2307, %v2306
      %v2309 = vmul.f32 0.5, %v2308
      %v2310 = vsub.f32 1.5, %v2309
      %v2311 = vmul.f32 %v2306, %v2310
      %vm2312 = vweird.f32 %v1952
      %vm2313 = vweird.f32 %v2306
      %vm2314 = vmor %vm2312, %vm2313
      %v2315 = vsel %vm2314, %v2306, %v2311
      %v2316 = vrsqrt.pop %v1953
      %v2317 = vmul.f32 %v2316, %v1953
      %v2318 = vmul.f32 %v2317, %v2316
      %v2319 = vmul.f32 0.5, %v2318
      %v2320 = vsub.f32 1.5, %v2319
      %v2321 = vmul.f32 %v2316, %v2320
      %vm2322 = vweird.f32 %v1953
      %vm2323 = vweird.f32 %v2316
      %vm2324 = vmor %vm2322, %vm2323
      %v2325 = vsel %vm2324, %v2316, %v2321
      %v2326 = vrsqrt.pop %v1954
      %v2327 = vmul.f32 %v2326, %v1954
      %v2328 = vmul.f32 %v2327, %v2326
      %v2329 = vmul.f32 0.5, %v2328
      %v2330 = vsub.f32 1.5, %v2329
      %v2331 = vmul.f32 %v2326, %v2330
      %vm2332 = vweird.f32 %v1954
      %vm2333 = vweird.f32 %v2326
      %vm2334 = vmor %vm2332, %vm2333
      %v2335 = vsel %vm2334, %v2326, %v2331
      %v2336 = vrsqrt.pop %v1955
      %v2337 = vmul.f32 %v2336, %v1955
      %v2338 = vmul.f32 %v2337, %v2336
      %v2339 = vmul.f32 0.5, %v2338
      %v2340 = vsub.f32 1.5, %v2339
      %v2341 = vmul.f32 %v2336, %v2340
      %vm2342 = vweird.f32 %v1955
      %vm2343 = vweird.f32 %v2336
      %vm2344 = vmor %vm2342, %vm2343
      %v2345 = vsel %vm2344, %v2336, %v2341
      %v2346 = vrsqrt.pop %v1956
      %v2347 = vmul.f32 %v2346, %v1956
      %v2348 = vmul.f32 %v2347, %v2346
      %v2349 = vmul.f32 0.5, %v2348
      %v2350 = vsub.f32 1.5, %v2349
      %v2351 = vmul.f32 %v2346, %v2350
      %vm2352 = vweird.f32 %v1956
      %vm2353 = vweird.f32 %v2346
      %vm2354 = vmor %vm2352, %vm2353
      %v2355 = vsel %vm2354, %v2346, %v2351
      %v2356 = vrsqrt.pop %v1957
      %v2357 = vmul.f32 %v2356, %v1957
      %v2358 = vmul.f32 %v2357, %v2356
      %v2359 = vmul.f32 0.5, %v2358
      %v2360 = vsub.f32 1.5, %v2359
      %v2361 = vmul.f32 %v2356, %v2360
      %vm2362 = vweird.f32 %v1957
      %vm2363 = vweird.f32 %v2356
      %vm2364 = vmor %vm2362, %vm2363
      %v2365 = vsel %vm2364, %v2356, %v2361
      %v2366 = vrsqrt.pop %v1958
      %v2367 = vmul.f32 %v2366, %v1958
      %v2368 = vmul.f32 %v2367, %v2366
      %v2369 = vmul.f32 0.5, %v2368
      %v2370 = vsub.f32 1.5, %v2369
      %v2371 = vmul.f32 %v2366, %v2370
      %vm2372 = vweird.f32 %v1958
      %vm2373 = vweird.f32 %v2366
      %vm2374 = vmor %vm2372, %vm2373
      %v2375 = vsel %vm2374, %v2366, %v2371
      %v2376 = vrsqrt.pop %v1959
      %v2377 = vmul.f32 %v2376, %v1959
      %v2378 = vmul.f32 %v2377, %v2376
      %v2379 = vmul.f32 0.5, %v2378
      %v2380 = vsub.f32 1.5, %v2379
      %v2381 = vmul.f32 %v2376, %v2380
      %vm2382 = vweird.f32 %v1959
      %vm2383 = vweird.f32 %v2376
      %vm2384 = vmor %vm2382, %vm2383
      %v2385 = vsel %vm2384, %v2376, %v2381
      %v2386 = vrsqrt.pop %v1960
      %v2387 = vmul.f32 %v2386, %v1960
      %v2388 = vmul.f32 %v2387, %v2386
      %v2389 = vmul.f32 0.5, %v2388
      %v2390 = vsub.f32 1.5, %v2389
      %v2391 = vmul.f32 %v2386, %v2390
      %vm2392 = vweird.f32 %v1960
      %vm2393 = vweird.f32 %v2386
      %vm2394 = vmor %vm2392, %vm2393
      %v2395 = vsel %vm2394, %v2386, %v2391
      %v2396 = vrsqrt.pop %v1961
      %v2397 = vmul.f32 %v2396, %v1961
      %v2398 = vmul.f32 %v2397, %v2396
      %v2399 = vmul.f32 0.5, %v2398
      %v2400 = vsub.f32 1.5, %v2399
      %v2401 = vmul.f32 %v2396, %v2400
      %vm2402 = vweird.f32 %v1961
      %vm2403 = vweird.f32 %v2396
      %vm2404 = vmor %vm2402, %vm2403
      %v2405 = vsel %vm2404, %v2396, %v2401
      %v2406 = vrsqrt.pop %v1962
      %v2407 = vmul.f32 %v2406, %v1962
      %v2408 = vmul.f32 %v2407, %v2406
      %v2409 = vmul.f32 0.5, %v2408
      %v2410 = vsub.f32 1.5, %v2409
      %v2411 = vmul.f32 %v2406, %v2410
      %vm2412 = vweird.f32 %v1962
      %vm2413 = vweird.f32 %v2406
      %vm2414 = vmor %vm2412, %vm2413
      %v2415 = vsel %vm2414, %v2406, %v2411
      %v2416 = vrsqrt.pop %v1963
      %v2417 = vmul.f32 %v2416, %v1963
      %v2418 = vmul.f32 %v2417, %v2416
      %v2419 = vmul.f32 0.5, %v2418
      %v2420 = vsub.f32 1.5, %v2419
      %v2421 = vmul.f32 %v2416, %v2420
      %vm2422 = vweird.f32 %v1963
      %vm2423 = vweird.f32 %v2416
      %vm2424 = vmor %vm2422, %vm2423
      %v2425 = vsel %vm2424, %v2416, %v2421
      %v2426 = vrsqrt.pop %v1964
      %v2427 = vmul.f32 %v2426, %v1964
      %v2428 = vmul.f32 %v2427, %v2426
      %v2429 = vmul.f32 0.5, %v2428
      %v2430 = vsub.f32 1.5, %v2429
      %v2431 = vmul.f32 %v2426, %v2430
      %vm2432 = vweird.f32 %v1964
      %vm2433 = vweird.f32 %v2426
      %vm2434 = vmor %vm2432, %vm2433
      %v2435 = vsel %vm2434, %v2426, %v2431
      %v2436 = vrsqrt.pop %v1965
      %v2437 = vmul.f32 %v2436, %v1965
      %v2438 = vmul.f32 %v2437, %v2436
      %v2439 = vmul.f32 0.5, %v2438
      %v2440 = vsub.f32 1.5, %v2439
      %v2441 = vmul.f32 %v2436, %v2440
      %vm2442 = vweird.f32 %v1965
      %vm2443 = vweird.f32 %v2436
      %vm2444 = vmor %vm2442, %vm2443
      %v2445 = vsel %vm2444, %v2436, %v2441
      %v2446 = vmul.f32 %v1630, %v1975
      %v2447 = vmul.f32 %v1631, %v1985
      %v2448 = vmul.f32 %v1632, %v1995
      %v2449 = vmul.f32 %v1633, %v2005
      %v2450 = vmul.f32 %v1634, %v2015
      %v2451 = vmul.f32 %v1635, %v2025
      %v2452 = vmul.f32 %v1636, %v2035
      %v2453 = vmul.f32 %v1637, %v2045
      %v2454 = vmul.f32 %v1638, %v2055
      %v2455 = vmul.f32 %v1639, %v2065
      %v2456 = vmul.f32 %v1640, %v2075
      %v2457 = vmul.f32 %v1641, %v2085
      %v2458 = vmul.f32 %v1642, %v2095
      %v2459 = vmul.f32 %v1643, %v2105
      %v2460 = vmul.f32 %v1644, %v2115
      %v2461 = vmul.f32 %v1645, %v2125
      %v2462 = vmul.f32 %v1646, %v2135
      %v2463 = vmul.f32 %v1647, %v2145
      %v2464 = vmul.f32 %v1648, %v2155
      %v2465 = vmul.f32 %v1649, %v2165
      %v2466 = vmul.f32 %v1650, %v2175
      %v2467 = vmul.f32 %v1651, %v2185
      %v2468 = vmul.f32 %v1652, %v2195
      %v2469 = vmul.f32 %v1653, %v2205
      %v2470 = vmul.f32 %v1654, %v2215
      %v2471 = vmul.f32 %v1655, %v2225
      %v2472 = vmul.f32 %v1656, %v2235
      %v2473 = vmul.f32 %v1657, %v2245
      %v2474 = vmul.f32 %v1658, %v2255
      %v2475 = vmul.f32 %v1659, %v2265
      %v2476 = vmul.f32 %v1660, %v2275
      %v2477 = vmul.f32 %v1661, %v2285
      %v2478 = vmul.f32 %v1662, %v2295
      %v2479 = vmul.f32 %v1663, %v2305
      %v2480 = vmul.f32 %v1664, %v2315
      %v2481 = vmul.f32 %v1665, %v2325
      %v2482 = vmul.f32 %v1666, %v2335
      %v2483 = vmul.f32 %v1667, %v2345
      %v2484 = vmul.f32 %v1668, %v2355
      %v2485 = vmul.f32 %v1669, %v2365
      %v2486 = vmul.f32 %v1670, %v2375
      %v2487 = vmul.f32 %v1671, %v2385
      %v2488 = vmul.f32 %v1672, %v2395
      %v2489 = vmul.f32 %v1673, %v2405
      %v2490 = vmul.f32 %v1674, %v2415
      %v2491 = vmul.f32 %v1675, %v2425
      %v2492 = vmul.f32 %v1676, %v2435
      %v2493 = vmul.f32 %v1677, %v2445
      %v2494 = vld [vmem:[%s4 + $0x1] sm:$0x1]
      %v2495 = vld [vmem:[%s3] sm:$0xff]
      %v2496 = vld [vmem:[%s3 + $0x8] sm:$0xff]
      %v2497 = vld [vmem:[%s3 + $0x10] sm:$0xff]
      %v2498 = vld [vmem:[%s3 + $0x18] sm:$0xff]
      %v2499 = vld [vmem:[%s3 + $0x20] sm:$0xff]
      %v2500 = vld [vmem:[%s3 + $0x28] sm:$0xff]
      %v2501 = vld [vmem:[%s3 + $0x30] sm:$0xff]
      %v2502 = vld [vmem:[%s3 + $0x38] sm:$0xff]
      %v2503 = vperm.slane %v2494, 0
      %v2505 = vsel %vm1430, %v2446, 0
      %v2508 = vsel %vm1430, %v2447, 0
      %v2511 = vsel %vm1430, %v2448, 0
      %v2514 = vsel %vm1430, %v2449, 0
      %v2517 = vsel %vm1430, %v2450, 0
      %v2520 = vsel %vm1430, %v2451, 0
      %v2523 = vsel %vm1430, %v2452, 0
      %v2526 = vsel %vm1430, %v2453, 0
      %v2529 = vsel %vm1430, %v2454, 0
      %v2532 = vsel %vm1430, %v2455, 0
      %v2535 = vsel %vm1430, %v2456, 0
      %v2538 = vsel %vm1430, %v2457, 0
      %v2541 = vsel %vm1430, %v2458, 0
      %v2544 = vsel %vm1430, %v2459, 0
      %v2547 = vsel %vm1430, %v2460, 0
      %v2550 = vsel %vm1430, %v2461, 0
      %v2553 = vsel %vm1430, %v2462, 0
      %v2556 = vsel %vm1430, %v2463, 0
      %v2559 = vsel %vm1430, %v2464, 0
      %v2562 = vsel %vm1430, %v2465, 0
      %v2565 = vsel %vm1430, %v2466, 0
      %v2568 = vsel %vm1430, %v2467, 0
      %v2571 = vsel %vm1430, %v2468, 0
      %v2574 = vsel %vm1430, %v2469, 0
      %v2577 = vsel %vm1430, %v2470, 0
      %v2580 = vsel %vm1430, %v2471, 0
      %v2583 = vsel %vm1430, %v2472, 0
      %v2586 = vsel %vm1430, %v2473, 0
      %v2589 = vsel %vm1430, %v2474, 0
      %v2592 = vsel %vm1430, %v2475, 0
      %v2595 = vsel %vm1430, %v2476, 0
      %v2598 = vsel %vm1430, %v2477, 0
      %v2601 = vsel %vm1430, %v2478, 0
      %v2604 = vsel %vm1430, %v2479, 0
      %v2607 = vsel %vm1430, %v2480, 0
      %v2610 = vsel %vm1430, %v2481, 0
      %v2613 = vsel %vm1430, %v2482, 0
      %v2616 = vsel %vm1430, %v2483, 0
      %v2619 = vsel %vm1430, %v2484, 0
      %v2622 = vsel %vm1430, %v2485, 0
      %v2625 = vsel %vm1430, %v2486, 0
      %v2628 = vsel %vm1430, %v2487, 0
      %v2631 = vsel %vm1430, %v2488, 0
      %v2634 = vsel %vm1430, %v2489, 0
      %v2637 = vsel %vm1430, %v2490, 0
      %v2640 = vsel %vm1430, %v2491, 0
      %v2643 = vsel %vm1430, %v2492, 0
      %v2646 = vsel %vm1430, %v2493, 0
      %2648 = vmatpush.msra.mxu0 0.0
      %2649 = vmatpush.msra.mxu0 0.0
      %2650 = vmatpush.msra.mxu0 0.0
      %2651 = vmatpush.msra.mxu0 0.0
      %2652 = vmatpush.msra.mxu0 0.0
      %2653 = vmatpush.msra.mxu0 0.0
      %2654 = vmatpush.msra.mxu0 0.0
      %2655 = vmatpush.msra.mxu0 0.0
      %2656 = vmatpush.msra.mxu0 %v2502
      %2657 = vmatpush.msra.mxu0 %v2501
      %2658 = vmatpush.msra.mxu0 %v2500
      %2659 = vmatpush.msra.mxu0 %v2499
      %2660 = vmatpush.msra.mxu0 %v2498
      %2661 = vmatpush.msra.mxu0 %v2497
      %2662 = vmatpush.msra.mxu0 %v2496
      %2663 = vmatpush.msra.mxu0 %v2495
      %2664 = vmatmul.f32.gmra.mxu0 %v2505
      %v2665 = vpop.f32.mrf.mxu0
      %v2666 = vadd.f32 %v2503, %v2665
      %2667 = vmatmul.f32.gmra.mxu0 %v2508
      %v2668 = vpop.f32.mrf.mxu0
      %v2669 = vadd.f32 %v2503, %v2668
      %2670 = vmatmul.f32.gmra.mxu0 %v2511
      %v2671 = vpop.f32.mrf.mxu0
      %v2672 = vadd.f32 %v2503, %v2671
      %2673 = vmatmul.f32.gmra.mxu0 %v2514
      %v2674 = vpop.f32.mrf.mxu0
      %v2675 = vadd.f32 %v2503, %v2674
      %2676 = vmatmul.f32.gmra.mxu0 %v2517
      %v2677 = vpop.f32.mrf.mxu0
      %v2678 = vadd.f32 %v2503, %v2677
      %2679 = vmatmul.f32.gmra.mxu0 %v2520
      %v2680 = vpop.f32.mrf.mxu0
      %v2681 = vadd.f32 %v2503, %v2680
      %2682 = vmatmul.f32.gmra.mxu0 %v2523
      %v2683 = vpop.f32.mrf.mxu0
      %v2684 = vadd.f32 %v2503, %v2683
      %2685 = vmatmul.f32.gmra.mxu0 %v2526
      %v2686 = vpop.f32.mrf.mxu0
      %v2687 = vadd.f32 %v2503, %v2686
      %2688 = vmatmul.f32.gmra.mxu0 %v2529
      %v2689 = vpop.f32.mrf.mxu0
      %v2690 = vadd.f32 %v2503, %v2689
      %2691 = vmatmul.f32.gmra.mxu0 %v2532
      %v2692 = vpop.f32.mrf.mxu0
      %v2693 = vadd.f32 %v2503, %v2692
      %2694 = vmatmul.f32.gmra.mxu0 %v2535
      %v2695 = vpop.f32.mrf.mxu0
      %v2696 = vadd.f32 %v2503, %v2695
      %2697 = vmatmul.f32.gmra.mxu0 %v2538
      %v2698 = vpop.f32.mrf.mxu0
      %v2699 = vadd.f32 %v2503, %v2698
      %2700 = vmatmul.f32.gmra.mxu0 %v2541
      %v2701 = vpop.f32.mrf.mxu0
      %v2702 = vadd.f32 %v2503, %v2701
      %2703 = vmatmul.f32.gmra.mxu0 %v2544
      %v2704 = vpop.f32.mrf.mxu0
      %v2705 = vadd.f32 %v2503, %v2704
      %2706 = vmatmul.f32.gmra.mxu0 %v2547
      %v2707 = vpop.f32.mrf.mxu0
      %v2708 = vadd.f32 %v2503, %v2707
      %2709 = vmatmul.f32.gmra.mxu0 %v2550
      %v2710 = vpop.f32.mrf.mxu0
      %v2711 = vadd.f32 %v2503, %v2710
      %2712 = vmatmul.f32.gmra.mxu0 %v2553
      %v2713 = vpop.f32.mrf.mxu0
      %v2714 = vadd.f32 %v2503, %v2713
      %2715 = vmatmul.f32.gmra.mxu0 %v2556
      %v2716 = vpop.f32.mrf.mxu0
      %v2717 = vadd.f32 %v2503, %v2716
      %2718 = vmatmul.f32.gmra.mxu0 %v2559
      %v2719 = vpop.f32.mrf.mxu0
      %v2720 = vadd.f32 %v2503, %v2719
      %2721 = vmatmul.f32.gmra.mxu0 %v2562
      %v2722 = vpop.f32.mrf.mxu0
      %v2723 = vadd.f32 %v2503, %v2722
      %2724 = vmatmul.f32.gmra.mxu0 %v2565
      %v2725 = vpop.f32.mrf.mxu0
      %v2726 = vadd.f32 %v2503, %v2725
      %2727 = vmatmul.f32.gmra.mxu0 %v2568
      %v2728 = vpop.f32.mrf.mxu0
      %v2729 = vadd.f32 %v2503, %v2728
      %2730 = vmatmul.f32.gmra.mxu0 %v2571
      %v2731 = vpop.f32.mrf.mxu0
      %v2732 = vadd.f32 %v2503, %v2731
      %2733 = vmatmul.f32.gmra.mxu0 %v2574
      %v2734 = vpop.f32.mrf.mxu0
      %v2735 = vadd.f32 %v2503, %v2734
      %2736 = vmatmul.f32.gmra.mxu0 %v2577
      %v2737 = vpop.f32.mrf.mxu0
      %v2738 = vadd.f32 %v2503, %v2737
      %2739 = vmatmul.f32.gmra.mxu0 %v2580
      %v2740 = vpop.f32.mrf.mxu0
      %v2741 = vadd.f32 %v2503, %v2740
      %2742 = vmatmul.f32.gmra.mxu0 %v2583
      %v2743 = vpop.f32.mrf.mxu0
      %v2744 = vadd.f32 %v2503, %v2743
      %2745 = vmatmul.f32.gmra.mxu0 %v2586
      %v2746 = vpop.f32.mrf.mxu0
      %v2747 = vadd.f32 %v2503, %v2746
      %2748 = vmatmul.f32.gmra.mxu0 %v2589
      %v2749 = vpop.f32.mrf.mxu0
      %v2750 = vadd.f32 %v2503, %v2749
      %2751 = vmatmul.f32.gmra.mxu0 %v2592
      %v2752 = vpop.f32.mrf.mxu0
      %v2753 = vadd.f32 %v2503, %v2752
      %2754 = vmatmul.f32.gmra.mxu0 %v2595
      %v2755 = vpop.f32.mrf.mxu0
      %v2756 = vadd.f32 %v2503, %v2755
      %2757 = vmatmul.f32.gmra.mxu0 %v2598
      %v2758 = vpop.f32.mrf.mxu0
      %v2759 = vadd.f32 %v2503, %v2758
      %2760 = vmatmul.f32.gmra.mxu0 %v2601
      %v2761 = vpop.f32.mrf.mxu0
      %v2762 = vadd.f32 %v2503, %v2761
      %2763 = vmatmul.f32.gmra.mxu0 %v2604
      %v2764 = vpop.f32.mrf.mxu0
      %v2765 = vadd.f32 %v2503, %v2764
      %2766 = vmatmul.f32.gmra.mxu0 %v2607
      %v2767 = vpop.f32.mrf.mxu0
      %v2768 = vadd.f32 %v2503, %v2767
      %2769 = vmatmul.f32.gmra.mxu0 %v2610
      %v2770 = vpop.f32.mrf.mxu0
      %v2771 = vadd.f32 %v2503, %v2770
      %2772 = vmatmul.f32.gmra.mxu0 %v2613
      %v2773 = vpop.f32.mrf.mxu0
      %v2774 = vadd.f32 %v2503, %v2773
      %2775 = vmatmul.f32.gmra.mxu0 %v2616
      %v2776 = vpop.f32.mrf.mxu0
      %v2777 = vadd.f32 %v2503, %v2776
      %2778 = vmatmul.f32.gmra.mxu0 %v2619
      %v2779 = vpop.f32.mrf.mxu0
      %v2780 = vadd.f32 %v2503, %v2779
      %2781 = vmatmul.f32.gmra.mxu0 %v2622
      %v2782 = vpop.f32.mrf.mxu0
      %v2783 = vadd.f32 %v2503, %v2782
      %2784 = vmatmul.f32.gmra.mxu0 %v2625
      %v2785 = vpop.f32.mrf.mxu0
      %v2786 = vadd.f32 %v2503, %v2785
      %2787 = vmatmul.f32.gmra.mxu0 %v2628
      %v2788 = vpop.f32.mrf.mxu0
      %v2789 = vadd.f32 %v2503, %v2788
      %2790 = vmatmul.f32.gmra.mxu0 %v2631
      %v2791 = vpop.f32.mrf.mxu0
      %v2792 = vadd.f32 %v2503, %v2791
      %2793 = vmatmul.f32.gmra.mxu0 %v2634
      %v2794 = vpop.f32.mrf.mxu0
      %v2795 = vadd.f32 %v2503, %v2794
      %2796 = vmatmul.f32.gmra.mxu0 %v2637
      %v2797 = vpop.f32.mrf.mxu0
      %v2798 = vadd.f32 %v2503, %v2797
      %2799 = vmatmul.f32.gmra.mxu0 %v2640
      %v2800 = vpop.f32.mrf.mxu0
      %v2801 = vadd.f32 %v2503, %v2800
      %2802 = vmatmul.f32.gmra.mxu0 %v2643
      %v2803 = vpop.f32.mrf.mxu0
      %v2804 = vadd.f32 %v2503, %v2803
      %2805 = vmatmul.f32.gmra.mxu0 %v2646
      %v2806 = vpop.f32.mrf.mxu0
      %v2807 = vadd.f32 %v2503, %v2806
      %2808 = vdwg.mxu0
      %v2809 = vld [vmem:[%s4 + $0x5] sm:$0x1]
      %v2810 = vld [vmem:[%s4 + $0x6] sm:$0x1]
      %v2811 = vld [vmem:[%s4 + $0x2] sm:$0x7]
      %vm2812 = vcmask 23552
      %v2813 = vsel %vm2812, %v2666, -inf
      %v2814 = vsel %vm2812, %v2669, -inf
      %v2815 = vmax.f32 %v2813, %v2814
      %v2816 = vsel %vm2812, %v2672, -inf
      %v2817 = vmax.f32 %v2815, %v2816
      %v2818 = vsel %vm2812, %v2675, -inf
      %v2819 = vmax.f32 %v2817, %v2818
      %v2820 = vsel %vm2812, %v2678, -inf
      %v2821 = vmax.f32 %v2819, %v2820
      %v2822 = vsel %vm2812, %v2681, -inf
      %v2823 = vmax.f32 %v2821, %v2822
      %v2824 = vrot.slane %v2823, 4
      %v2825 = vmax.f32 %v2823, %v2824
      %v2826 = vrot.slane %v2825, 2
      %v2827 = vmax.f32 %v2825, %v2826
      %v2828 = vrot.slane %v2827, 1
      %v2829 = vmax.f32 %v2827, %v2828
      %v2830 = vsel %vm2812, %v2684, -inf
      %v2831 = vsel %vm2812, %v2687, -inf
      %v2832 = vmax.f32 %v2830, %v2831
      %v2833 = vsel %vm2812, %v2690, -inf
      %v2834 = vmax.f32 %v2832, %v2833
      %v2835 = vsel %vm2812, %v2693, -inf
      %v2836 = vmax.f32 %v2834, %v2835
      %v2837 = vsel %vm2812, %v2696, -inf
      %v2838 = vmax.f32 %v2836, %v2837
      %v2839 = vsel %vm2812, %v2699, -inf
      %v2840 = vmax.f32 %v2838, %v2839
      %v2841 = vrot.slane %v2840, 4
      %v2842 = vmax.f32 %v2840, %v2841
      %v2843 = vrot.slane %v2842, 2
      %v2844 = vmax.f32 %v2842, %v2843
      %v2845 = vrot.slane %v2844, 1
      %v2846 = vmax.f32 %v2844, %v2845
      %v2847 = vsel %vm2812, %v2702, -inf
      %v2848 = vsel %vm2812, %v2705, -inf
      %v2849 = vmax.f32 %v2847, %v2848
      %v2850 = vsel %vm2812, %v2708, -inf
      %v2851 = vmax.f32 %v2849, %v2850
      %v2852 = vsel %vm2812, %v2711, -inf
      %v2853 = vmax.f32 %v2851, %v2852
      %v2854 = vsel %vm2812, %v2714, -inf
      %v2855 = vmax.f32 %v2853, %v2854
      %v2856 = vsel %vm2812, %v2717, -inf
      %v2857 = vmax.f32 %v2855, %v2856
      %v2858 = vrot.slane %v2857, 4
      %v2859 = vmax.f32 %v2857, %v2858
      %v2860 = vrot.slane %v2859, 2
      %v2861 = vmax.f32 %v2859, %v2860
      %v2862 = vrot.slane %v2861, 1
      %v2863 = vmax.f32 %v2861, %v2862
      %v2864 = vsel %vm2812, %v2720, -inf
      %v2865 = vsel %vm2812, %v2723, -inf
      %v2866 = vmax.f32 %v2864, %v2865
      %v2867 = vsel %vm2812, %v2726, -inf
      %v2868 = vmax.f32 %v2866, %v2867
      %v2869 = vsel %vm2812, %v2729, -inf
      %v2870 = vmax.f32 %v2868, %v2869
      %v2871 = vsel %vm2812, %v2732, -inf
      %v2872 = vmax.f32 %v2870, %v2871
      %v2873 = vsel %vm2812, %v2735, -inf
      %v2874 = vmax.f32 %v2872, %v2873
      %v2875 = vrot.slane %v2874, 4
      %v2876 = vmax.f32 %v2874, %v2875
      %v2877 = vrot.slane %v2876, 2
      %v2878 = vmax.f32 %v2876, %v2877
      %v2879 = vrot.slane %v2878, 1
      %v2880 = vmax.f32 %v2878, %v2879
      %v2881 = vsel %vm2812, %v2738, -inf
      %v2882 = vsel %vm2812, %v2741, -inf
      %v2883 = vmax.f32 %v2881, %v2882
      %v2884 = vsel %vm2812, %v2744, -inf
      %v2885 = vmax.f32 %v2883, %v2884
      %v2886 = vsel %vm2812, %v2747, -inf
      %v2887 = vmax.f32 %v2885, %v2886
      %v2888 = vsel %vm2812, %v2750, -inf
      %v2889 = vmax.f32 %v2887, %v2888
      %v2890 = vsel %vm2812, %v2753, -inf
      %v2891 = vmax.f32 %v2889, %v2890
      %v2892 = vrot.slane %v2891, 4
      %v2893 = vmax.f32 %v2891, %v2892
      %v2894 = vrot.slane %v2893, 2
      %v2895 = vmax.f32 %v2893, %v2894
      %v2896 = vrot.slane %v2895, 1
      %v2897 = vmax.f32 %v2895, %v2896
      %v2898 = vsel %vm2812, %v2756, -inf
      %v2899 = vsel %vm2812, %v2759, -inf
      %v2900 = vmax.f32 %v2898, %v2899
      %v2901 = vsel %vm2812, %v2762, -inf
      %v2902 = vmax.f32 %v2900, %v2901
      %v2903 = vsel %vm2812, %v2765, -inf
      %v2904 = vmax.f32 %v2902, %v2903
      %v2905 = vsel %vm2812, %v2768, -inf
      %v2906 = vmax.f32 %v2904, %v2905
      %v2907 = vsel %vm2812, %v2771, -inf
      %v2908 = vmax.f32 %v2906, %v2907
      %v2909 = vrot.slane %v2908, 4
      %v2910 = vmax.f32 %v2908, %v2909
      %v2911 = vrot.slane %v2910, 2
      %v2912 = vmax.f32 %v2910, %v2911
      %v2913 = vrot.slane %v2912, 1
      %v2914 = vmax.f32 %v2912, %v2913
      %v2915 = vsel %vm2812, %v2774, -inf
      %v2916 = vsel %vm2812, %v2777, -inf
      %v2917 = vmax.f32 %v2915, %v2916
      %v2918 = vsel %vm2812, %v2780, -inf
      %v2919 = vmax.f32 %v2917, %v2918
      %v2920 = vsel %vm2812, %v2783, -inf
      %v2921 = vmax.f32 %v2919, %v2920
      %v2922 = vsel %vm2812, %v2786, -inf
      %v2923 = vmax.f32 %v2921, %v2922
      %v2924 = vsel %vm2812, %v2789, -inf
      %v2925 = vmax.f32 %v2923, %v2924
      %v2926 = vrot.slane %v2925, 4
      %v2927 = vmax.f32 %v2925, %v2926
      %v2928 = vrot.slane %v2927, 2
      %v2929 = vmax.f32 %v2927, %v2928
      %v2930 = vrot.slane %v2929, 1
      %v2931 = vmax.f32 %v2929, %v2930
      %v2932 = vsel %vm2812, %v2792, -inf
      %v2933 = vsel %vm2812, %v2795, -inf
      %v2934 = vmax.f32 %v2932, %v2933
      %v2935 = vsel %vm2812, %v2798, -inf
      %v2936 = vmax.f32 %v2934, %v2935
      %v2937 = vsel %vm2812, %v2801, -inf
      %v2938 = vmax.f32 %v2936, %v2937
      %v2939 = vsel %vm2812, %v2804, -inf
      %v2940 = vmax.f32 %v2938, %v2939
      %v2941 = vsel %vm2812, %v2807, -inf
      %v2942 = vmax.f32 %v2940, %v2941
      %v2943 = vrot.slane %v2942, 4
      %v2944 = vmax.f32 %v2942, %v2943
      %v2945 = vrot.slane %v2944, 2
      %v2946 = vmax.f32 %v2944, %v2945
      %v2947 = vrot.slane %v2946, 1
      %v2948 = vmax.f32 %v2946, %v2947
      %v2949 = vperm.slane %v2809, 0
      %v2950 = vmax.f32 %v2829, %v2949
      %v2951 = vmax.f32 %v2846, %v2949
      %v2952 = vmax.f32 %v2863, %v2949
      %v2953 = vmax.f32 %v2880, %v2949
      %v2954 = vmax.f32 %v2897, %v2949
      %v2955 = vmax.f32 %v2914, %v2949
      %v2956 = vmax.f32 %v2931, %v2949
      %v2957 = vmax.f32 %v2948, %v2949
      %v2958 = vperm.slane %v2950, 0
      %v2959 = vperm.slane %v2951, 0
      %v2960 = vperm.slane %v2952, 0
      %v2961 = vperm.slane %v2953, 0
      %v2962 = vperm.slane %v2954, 0
      %v2963 = vperm.slane %v2955, 0
      %v2964 = vperm.slane %v2956, 0
      %v2965 = vperm.slane %v2957, 0
      %v2966 = vsub.f32 %v2666, %v2958
      %v2967 = vsub.f32 %v2669, %v2958
      %v2968 = vsub.f32 %v2672, %v2958
      %v2969 = vsub.f32 %v2675, %v2958
      %v2970 = vsub.f32 %v2678, %v2958
      %v2971 = vsub.f32 %v2681, %v2958
      %v2972 = vsub.f32 %v2684, %v2959
      %v2973 = vsub.f32 %v2687, %v2959
      %v2974 = vsub.f32 %v2690, %v2959
      %v2975 = vsub.f32 %v2693, %v2959
      %v2976 = vsub.f32 %v2696, %v2959
      %v2977 = vsub.f32 %v2699, %v2959
      %v2978 = vsub.f32 %v2702, %v2960
      %v2979 = vsub.f32 %v2705, %v2960
      %v2980 = vsub.f32 %v2708, %v2960
      %v2981 = vsub.f32 %v2711, %v2960
      %v2982 = vsub.f32 %v2714, %v2960
      %v2983 = vsub.f32 %v2717, %v2960
      %v2984 = vsub.f32 %v2720, %v2961
      %v2985 = vsub.f32 %v2723, %v2961
      %v2986 = vsub.f32 %v2726, %v2961
      %v2987 = vsub.f32 %v2729, %v2961
      %v2988 = vsub.f32 %v2732, %v2961
      %v2989 = vsub.f32 %v2735, %v2961
      %v2990 = vsub.f32 %v2738, %v2962
      %v2991 = vsub.f32 %v2741, %v2962
      %v2992 = vsub.f32 %v2744, %v2962
      %v2993 = vsub.f32 %v2747, %v2962
      %v2994 = vsub.f32 %v2750, %v2962
      %v2995 = vsub.f32 %v2753, %v2962
      %v2996 = vsub.f32 %v2756, %v2963
      %v2997 = vsub.f32 %v2759, %v2963
      %v2998 = vsub.f32 %v2762, %v2963
      %v2999 = vsub.f32 %v2765, %v2963
      %v3000 = vsub.f32 %v2768, %v2963
      %v3001 = vsub.f32 %v2771, %v2963
      %v3002 = vsub.f32 %v2774, %v2964
      %v3003 = vsub.f32 %v2777, %v2964
      %v3004 = vsub.f32 %v2780, %v2964
      %v3005 = vsub.f32 %v2783, %v2964
      %v3006 = vsub.f32 %v2786, %v2964
      %v3007 = vsub.f32 %v2789, %v2964
      %v3008 = vsub.f32 %v2792, %v2965
      %v3009 = vsub.f32 %v2795, %v2965
      %v3010 = vsub.f32 %v2798, %v2965
      %v3011 = vsub.f32 %v2801, %v2965
      %v3012 = vsub.f32 %v2804, %v2965
      %v3013 = vsub.f32 %v2807, %v2965
      %v3014 = vmul.f32 %v2966, 1.442695
      %v3015 = vpow.pop %v3014
      %v3016 = vmul.f32 %v2967, 1.442695
      %v3017 = vpow.pop %v3016
      %v3018 = vmul.f32 %v2968, 1.442695
      %v3019 = vpow.pop %v3018
      %v3020 = vmul.f32 %v2969, 1.442695
      %v3021 = vpow.pop %v3020
      %v3022 = vmul.f32 %v2970, 1.442695
      %v3023 = vpow.pop %v3022
      %v3024 = vmul.f32 %v2971, 1.442695
      %v3025 = vpow.pop %v3024
      %v3026 = vmul.f32 %v2972, 1.442695
      %v3027 = vpow.pop %v3026
      %v3028 = vmul.f32 %v2973, 1.442695
      %v3029 = vpow.pop %v3028
      %v3030 = vmul.f32 %v2974, 1.442695
      %v3031 = vpow.pop %v3030
      %v3032 = vmul.f32 %v2975, 1.442695
      %v3033 = vpow.pop %v3032
      %v3034 = vmul.f32 %v2976, 1.442695
      %v3035 = vpow.pop %v3034
      %v3036 = vmul.f32 %v2977, 1.442695
      %v3037 = vpow.pop %v3036
      %v3038 = vmul.f32 %v2978, 1.442695
      %v3039 = vpow.pop %v3038
      %v3040 = vmul.f32 %v2979, 1.442695
      %v3041 = vpow.pop %v3040
      %v3042 = vmul.f32 %v2980, 1.442695
      %v3043 = vpow.pop %v3042
      %v3044 = vmul.f32 %v2981, 1.442695
      %v3045 = vpow.pop %v3044
      %v3046 = vmul.f32 %v2982, 1.442695
      %v3047 = vpow.pop %v3046
      %v3048 = vmul.f32 %v2983, 1.442695
      %v3049 = vpow.pop %v3048
      %v3050 = vmul.f32 %v2984, 1.442695
      %v3051 = vpow.pop %v3050
      %v3052 = vmul.f32 %v2985, 1.442695
      %v3053 = vpow.pop %v3052
      %v3054 = vmul.f32 %v2986, 1.442695
      %v3055 = vpow.pop %v3054
      %v3056 = vmul.f32 %v2987, 1.442695
      %v3057 = vpow.pop %v3056
      %v3058 = vmul.f32 %v2988, 1.442695
      %v3059 = vpow.pop %v3058
      %v3060 = vmul.f32 %v2989, 1.442695
      %v3061 = vpow.pop %v3060
      %v3062 = vmul.f32 %v2990, 1.442695
      %v3063 = vpow.pop %v3062
      %v3064 = vmul.f32 %v2991, 1.442695
      %v3065 = vpow.pop %v3064
      %v3066 = vmul.f32 %v2992, 1.442695
      %v3067 = vpow.pop %v3066
      %v3068 = vmul.f32 %v2993, 1.442695
      %v3069 = vpow.pop %v3068
      %v3070 = vmul.f32 %v2994, 1.442695
      %v3071 = vpow.pop %v3070
      %v3072 = vmul.f32 %v2995, 1.442695
      %v3073 = vpow.pop %v3072
      %v3074 = vmul.f32 %v2996, 1.442695
      %v3075 = vpow.pop %v3074
      %v3076 = vmul.f32 %v2997, 1.442695
      %v3077 = vpow.pop %v3076
      %v3078 = vmul.f32 %v2998, 1.442695
      %v3079 = vpow.pop %v3078
      %v3080 = vmul.f32 %v2999, 1.442695
      %v3081 = vpow.pop %v3080
      %v3082 = vmul.f32 %v3000, 1.442695
      %v3083 = vpow.pop %v3082
      %v3084 = vmul.f32 %v3001, 1.442695
      %v3085 = vpow.pop %v3084
      %v3086 = vmul.f32 %v3002, 1.442695
      %v3087 = vpow.pop %v3086
      %v3088 = vmul.f32 %v3003, 1.442695
      %v3089 = vpow.pop %v3088
      %v3090 = vmul.f32 %v3004, 1.442695
      %v3091 = vpow.pop %v3090
      %v3092 = vmul.f32 %v3005, 1.442695
      %v3093 = vpow.pop %v3092
      %v3094 = vmul.f32 %v3006, 1.442695
      %v3095 = vpow.pop %v3094
      %v3096 = vmul.f32 %v3007, 1.442695
      %v3097 = vpow.pop %v3096
      %v3098 = vmul.f32 %v3008, 1.442695
      %v3099 = vpow.pop %v3098
      %v3100 = vmul.f32 %v3009, 1.442695
      %v3101 = vpow.pop %v3100
      %v3102 = vmul.f32 %v3010, 1.442695
      %v3103 = vpow.pop %v3102
      %v3104 = vmul.f32 %v3011, 1.442695
      %v3105 = vpow.pop %v3104
      %v3106 = vmul.f32 %v3012, 1.442695
      %v3107 = vpow.pop %v3106
      %v3108 = vmul.f32 %v3013, 1.442695
      %v3109 = vpow.pop %v3108
      %v3118 = vrot.slane %v2951, 7
      %vm3119 = vcmask 1041409
      %v3120 = vsel %vm3119, %v3118, %v2950
      %v3121 = vrot.slane %v2952, 6
      %vm3122 = vcmask 1042434
      %v3123 = vsel %vm3122, %v3121, %v3120
      %v3124 = vrot.slane %v2953, 5
      %vm3125 = vcmask 1043459
      %v3126 = vsel %vm3125, %v3124, %v3123
      %v3127 = vrot.slane %v2954, 4
      %vm3128 = vcmask 1044484
      %v3129 = vsel %vm3128, %v3127, %v3126
      %v3130 = vrot.slane %v2955, 3
      %vm3131 = vcmask 1045509
      %v3132 = vsel %vm3131, %v3130, %v3129
      %v3133 = vrot.slane %v2956, 2
      %vm3134 = vcmask 1046534
      %v3135 = vsel %vm3134, %v3133, %v3132
      %v3136 = vrot.slane %v2957, 1
      %vm3137 = vcmask 1047559
      %v3138 = vsel %vm3137, %v3136, %v3135
      %v3140 = vsub.f32 %v2949, %v3138
      %v3141 = vmul.f32 %v3140, 1.442695
      %v3142 = vpow.pop %v3141
      %v3143 = vsel %vm2812, %v3015, 0.0
      %v3144 = vsel %vm2812, %v3017, 0.0
      %v3145 = vadd.f32 %v3143, %v3144
      %v3146 = vsel %vm2812, %v3019, 0.0
      %v3147 = vadd.f32 %v3145, %v3146
      %v3148 = vsel %vm2812, %v3021, 0.0
      %v3149 = vadd.f32 %v3147, %v3148
      %v3150 = vsel %vm2812, %v3023, 0.0
      %v3151 = vadd.f32 %v3149, %v3150
      %v3152 = vsel %vm2812, %v3025, 0.0
      %v3153 = vadd.f32 %v3151, %v3152
      %v3154 = vrot.slane %v3153, 4
      %v3155 = vadd.f32 %v3153, %v3154
      %v3156 = vrot.slane %v3155, 2
      %v3157 = vadd.f32 %v3155, %v3156
      %v3158 = vrot.slane %v3157, 1
      %v3159 = vadd.f32 %v3157, %v3158
      %v3160 = vsel %vm2812, %v3027, 0.0
      %v3161 = vsel %vm2812, %v3029, 0.0
      %v3162 = vadd.f32 %v3160, %v3161
      %v3163 = vsel %vm2812, %v3031, 0.0
      %v3164 = vadd.f32 %v3162, %v3163
      %v3165 = vsel %vm2812, %v3033, 0.0
      %v3166 = vadd.f32 %v3164, %v3165
      %v3167 = vsel %vm2812, %v3035, 0.0
      %v3168 = vadd.f32 %v3166, %v3167
      %v3169 = vsel %vm2812, %v3037, 0.0
      %v3170 = vadd.f32 %v3168, %v3169
      %v3171 = vrot.slane %v3170, 4
      %v3172 = vadd.f32 %v3170, %v3171
      %v3173 = vrot.slane %v3172, 2
      %v3174 = vadd.f32 %v3172, %v3173
      %v3175 = vrot.slane %v3174, 1
      %v3176 = vadd.f32 %v3174, %v3175
      %v3177 = vsel %vm2812, %v3039, 0.0
      %v3178 = vsel %vm2812, %v3041, 0.0
      %v3179 = vadd.f32 %v3177, %v3178
      %v3180 = vsel %vm2812, %v3043, 0.0
      %v3181 = vadd.f32 %v3179, %v3180
      %v3182 = vsel %vm2812, %v3045, 0.0
      %v3183 = vadd.f32 %v3181, %v3182
      %v3184 = vsel %vm2812, %v3047, 0.0
      %v3185 = vadd.f32 %v3183, %v3184
      %v3186 = vsel %vm2812, %v3049, 0.0
      %v3187 = vadd.f32 %v3185, %v3186
      %v3188 = vrot.slane %v3187, 4
      %v3189 = vadd.f32 %v3187, %v3188
      %v3190 = vrot.slane %v3189, 2
      %v3191 = vadd.f32 %v3189, %v3190
      %v3192 = vrot.slane %v3191, 1
      %v3193 = vadd.f32 %v3191, %v3192
      %v3194 = vsel %vm2812, %v3051, 0.0
      %v3195 = vsel %vm2812, %v3053, 0.0
      %v3196 = vadd.f32 %v3194, %v3195
      %v3197 = vsel %vm2812, %v3055, 0.0
      %v3198 = vadd.f32 %v3196, %v3197
      %v3199 = vsel %vm2812, %v3057, 0.0
      %v3200 = vadd.f32 %v3198, %v3199
      %v3201 = vsel %vm2812, %v3059, 0.0
      %v3202 = vadd.f32 %v3200, %v3201
      %v3203 = vsel %vm2812, %v3061, 0.0
      %v3204 = vadd.f32 %v3202, %v3203
      %v3205 = vrot.slane %v3204, 4
      %v3206 = vadd.f32 %v3204, %v3205
      %v3207 = vrot.slane %v3206, 2
      %v3208 = vadd.f32 %v3206, %v3207
      %v3209 = vrot.slane %v3208, 1
      %v3210 = vadd.f32 %v3208, %v3209
      %v3211 = vsel %vm2812, %v3063, 0.0
      %v3212 = vsel %vm2812, %v3065, 0.0
      %v3213 = vadd.f32 %v3211, %v3212
      %v3214 = vsel %vm2812, %v3067, 0.0
      %v3215 = vadd.f32 %v3213, %v3214
      %v3216 = vsel %vm2812, %v3069, 0.0
      %v3217 = vadd.f32 %v3215, %v3216
      %v3218 = vsel %vm2812, %v3071, 0.0
      %v3219 = vadd.f32 %v3217, %v3218
      %v3220 = vsel %vm2812, %v3073, 0.0
      %v3221 = vadd.f32 %v3219, %v3220
      %v3222 = vrot.slane %v3221, 4
      %v3223 = vadd.f32 %v3221, %v3222
      %v3224 = vrot.slane %v3223, 2
      %v3225 = vadd.f32 %v3223, %v3224
      %v3226 = vrot.slane %v3225, 1
      %v3227 = vadd.f32 %v3225, %v3226
      %v3228 = vsel %vm2812, %v3075, 0.0
      %v3229 = vsel %vm2812, %v3077, 0.0
      %v3230 = vadd.f32 %v3228, %v3229
      %v3231 = vsel %vm2812, %v3079, 0.0
      %v3232 = vadd.f32 %v3230, %v3231
      %v3233 = vsel %vm2812, %v3081, 0.0
      %v3234 = vadd.f32 %v3232, %v3233
      %v3235 = vsel %vm2812, %v3083, 0.0
      %v3236 = vadd.f32 %v3234, %v3235
      %v3237 = vsel %vm2812, %v3085, 0.0
      %v3238 = vadd.f32 %v3236, %v3237
      %v3239 = vrot.slane %v3238, 4
      %v3240 = vadd.f32 %v3238, %v3239
      %v3241 = vrot.slane %v3240, 2
      %v3242 = vadd.f32 %v3240, %v3241
      %v3243 = vrot.slane %v3242, 1
      %v3244 = vadd.f32 %v3242, %v3243
      %v3245 = vsel %vm2812, %v3087, 0.0
      %v3246 = vsel %vm2812, %v3089, 0.0
      %v3247 = vadd.f32 %v3245, %v3246
      %v3248 = vsel %vm2812, %v3091, 0.0
      %v3249 = vadd.f32 %v3247, %v3248
      %v3250 = vsel %vm2812, %v3093, 0.0
      %v3251 = vadd.f32 %v3249, %v3250
      %v3252 = vsel %vm2812, %v3095, 0.0
      %v3253 = vadd.f32 %v3251, %v3252
      %v3254 = vsel %vm2812, %v3097, 0.0
      %v3255 = vadd.f32 %v3253, %v3254
      %v3256 = vrot.slane %v3255, 4
      %v3257 = vadd.f32 %v3255, %v3256
      %v3258 = vrot.slane %v3257, 2
      %v3259 = vadd.f32 %v3257, %v3258
      %v3260 = vrot.slane %v3259, 1
      %v3261 = vadd.f32 %v3259, %v3260
      %v3262 = vsel %vm2812, %v3099, 0.0
      %v3263 = vsel %vm2812, %v3101, 0.0
      %v3264 = vadd.f32 %v3262, %v3263
      %v3265 = vsel %vm2812, %v3103, 0.0
      %v3266 = vadd.f32 %v3264, %v3265
      %v3267 = vsel %vm2812, %v3105, 0.0
      %v3268 = vadd.f32 %v3266, %v3267
      %v3269 = vsel %vm2812, %v3107, 0.0
      %v3270 = vadd.f32 %v3268, %v3269
      %v3271 = vsel %vm2812, %v3109, 0.0
      %v3272 = vadd.f32 %v3270, %v3271
      %v3273 = vrot.slane %v3272, 4
      %v3274 = vadd.f32 %v3272, %v3273
      %v3275 = vrot.slane %v3274, 2
      %v3276 = vadd.f32 %v3274, %v3275
      %v3277 = vrot.slane %v3276, 1
      %v3278 = vadd.f32 %v3276, %v3277
      %v3279 = vperm.slane %v2810, 0
      %v3280 = vmul.f32 %v3142, %v3279
      %v3282 = vrot.slane %v3280, 1
      %v3283 = vrot.slane %v3280, 2
      %v3284 = vrot.slane %v3280, 3
      %v3285 = vrot.slane %v3280, 4
      %v3286 = vrot.slane %v3280, 5
      %v3287 = vrot.slane %v3280, 6
      %v3288 = vrot.slane %v3280, 7
      %v3297 = vadd.f32 %v3159, %v3280
      %v3298 = vadd.f32 %v3176, %v3282
      %v3299 = vadd.f32 %v3193, %v3283
      %v3300 = vadd.f32 %v3210, %v3284
      %v3301 = vadd.f32 %v3227, %v3285
      %v3302 = vadd.f32 %v3244, %v3286
      %v3303 = vadd.f32 %v3261, %v3287
      %v3304 = vadd.f32 %v3278, %v3288
      %3306 = vset.pattern.permute.xlu0 0
      %3307 = vperm.xlu0 %3306, %v3015
      %v3308 = vpop.permute.xlu0 %3307
      %3311 = vset.pattern.permute.xlu0 0
      %3312 = vperm.xlu0 %3311, %v3017
      %v3313 = vpop.permute.xlu0 %3312
      %3316 = vset.pattern.permute.xlu0 0
      %3317 = vperm.xlu0 %3316, %v3019
      %v3318 = vpop.permute.xlu0 %3317
      %3321 = vset.pattern.permute.xlu0 0
      %3322 = vperm.xlu0 %3321, %v3021
      %v3323 = vpop.permute.xlu0 %3322
      %3326 = vset.pattern.permute.xlu0 0
      %3327 = vperm.xlu0 %3326, %v3023
      %v3328 = vpop.permute.xlu0 %3327
      %3331 = vset.pattern.permute.xlu0 0
      %3332 = vperm.xlu0 %3331, %v3025
      %v3333 = vpop.permute.xlu0 %3332
      %3336 = vset.pattern.permute.xlu0 0
      %3337 = vperm.xlu0 %3336, %v3027
      %v3338 = vpop.permute.xlu0 %3337
      %3341 = vset.pattern.permute.xlu0 0
      %3342 = vperm.xlu0 %3341, %v3029
      %v3343 = vpop.permute.xlu0 %3342
      %3346 = vset.pattern.permute.xlu0 0
      %3347 = vperm.xlu0 %3346, %v3031
      %v3348 = vpop.permute.xlu0 %3347
      %3351 = vset.pattern.permute.xlu0 0
      %3352 = vperm.xlu0 %3351, %v3033
      %v3353 = vpop.permute.xlu0 %3352
      %3356 = vset.pattern.permute.xlu0 0
      %3357 = vperm.xlu0 %3356, %v3035
      %v3358 = vpop.permute.xlu0 %3357
      %3361 = vset.pattern.permute.xlu0 0
      %3362 = vperm.xlu0 %3361, %v3037
      %v3363 = vpop.permute.xlu0 %3362
      %3366 = vset.pattern.permute.xlu0 0
      %3367 = vperm.xlu0 %3366, %v3039
      %v3368 = vpop.permute.xlu0 %3367
      %3371 = vset.pattern.permute.xlu0 0
      %3372 = vperm.xlu0 %3371, %v3041
      %v3373 = vpop.permute.xlu0 %3372
      %3376 = vset.pattern.permute.xlu0 0
      %3377 = vperm.xlu0 %3376, %v3043
      %v3378 = vpop.permute.xlu0 %3377
      %3381 = vset.pattern.permute.xlu0 0
      %3382 = vperm.xlu0 %3381, %v3045
      %v3383 = vpop.permute.xlu0 %3382
      %3386 = vset.pattern.permute.xlu0 0
      %3387 = vperm.xlu0 %3386, %v3047
      %v3388 = vpop.permute.xlu0 %3387
      %3391 = vset.pattern.permute.xlu0 0
      %3392 = vperm.xlu0 %3391, %v3049
      %v3393 = vpop.permute.xlu0 %3392
      %3396 = vset.pattern.permute.xlu0 0
      %3397 = vperm.xlu0 %3396, %v3051
      %v3398 = vpop.permute.xlu0 %3397
      %3401 = vset.pattern.permute.xlu0 0
      %3402 = vperm.xlu0 %3401, %v3053
      %v3403 = vpop.permute.xlu0 %3402
      %3406 = vset.pattern.permute.xlu0 0
      %3407 = vperm.xlu0 %3406, %v3055
      %v3408 = vpop.permute.xlu0 %3407
      %3411 = vset.pattern.permute.xlu0 0
      %3412 = vperm.xlu0 %3411, %v3057
      %v3413 = vpop.permute.xlu0 %3412
      %3416 = vset.pattern.permute.xlu0 0
      %3417 = vperm.xlu0 %3416, %v3059
      %v3418 = vpop.permute.xlu0 %3417
      %3421 = vset.pattern.permute.xlu0 0
      %3422 = vperm.xlu0 %3421, %v3061
      %v3423 = vpop.permute.xlu0 %3422
      %3426 = vset.pattern.permute.xlu0 0
      %3427 = vperm.xlu0 %3426, %v3063
      %v3428 = vpop.permute.xlu0 %3427
      %3431 = vset.pattern.permute.xlu0 0
      %3432 = vperm.xlu0 %3431, %v3065
      %v3433 = vpop.permute.xlu0 %3432
      %3436 = vset.pattern.permute.xlu0 0
      %3437 = vperm.xlu0 %3436, %v3067
      %v3438 = vpop.permute.xlu0 %3437
      %3441 = vset.pattern.permute.xlu0 0
      %3442 = vperm.xlu0 %3441, %v3069
      %v3443 = vpop.permute.xlu0 %3442
      %3446 = vset.pattern.permute.xlu0 0
      %3447 = vperm.xlu0 %3446, %v3071
      %v3448 = vpop.permute.xlu0 %3447
      %3451 = vset.pattern.permute.xlu0 0
      %3452 = vperm.xlu0 %3451, %v3073
      %v3453 = vpop.permute.xlu0 %3452
      %3456 = vset.pattern.permute.xlu0 0
      %3457 = vperm.xlu0 %3456, %v3075
      %v3458 = vpop.permute.xlu0 %3457
      %3461 = vset.pattern.permute.xlu0 0
      %3462 = vperm.xlu0 %3461, %v3077
      %v3463 = vpop.permute.xlu0 %3462
      %3466 = vset.pattern.permute.xlu0 0
      %3467 = vperm.xlu0 %3466, %v3079
      %v3468 = vpop.permute.xlu0 %3467
      %3471 = vset.pattern.permute.xlu0 0
      %3472 = vperm.xlu0 %3471, %v3081
      %v3473 = vpop.permute.xlu0 %3472
      %3476 = vset.pattern.permute.xlu0 0
      %3477 = vperm.xlu0 %3476, %v3083
      %v3478 = vpop.permute.xlu0 %3477
      %3481 = vset.pattern.permute.xlu0 0
      %3482 = vperm.xlu0 %3481, %v3085
      %v3483 = vpop.permute.xlu0 %3482
      %3486 = vset.pattern.permute.xlu0 0
      %3487 = vperm.xlu0 %3486, %v3087
      %v3488 = vpop.permute.xlu0 %3487
      %3491 = vset.pattern.permute.xlu0 0
      %3492 = vperm.xlu0 %3491, %v3089
      %v3493 = vpop.permute.xlu0 %3492
      %3496 = vset.pattern.permute.xlu0 0
      %3497 = vperm.xlu0 %3496, %v3091
      %v3498 = vpop.permute.xlu0 %3497
      %3501 = vset.pattern.permute.xlu0 0
      %3502 = vperm.xlu0 %3501, %v3093
      %v3503 = vpop.permute.xlu0 %3502
      %3506 = vset.pattern.permute.xlu0 0
      %3507 = vperm.xlu0 %3506, %v3095
      %v3508 = vpop.permute.xlu0 %3507
      %3511 = vset.pattern.permute.xlu0 0
      %3512 = vperm.xlu0 %3511, %v3097
      %v3513 = vpop.permute.xlu0 %3512
      %3516 = vset.pattern.permute.xlu0 0
      %3517 = vperm.xlu0 %3516, %v3099
      %v3518 = vpop.permute.xlu0 %3517
      %3521 = vset.pattern.permute.xlu0 0
      %3522 = vperm.xlu0 %3521, %v3101
      %v3523 = vpop.permute.xlu0 %3522
      %3526 = vset.pattern.permute.xlu0 0
      %3527 = vperm.xlu0 %3526, %v3103
      %v3528 = vpop.permute.xlu0 %3527
      %3531 = vset.pattern.permute.xlu0 0
      %3532 = vperm.xlu0 %3531, %v3105
      %v3533 = vpop.permute.xlu0 %3532
      %3536 = vset.pattern.permute.xlu0 0
      %3537 = vperm.xlu0 %3536, %v3107
      %v3538 = vpop.permute.xlu0 %3537
      %3541 = vset.pattern.permute.xlu0 0
      %3542 = vperm.xlu0 %3541, %v3109
      %v3543 = vpop.permute.xlu0 %3542
      %v3545 = vmul.f32 %v3308, %v2666
      %v3546 = vmul.f32 %v3313, %v2669
      %v3547 = vmul.f32 %v3318, %v2672
      %v3548 = vmul.f32 %v3323, %v2675
      %v3549 = vmul.f32 %v3328, %v2678
      %v3550 = vmul.f32 %v3333, %v2681
      %v3551 = vmul.f32 %v3338, %v2684
      %v3552 = vmul.f32 %v3343, %v2687
      %v3553 = vmul.f32 %v3348, %v2690
      %v3554 = vmul.f32 %v3353, %v2693
      %v3555 = vmul.f32 %v3358, %v2696
      %v3556 = vmul.f32 %v3363, %v2699
      %v3557 = vmul.f32 %v3368, %v2702
      %v3558 = vmul.f32 %v3373, %v2705
      %v3559 = vmul.f32 %v3378, %v2708
      %v3560 = vmul.f32 %v3383, %v2711
      %v3561 = vmul.f32 %v3388, %v2714
      %v3562 = vmul.f32 %v3393, %v2717
      %v3563 = vmul.f32 %v3398, %v2720
      %v3564 = vmul.f32 %v3403, %v2723
      %v3565 = vmul.f32 %v3408, %v2726
      %v3566 = vmul.f32 %v3413, %v2729
      %v3567 = vmul.f32 %v3418, %v2732
      %v3568 = vmul.f32 %v3423, %v2735
      %v3569 = vmul.f32 %v3428, %v2738
      %v3570 = vmul.f32 %v3433, %v2741
      %v3571 = vmul.f32 %v3438, %v2744
      %v3572 = vmul.f32 %v3443, %v2747
      %v3573 = vmul.f32 %v3448, %v2750
      %v3574 = vmul.f32 %v3453, %v2753
      %v3575 = vmul.f32 %v3458, %v2756
      %v3576 = vmul.f32 %v3463, %v2759
      %v3577 = vmul.f32 %v3468, %v2762
      %v3578 = vmul.f32 %v3473, %v2765
      %v3579 = vmul.f32 %v3478, %v2768
      %v3580 = vmul.f32 %v3483, %v2771
      %v3581 = vmul.f32 %v3488, %v2774
      %v3582 = vmul.f32 %v3493, %v2777
      %v3583 = vmul.f32 %v3498, %v2780
      %v3584 = vmul.f32 %v3503, %v2783
      %v3585 = vmul.f32 %v3508, %v2786
      %v3586 = vmul.f32 %v3513, %v2789
      %v3587 = vmul.f32 %v3518, %v2792
      %v3588 = vmul.f32 %v3523, %v2795
      %v3589 = vmul.f32 %v3528, %v2798
      %v3590 = vmul.f32 %v3533, %v2801
      %v3591 = vmul.f32 %v3538, %v2804
      %v3592 = vmul.f32 %v3543, %v2807
      %vm3593 = vcmask 547840
      %v3594 = vsel %vm3593, %v3545, 0.0
      %v3595 = vsel %vm3593, %v3546, 0.0
      %v3596 = vadd.f32 %v3594, %v3595
      %v3597 = vsel %vm3593, %v3547, 0.0
      %v3598 = vadd.f32 %v3596, %v3597
      %v3599 = vsel %vm3593, %v3548, 0.0
      %v3600 = vadd.f32 %v3598, %v3599
      %v3601 = vsel %vm3593, %v3549, 0.0
      %v3602 = vadd.f32 %v3600, %v3601
      %v3603 = vsel %vm3593, %v3550, 0.0
      %v3604 = vadd.f32 %v3602, %v3603
      %v3605 = vrot.slane %v3604, 4
      %v3606 = vadd.f32 %v3604, %v3605
      %v3607 = vrot.slane %v3606, 2
      %v3608 = vadd.f32 %v3606, %v3607
      %v3609 = vrot.slane %v3608, 1
      %v3610 = vadd.f32 %v3608, %v3609
      %v3611 = vsel %vm3593, %v3551, 0.0
      %v3612 = vsel %vm3593, %v3552, 0.0
      %v3613 = vadd.f32 %v3611, %v3612
      %v3614 = vsel %vm3593, %v3553, 0.0
      %v3615 = vadd.f32 %v3613, %v3614
      %v3616 = vsel %vm3593, %v3554, 0.0
      %v3617 = vadd.f32 %v3615, %v3616
      %v3618 = vsel %vm3593, %v3555, 0.0
      %v3619 = vadd.f32 %v3617, %v3618
      %v3620 = vsel %vm3593, %v3556, 0.0
      %v3621 = vadd.f32 %v3619, %v3620
      %v3622 = vrot.slane %v3621, 4
      %v3623 = vadd.f32 %v3621, %v3622
      %v3624 = vrot.slane %v3623, 2
      %v3625 = vadd.f32 %v3623, %v3624
      %v3626 = vrot.slane %v3625, 1
      %v3627 = vadd.f32 %v3625, %v3626
      %v3628 = vsel %vm3593, %v3557, 0.0
      %v3629 = vsel %vm3593, %v3558, 0.0
      %v3630 = vadd.f32 %v3628, %v3629
      %v3631 = vsel %vm3593, %v3559, 0.0
      %v3632 = vadd.f32 %v3630, %v3631
      %v3633 = vsel %vm3593, %v3560, 0.0
      %v3634 = vadd.f32 %v3632, %v3633
      %v3635 = vsel %vm3593, %v3561, 0.0
      %v3636 = vadd.f32 %v3634, %v3635
      %v3637 = vsel %vm3593, %v3562, 0.0
      %v3638 = vadd.f32 %v3636, %v3637
      %v3639 = vrot.slane %v3638, 4
      %v3640 = vadd.f32 %v3638, %v3639
      %v3641 = vrot.slane %v3640, 2
      %v3642 = vadd.f32 %v3640, %v3641
      %v3643 = vrot.slane %v3642, 1
      %v3644 = vadd.f32 %v3642, %v3643
      %v3645 = vsel %vm3593, %v3563, 0.0
      %v3646 = vsel %vm3593, %v3564, 0.0
      %v3647 = vadd.f32 %v3645, %v3646
      %v3648 = vsel %vm3593, %v3565, 0.0
      %v3649 = vadd.f32 %v3647, %v3648
      %v3650 = vsel %vm3593, %v3566, 0.0
      %v3651 = vadd.f32 %v3649, %v3650
      %v3652 = vsel %vm3593, %v3567, 0.0
      %v3653 = vadd.f32 %v3651, %v3652
      %v3654 = vsel %vm3593, %v3568, 0.0
      %v3655 = vadd.f32 %v3653, %v3654
      %v3656 = vrot.slane %v3655, 4
      %v3657 = vadd.f32 %v3655, %v3656
      %v3658 = vrot.slane %v3657, 2
      %v3659 = vadd.f32 %v3657, %v3658
      %v3660 = vrot.slane %v3659, 1
      %v3661 = vadd.f32 %v3659, %v3660
      %v3662 = vsel %vm3593, %v3569, 0.0
      %v3663 = vsel %vm3593, %v3570, 0.0
      %v3664 = vadd.f32 %v3662, %v3663
      %v3665 = vsel %vm3593, %v3571, 0.0
      %v3666 = vadd.f32 %v3664, %v3665
      %v3667 = vsel %vm3593, %v3572, 0.0
      %v3668 = vadd.f32 %v3666, %v3667
      %v3669 = vsel %vm3593, %v3573, 0.0
      %v3670 = vadd.f32 %v3668, %v3669
      %v3671 = vsel %vm3593, %v3574, 0.0
      %v3672 = vadd.f32 %v3670, %v3671
      %v3673 = vrot.slane %v3672, 4
      %v3674 = vadd.f32 %v3672, %v3673
      %v3675 = vrot.slane %v3674, 2
      %v3676 = vadd.f32 %v3674, %v3675
      %v3677 = vrot.slane %v3676, 1
      %v3678 = vadd.f32 %v3676, %v3677
      %v3679 = vsel %vm3593, %v3575, 0.0
      %v3680 = vsel %vm3593, %v3576, 0.0
      %v3681 = vadd.f32 %v3679, %v3680
      %v3682 = vsel %vm3593, %v3577, 0.0
      %v3683 = vadd.f32 %v3681, %v3682
      %v3684 = vsel %vm3593, %v3578, 0.0
      %v3685 = vadd.f32 %v3683, %v3684
      %v3686 = vsel %vm3593, %v3579, 0.0
      %v3687 = vadd.f32 %v3685, %v3686
      %v3688 = vsel %vm3593, %v3580, 0.0
      %v3689 = vadd.f32 %v3687, %v3688
      %v3690 = vrot.slane %v3689, 4
      %v3691 = vadd.f32 %v3689, %v3690
      %v3692 = vrot.slane %v3691, 2
      %v3693 = vadd.f32 %v3691, %v3692
      %v3694 = vrot.slane %v3693, 1
      %v3695 = vadd.f32 %v3693, %v3694
      %v3696 = vsel %vm3593, %v3581, 0.0
      %v3697 = vsel %vm3593, %v3582, 0.0
      %v3698 = vadd.f32 %v3696, %v3697
      %v3699 = vsel %vm3593, %v3583, 0.0
      %v3700 = vadd.f32 %v3698, %v3699
      %v3701 = vsel %vm3593, %v3584, 0.0
      %v3702 = vadd.f32 %v3700, %v3701
      %v3703 = vsel %vm3593, %v3585, 0.0
      %v3704 = vadd.f32 %v3702, %v3703
      %v3705 = vsel %vm3593, %v3586, 0.0
      %v3706 = vadd.f32 %v3704, %v3705
      %v3707 = vrot.slane %v3706, 4
      %v3708 = vadd.f32 %v3706, %v3707
      %v3709 = vrot.slane %v3708, 2
      %v3710 = vadd.f32 %v3708, %v3709
      %v3711 = vrot.slane %v3710, 1
      %v3712 = vadd.f32 %v3710, %v3711
      %v3713 = vsel %vm3593, %v3587, 0.0
      %v3714 = vsel %vm3593, %v3588, 0.0
      %v3715 = vadd.f32 %v3713, %v3714
      %v3716 = vsel %vm3593, %v3589, 0.0
      %v3717 = vadd.f32 %v3715, %v3716
      %v3718 = vsel %vm3593, %v3590, 0.0
      %v3719 = vadd.f32 %v3717, %v3718
      %v3720 = vsel %vm3593, %v3591, 0.0
      %v3721 = vadd.f32 %v3719, %v3720
      %v3722 = vsel %vm3593, %v3592, 0.0
      %v3723 = vadd.f32 %v3721, %v3722
      %v3724 = vrot.slane %v3723, 4
      %v3725 = vadd.f32 %v3723, %v3724
      %v3726 = vrot.slane %v3725, 2
      %v3727 = vadd.f32 %v3725, %v3726
      %v3728 = vrot.slane %v3727, 1
      %v3729 = vadd.f32 %v3727, %v3728
      %3731 = vset.pattern.permute.xlu0 0
      %3732 = vperm.xlu0 %3731, %v3142
      %v3733 = vpop.permute.xlu0 %3732
      %v3735 = vperm.slane %v2811, 0
      %v3736 = vmul.f32 %v3733, %v3735
      %v3738 = vrot.slane %v3736, 1
      %v3739 = vrot.slane %v3736, 2
      %v3740 = vrot.slane %v3736, 3
      %v3741 = vrot.slane %v3736, 4
      %v3742 = vrot.slane %v3736, 5
      %v3743 = vrot.slane %v3736, 6
      %v3744 = vrot.slane %v3736, 7
      %3745 = vrot.lane.b32.xlu0 %v3736, 3
      %v3746 = vpop.permute.xlu0 %3745
      %3747 = vrot.lane.b32.xlu0 %v3738, 3
      %v3748 = vpop.permute.xlu0 %3747
      %3749 = vrot.lane.b32.xlu0 %v3739, 3
      %v3750 = vpop.permute.xlu0 %3749
      %3751 = vrot.lane.b32.xlu0 %v3740, 3
      %v3752 = vpop.permute.xlu0 %3751
      %3753 = vrot.lane.b32.xlu0 %v3741, 3
      %v3754 = vpop.permute.xlu0 %3753
      %3755 = vrot.lane.b32.xlu0 %v3742, 3
      %v3756 = vpop.permute.xlu0 %3755
      %3757 = vrot.lane.b32.xlu0 %v3743, 3
      %v3758 = vpop.permute.xlu0 %3757
      %3759 = vrot.lane.b32.xlu0 %v3744, 3
      %v3760 = vpop.permute.xlu0 %3759
      %v3769 = vadd.f32 %v3610, %v3746
      %v3770 = vadd.f32 %v3627, %v3748
      %v3771 = vadd.f32 %v3644, %v3750
      %v3772 = vadd.f32 %v3661, %v3752
      %v3773 = vadd.f32 %v3678, %v3754
      %v3774 = vadd.f32 %v3695, %v3756
      %v3775 = vadd.f32 %v3712, %v3758
      %v3776 = vadd.f32 %v3729, %v3760
      %3778 = vset.pattern.permute.xlu0 0
      %3779 = vperm.xlu0 %3778, %v3297
      %v3780 = vpop.permute.xlu0 %3779
      %3783 = vset.pattern.permute.xlu0 0
      %3784 = vperm.xlu0 %3783, %v3298
      %v3785 = vpop.permute.xlu0 %3784
      %3788 = vset.pattern.permute.xlu0 0
      %3789 = vperm.xlu0 %3788, %v3299
      %v3790 = vpop.permute.xlu0 %3789
      %3793 = vset.pattern.permute.xlu0 0
      %3794 = vperm.xlu0 %3793, %v3300
      %v3795 = vpop.permute.xlu0 %3794
      %3798 = vset.pattern.permute.xlu0 0
      %3799 = vperm.xlu0 %3798, %v3301
      %v3800 = vpop.permute.xlu0 %3799
      %3803 = vset.pattern.permute.xlu0 0
      %3804 = vperm.xlu0 %3803, %v3302
      %v3805 = vpop.permute.xlu0 %3804
      %3808 = vset.pattern.permute.xlu0 0
      %3809 = vperm.xlu0 %3808, %v3303
      %v3810 = vpop.permute.xlu0 %3809
      %3813 = vset.pattern.permute.xlu0 0
      %3814 = vperm.xlu0 %3813, %v3304
      %v3815 = vpop.permute.xlu0 %3814
      %v3817 = vrcp.pop %v3780
      %v3818 = vmul.f32 %v3780, %v3817
      %v3819 = vsub.f32 1.0, %v3818
      %v3820 = vmul.f32 %v3817, %v3819
      %v3821 = vadd.f32 %v3817, %v3820
      %vm3822 = vweird.f32 %v3780
      %vm3823 = vweird.f32 %v3817
      %vm3824 = vmor %vm3822, %vm3823
      %v3825 = vsel %vm3824, %v3817, %v3821
      %v3826 = vand.u32 2147483647, %v3780
      %vm3827 = vcmp.eq.f32.partialorder %v3826, 8.507059e+37
      %v3828 = vand.u32 %v3780, 2147483648
      %v3829 = vor.u32 1.1754944e-38, %v3828
      %v3830 = vsel %vm3827, %v3829, %v3825
      %v3831 = vmul.f32 %v3769, %v3830
      %v3832 = vrcp.pop %v3785
      %v3833 = vmul.f32 %v3785, %v3832
      %v3834 = vsub.f32 1.0, %v3833
      %v3835 = vmul.f32 %v3832, %v3834
      %v3836 = vadd.f32 %v3832, %v3835
      %vm3837 = vweird.f32 %v3785
      %vm3838 = vweird.f32 %v3832
      %vm3839 = vmor %vm3837, %vm3838
      %v3840 = vsel %vm3839, %v3832, %v3836
      %v3841 = vand.u32 2147483647, %v3785
      %vm3842 = vcmp.eq.f32.partialorder %v3841, 8.507059e+37
      %v3843 = vand.u32 %v3785, 2147483648
      %v3844 = vor.u32 1.1754944e-38, %v3843
      %v3845 = vsel %vm3842, %v3844, %v3840
      %v3846 = vmul.f32 %v3770, %v3845
      %v3847 = vrcp.pop %v3790
      %v3848 = vmul.f32 %v3790, %v3847
      %v3849 = vsub.f32 1.0, %v3848
      %v3850 = vmul.f32 %v3847, %v3849
      %v3851 = vadd.f32 %v3847, %v3850
      %vm3852 = vweird.f32 %v3790
      %vm3853 = vweird.f32 %v3847
      %vm3854 = vmor %vm3852, %vm3853
      %v3855 = vsel %vm3854, %v3847, %v3851
      %v3856 = vand.u32 2147483647, %v3790
      %vm3857 = vcmp.eq.f32.partialorder %v3856, 8.507059e+37
      %v3858 = vand.u32 %v3790, 2147483648
      %v3859 = vor.u32 1.1754944e-38, %v3858
      %v3860 = vsel %vm3857, %v3859, %v3855
      %v3861 = vmul.f32 %v3771, %v3860
      %v3862 = vrcp.pop %v3795
      %v3863 = vmul.f32 %v3795, %v3862
      %v3864 = vsub.f32 1.0, %v3863
      %v3865 = vmul.f32 %v3862, %v3864
      %v3866 = vadd.f32 %v3862, %v3865
      %vm3867 = vweird.f32 %v3795
      %vm3868 = vweird.f32 %v3862
      %vm3869 = vmor %vm3867, %vm3868
      %v3870 = vsel %vm3869, %v3862, %v3866
      %v3871 = vand.u32 2147483647, %v3795
      %vm3872 = vcmp.eq.f32.partialorder %v3871, 8.507059e+37
      %v3873 = vand.u32 %v3795, 2147483648
      %v3874 = vor.u32 1.1754944e-38, %v3873
      %v3875 = vsel %vm3872, %v3874, %v3870
      %v3876 = vmul.f32 %v3772, %v3875
      %v3877 = vrcp.pop %v3800
      %v3878 = vmul.f32 %v3800, %v3877
      %v3879 = vsub.f32 1.0, %v3878
      %v3880 = vmul.f32 %v3877, %v3879
      %v3881 = vadd.f32 %v3877, %v3880
      %vm3882 = vweird.f32 %v3800
      %vm3883 = vweird.f32 %v3877
      %vm3884 = vmor %vm3882, %vm3883
      %v3885 = vsel %vm3884, %v3877, %v3881
      %v3886 = vand.u32 2147483647, %v3800
      %vm3887 = vcmp.eq.f32.partialorder %v3886, 8.507059e+37
      %v3888 = vand.u32 %v3800, 2147483648
      %v3889 = vor.u32 1.1754944e-38, %v3888
      %v3890 = vsel %vm3887, %v3889, %v3885
      %v3891 = vmul.f32 %v3773, %v3890
      %v3892 = vrcp.pop %v3805
      %v3893 = vmul.f32 %v3805, %v3892
      %v3894 = vsub.f32 1.0, %v3893
      %v3895 = vmul.f32 %v3892, %v3894
      %v3896 = vadd.f32 %v3892, %v3895
      %vm3897 = vweird.f32 %v3805
      %vm3898 = vweird.f32 %v3892
      %vm3899 = vmor %vm3897, %vm3898
      %v3900 = vsel %vm3899, %v3892, %v3896
      %v3901 = vand.u32 2147483647, %v3805
      %vm3902 = vcmp.eq.f32.partialorder %v3901, 8.507059e+37
      %v3903 = vand.u32 %v3805, 2147483648
      %v3904 = vor.u32 1.1754944e-38, %v3903
      %v3905 = vsel %vm3902, %v3904, %v3900
      %v3906 = vmul.f32 %v3774, %v3905
      %v3907 = vrcp.pop %v3810
      %v3908 = vmul.f32 %v3810, %v3907
      %v3909 = vsub.f32 1.0, %v3908
      %v3910 = vmul.f32 %v3907, %v3909
      %v3911 = vadd.f32 %v3907, %v3910
      %vm3912 = vweird.f32 %v3810
      %vm3913 = vweird.f32 %v3907
      %vm3914 = vmor %vm3912, %vm3913
      %v3915 = vsel %vm3914, %v3907, %v3911
      %v3916 = vand.u32 2147483647, %v3810
      %vm3917 = vcmp.eq.f32.partialorder %v3916, 8.507059e+37
      %v3918 = vand.u32 %v3810, 2147483648
      %v3919 = vor.u32 1.1754944e-38, %v3918
      %v3920 = vsel %vm3917, %v3919, %v3915
      %v3921 = vmul.f32 %v3775, %v3920
      %v3922 = vrcp.pop %v3815
      %v3923 = vmul.f32 %v3815, %v3922
      %v3924 = vsub.f32 1.0, %v3923
      %v3925 = vmul.f32 %v3922, %v3924
      %v3926 = vadd.f32 %v3922, %v3925
      %vm3927 = vweird.f32 %v3815
      %vm3928 = vweird.f32 %v3922
      %vm3929 = vmor %vm3927, %vm3928
      %v3930 = vsel %vm3929, %v3922, %v3926
      %v3931 = vand.u32 2147483647, %v3815
      %vm3932 = vcmp.eq.f32.partialorder %v3931, 8.507059e+37
      %v3933 = vand.u32 %v3815, 2147483648
      %v3934 = vor.u32 1.1754944e-38, %v3933
      %v3935 = vsel %vm3932, %v3934, %v3930
      %v3936 = vmul.f32 %v3776, %v3935
      %3937 = vset.pattern.permute.xlu0 1
      %3938 = vperm.xlu0 %3937, %v3015
      %v3939 = vpop.permute.xlu0 %3938
      %3941 = vset.pattern.permute.xlu0 1
      %3942 = vperm.xlu0 %3941, %v3017
      %v3943 = vpop.permute.xlu0 %3942
      %3945 = vset.pattern.permute.xlu0 1
      %3946 = vperm.xlu0 %3945, %v3019
      %v3947 = vpop.permute.xlu0 %3946
      %3949 = vset.pattern.permute.xlu0 1
      %3950 = vperm.xlu0 %3949, %v3021
      %v3951 = vpop.permute.xlu0 %3950
      %3953 = vset.pattern.permute.xlu0 1
      %3954 = vperm.xlu0 %3953, %v3023
      %v3955 = vpop.permute.xlu0 %3954
      %3957 = vset.pattern.permute.xlu0 1
      %3958 = vperm.xlu0 %3957, %v3025
      %v3959 = vpop.permute.xlu0 %3958
      %3961 = vset.pattern.permute.xlu0 1
      %3962 = vperm.xlu0 %3961, %v3027
      %v3963 = vpop.permute.xlu0 %3962
      %3965 = vset.pattern.permute.xlu0 1
      %3966 = vperm.xlu0 %3965, %v3029
      %v3967 = vpop.permute.xlu0 %3966
      %3969 = vset.pattern.permute.xlu0 1
      %3970 = vperm.xlu0 %3969, %v3031
      %v3971 = vpop.permute.xlu0 %3970
      %3973 = vset.pattern.permute.xlu0 1
      %3974 = vperm.xlu0 %3973, %v3033
      %v3975 = vpop.permute.xlu0 %3974
      %3977 = vset.pattern.permute.xlu0 1
      %3978 = vperm.xlu0 %3977, %v3035
      %v3979 = vpop.permute.xlu0 %3978
      %3981 = vset.pattern.permute.xlu0 1
      %3982 = vperm.xlu0 %3981, %v3037
      %v3983 = vpop.permute.xlu0 %3982
      %3985 = vset.pattern.permute.xlu0 1
      %3986 = vperm.xlu0 %3985, %v3039
      %v3987 = vpop.permute.xlu0 %3986
      %3989 = vset.pattern.permute.xlu0 1
      %3990 = vperm.xlu0 %3989, %v3041
      %v3991 = vpop.permute.xlu0 %3990
      %3993 = vset.pattern.permute.xlu0 1
      %3994 = vperm.xlu0 %3993, %v3043
      %v3995 = vpop.permute.xlu0 %3994
      %3997 = vset.pattern.permute.xlu0 1
      %3998 = vperm.xlu0 %3997, %v3045
      %v3999 = vpop.permute.xlu0 %3998
      %4001 = vset.pattern.permute.xlu0 1
      %4002 = vperm.xlu0 %4001, %v3047
      %v4003 = vpop.permute.xlu0 %4002
      %4005 = vset.pattern.permute.xlu0 1
      %4006 = vperm.xlu0 %4005, %v3049
      %v4007 = vpop.permute.xlu0 %4006
      %4009 = vset.pattern.permute.xlu0 1
      %4010 = vperm.xlu0 %4009, %v3051
      %v4011 = vpop.permute.xlu0 %4010
      %4013 = vset.pattern.permute.xlu0 1
      %4014 = vperm.xlu0 %4013, %v3053
      %v4015 = vpop.permute.xlu0 %4014
      %4017 = vset.pattern.permute.xlu0 1
      %4018 = vperm.xlu0 %4017, %v3055
      %v4019 = vpop.permute.xlu0 %4018
      %4021 = vset.pattern.permute.xlu0 1
      %4022 = vperm.xlu0 %4021, %v3057
      %v4023 = vpop.permute.xlu0 %4022
      %4025 = vset.pattern.permute.xlu0 1
      %4026 = vperm.xlu0 %4025, %v3059
      %v4027 = vpop.permute.xlu0 %4026
      %4029 = vset.pattern.permute.xlu0 1
      %4030 = vperm.xlu0 %4029, %v3061
      %v4031 = vpop.permute.xlu0 %4030
      %4033 = vset.pattern.permute.xlu0 1
      %4034 = vperm.xlu0 %4033, %v3063
      %v4035 = vpop.permute.xlu0 %4034
      %4037 = vset.pattern.permute.xlu0 1
      %4038 = vperm.xlu0 %4037, %v3065
      %v4039 = vpop.permute.xlu0 %4038
      %4041 = vset.pattern.permute.xlu0 1
      %4042 = vperm.xlu0 %4041, %v3067
      %v4043 = vpop.permute.xlu0 %4042
      %4045 = vset.pattern.permute.xlu0 1
      %4046 = vperm.xlu0 %4045, %v3069
      %v4047 = vpop.permute.xlu0 %4046
      %4049 = vset.pattern.permute.xlu0 1
      %4050 = vperm.xlu0 %4049, %v3071
      %v4051 = vpop.permute.xlu0 %4050
      %4053 = vset.pattern.permute.xlu0 1
      %4054 = vperm.xlu0 %4053, %v3073
      %v4055 = vpop.permute.xlu0 %4054
      %4057 = vset.pattern.permute.xlu0 1
      %4058 = vperm.xlu0 %4057, %v3075
      %v4059 = vpop.permute.xlu0 %4058
      %4061 = vset.pattern.permute.xlu0 1
      %4062 = vperm.xlu0 %4061, %v3077
      %v4063 = vpop.permute.xlu0 %4062
      %4065 = vset.pattern.permute.xlu0 1
      %4066 = vperm.xlu0 %4065, %v3079
      %v4067 = vpop.permute.xlu0 %4066
      %4069 = vset.pattern.permute.xlu0 1
      %4070 = vperm.xlu0 %4069, %v3081
      %v4071 = vpop.permute.xlu0 %4070
      %4073 = vset.pattern.permute.xlu0 1
      %4074 = vperm.xlu0 %4073, %v3083
      %v4075 = vpop.permute.xlu0 %4074
      %4077 = vset.pattern.permute.xlu0 1
      %4078 = vperm.xlu0 %4077, %v3085
      %v4079 = vpop.permute.xlu0 %4078
      %4081 = vset.pattern.permute.xlu0 1
      %4082 = vperm.xlu0 %4081, %v3087
      %v4083 = vpop.permute.xlu0 %4082
      %4085 = vset.pattern.permute.xlu0 1
      %4086 = vperm.xlu0 %4085, %v3089
      %v4087 = vpop.permute.xlu0 %4086
      %4089 = vset.pattern.permute.xlu0 1
      %4090 = vperm.xlu0 %4089, %v3091
      %v4091 = vpop.permute.xlu0 %4090
      %4093 = vset.pattern.permute.xlu0 1
      %4094 = vperm.xlu0 %4093, %v3093
      %v4095 = vpop.permute.xlu0 %4094
      %4097 = vset.pattern.permute.xlu0 1
      %4098 = vperm.xlu0 %4097, %v3095
      %v4099 = vpop.permute.xlu0 %4098
      %4101 = vset.pattern.permute.xlu0 1
      %4102 = vperm.xlu0 %4101, %v3097
      %v4103 = vpop.permute.xlu0 %4102
      %4105 = vset.pattern.permute.xlu0 1
      %4106 = vperm.xlu0 %4105, %v3099
      %v4107 = vpop.permute.xlu0 %4106
      %4109 = vset.pattern.permute.xlu0 1
      %4110 = vperm.xlu0 %4109, %v3101
      %v4111 = vpop.permute.xlu0 %4110
      %4113 = vset.pattern.permute.xlu0 1
      %4114 = vperm.xlu0 %4113, %v3103
      %v4115 = vpop.permute.xlu0 %4114
      %4117 = vset.pattern.permute.xlu0 1
      %4118 = vperm.xlu0 %4117, %v3105
      %v4119 = vpop.permute.xlu0 %4118
      %4121 = vset.pattern.permute.xlu0 1
      %4122 = vperm.xlu0 %4121, %v3107
      %v4123 = vpop.permute.xlu0 %4122
      %4125 = vset.pattern.permute.xlu0 1
      %4126 = vperm.xlu0 %4125, %v3109
      %v4127 = vpop.permute.xlu0 %4126
      %v4129 = vmul.f32 %v3939, %v2666
      %v4130 = vmul.f32 %v3943, %v2669
      %v4131 = vmul.f32 %v3947, %v2672
      %v4132 = vmul.f32 %v3951, %v2675
      %v4133 = vmul.f32 %v3955, %v2678
      %v4134 = vmul.f32 %v3959, %v2681
      %v4135 = vmul.f32 %v3963, %v2684
      %v4136 = vmul.f32 %v3967, %v2687
      %v4137 = vmul.f32 %v3971, %v2690
      %v4138 = vmul.f32 %v3975, %v2693
      %v4139 = vmul.f32 %v3979, %v2696
      %v4140 = vmul.f32 %v3983, %v2699
      %v4141 = vmul.f32 %v3987, %v2702
      %v4142 = vmul.f32 %v3991, %v2705
      %v4143 = vmul.f32 %v3995, %v2708
      %v4144 = vmul.f32 %v3999, %v2711
      %v4145 = vmul.f32 %v4003, %v2714
      %v4146 = vmul.f32 %v4007, %v2717
      %v4147 = vmul.f32 %v4011, %v2720
      %v4148 = vmul.f32 %v4015, %v2723
      %v4149 = vmul.f32 %v4019, %v2726
      %v4150 = vmul.f32 %v4023, %v2729
      %v4151 = vmul.f32 %v4027, %v2732
      %v4152 = vmul.f32 %v4031, %v2735
      %v4153 = vmul.f32 %v4035, %v2738
      %v4154 = vmul.f32 %v4039, %v2741
      %v4155 = vmul.f32 %v4043, %v2744
      %v4156 = vmul.f32 %v4047, %v2747
      %v4157 = vmul.f32 %v4051, %v2750
      %v4158 = vmul.f32 %v4055, %v2753
      %v4159 = vmul.f32 %v4059, %v2756
      %v4160 = vmul.f32 %v4063, %v2759
      %v4161 = vmul.f32 %v4067, %v2762
      %v4162 = vmul.f32 %v4071, %v2765
      %v4163 = vmul.f32 %v4075, %v2768
      %v4164 = vmul.f32 %v4079, %v2771
      %v4165 = vmul.f32 %v4083, %v2774
      %v4166 = vmul.f32 %v4087, %v2777
      %v4167 = vmul.f32 %v4091, %v2780
      %v4168 = vmul.f32 %v4095, %v2783
      %v4169 = vmul.f32 %v4099, %v2786
      %v4170 = vmul.f32 %v4103, %v2789
      %v4171 = vmul.f32 %v4107, %v2792
      %v4172 = vmul.f32 %v4111, %v2795
      %v4173 = vmul.f32 %v4115, %v2798
      %v4174 = vmul.f32 %v4119, %v2801
      %v4175 = vmul.f32 %v4123, %v2804
      %v4176 = vmul.f32 %v4127, %v2807
      %v4177 = vsel %vm3593, %v4129, 0.0
      %v4178 = vsel %vm3593, %v4130, 0.0
      %v4179 = vadd.f32 %v4177, %v4178
      %v4180 = vsel %vm3593, %v4131, 0.0
      %v4181 = vadd.f32 %v4179, %v4180
      %v4182 = vsel %vm3593, %v4132, 0.0
      %v4183 = vadd.f32 %v4181, %v4182
      %v4184 = vsel %vm3593, %v4133, 0.0
      %v4185 = vadd.f32 %v4183, %v4184
      %v4186 = vsel %vm3593, %v4134, 0.0
      %v4187 = vadd.f32 %v4185, %v4186
      %v4188 = vrot.slane %v4187, 4
      %v4189 = vadd.f32 %v4187, %v4188
      %v4190 = vrot.slane %v4189, 2
      %v4191 = vadd.f32 %v4189, %v4190
      %v4192 = vrot.slane %v4191, 1
      %v4193 = vadd.f32 %v4191, %v4192
      %v4194 = vsel %vm3593, %v4135, 0.0
      %v4195 = vsel %vm3593, %v4136, 0.0
      %v4196 = vadd.f32 %v4194, %v4195
      %v4197 = vsel %vm3593, %v4137, 0.0
      %v4198 = vadd.f32 %v4196, %v4197
      %v4199 = vsel %vm3593, %v4138, 0.0
      %v4200 = vadd.f32 %v4198, %v4199
      %v4201 = vsel %vm3593, %v4139, 0.0
      %v4202 = vadd.f32 %v4200, %v4201
      %v4203 = vsel %vm3593, %v4140, 0.0
      %v4204 = vadd.f32 %v4202, %v4203
      %v4205 = vrot.slane %v4204, 4
      %v4206 = vadd.f32 %v4204, %v4205
      %v4207 = vrot.slane %v4206, 2
      %v4208 = vadd.f32 %v4206, %v4207
      %v4209 = vrot.slane %v4208, 1
      %v4210 = vadd.f32 %v4208, %v4209
      %v4211 = vsel %vm3593, %v4141, 0.0
      %v4212 = vsel %vm3593, %v4142, 0.0
      %v4213 = vadd.f32 %v4211, %v4212
      %v4214 = vsel %vm3593, %v4143, 0.0
      %v4215 = vadd.f32 %v4213, %v4214
      %v4216 = vsel %vm3593, %v4144, 0.0
      %v4217 = vadd.f32 %v4215, %v4216
      %v4218 = vsel %vm3593, %v4145, 0.0
      %v4219 = vadd.f32 %v4217, %v4218
      %v4220 = vsel %vm3593, %v4146, 0.0
      %v4221 = vadd.f32 %v4219, %v4220
      %v4222 = vrot.slane %v4221, 4
      %v4223 = vadd.f32 %v4221, %v4222
      %v4224 = vrot.slane %v4223, 2
      %v4225 = vadd.f32 %v4223, %v4224
      %v4226 = vrot.slane %v4225, 1
      %v4227 = vadd.f32 %v4225, %v4226
      %v4228 = vsel %vm3593, %v4147, 0.0
      %v4229 = vsel %vm3593, %v4148, 0.0
      %v4230 = vadd.f32 %v4228, %v4229
      %v4231 = vsel %vm3593, %v4149, 0.0
      %v4232 = vadd.f32 %v4230, %v4231
      %v4233 = vsel %vm3593, %v4150, 0.0
      %v4234 = vadd.f32 %v4232, %v4233
      %v4235 = vsel %vm3593, %v4151, 0.0
      %v4236 = vadd.f32 %v4234, %v4235
      %v4237 = vsel %vm3593, %v4152, 0.0
      %v4238 = vadd.f32 %v4236, %v4237
      %v4239 = vrot.slane %v4238, 4
      %v4240 = vadd.f32 %v4238, %v4239
      %v4241 = vrot.slane %v4240, 2
      %v4242 = vadd.f32 %v4240, %v4241
      %v4243 = vrot.slane %v4242, 1
      %v4244 = vadd.f32 %v4242, %v4243
      %v4245 = vsel %vm3593, %v4153, 0.0
      %v4246 = vsel %vm3593, %v4154, 0.0
      %v4247 = vadd.f32 %v4245, %v4246
      %v4248 = vsel %vm3593, %v4155, 0.0
      %v4249 = vadd.f32 %v4247, %v4248
      %v4250 = vsel %vm3593, %v4156, 0.0
      %v4251 = vadd.f32 %v4249, %v4250
      %v4252 = vsel %vm3593, %v4157, 0.0
      %v4253 = vadd.f32 %v4251, %v4252
      %v4254 = vsel %vm3593, %v4158, 0.0
      %v4255 = vadd.f32 %v4253, %v4254
      %v4256 = vrot.slane %v4255, 4
      %v4257 = vadd.f32 %v4255, %v4256
      %v4258 = vrot.slane %v4257, 2
      %v4259 = vadd.f32 %v4257, %v4258
      %v4260 = vrot.slane %v4259, 1
      %v4261 = vadd.f32 %v4259, %v4260
      %v4262 = vsel %vm3593, %v4159, 0.0
      %v4263 = vsel %vm3593, %v4160, 0.0
      %v4264 = vadd.f32 %v4262, %v4263
      %v4265 = vsel %vm3593, %v4161, 0.0
      %v4266 = vadd.f32 %v4264, %v4265
      %v4267 = vsel %vm3593, %v4162, 0.0
      %v4268 = vadd.f32 %v4266, %v4267
      %v4269 = vsel %vm3593, %v4163, 0.0
      %v4270 = vadd.f32 %v4268, %v4269
      %v4271 = vsel %vm3593, %v4164, 0.0
      %v4272 = vadd.f32 %v4270, %v4271
      %v4273 = vrot.slane %v4272, 4
      %v4274 = vadd.f32 %v4272, %v4273
      %v4275 = vrot.slane %v4274, 2
      %v4276 = vadd.f32 %v4274, %v4275
      %v4277 = vrot.slane %v4276, 1
      %v4278 = vadd.f32 %v4276, %v4277
      %v4279 = vsel %vm3593, %v4165, 0.0
      %v4280 = vsel %vm3593, %v4166, 0.0
      %v4281 = vadd.f32 %v4279, %v4280
      %v4282 = vsel %vm3593, %v4167, 0.0
      %v4283 = vadd.f32 %v4281, %v4282
      %v4284 = vsel %vm3593, %v4168, 0.0
      %v4285 = vadd.f32 %v4283, %v4284
      %v4286 = vsel %vm3593, %v4169, 0.0
      %v4287 = vadd.f32 %v4285, %v4286
      %v4288 = vsel %vm3593, %v4170, 0.0
      %v4289 = vadd.f32 %v4287, %v4288
      %v4290 = vrot.slane %v4289, 4
      %v4291 = vadd.f32 %v4289, %v4290
      %v4292 = vrot.slane %v4291, 2
      %v4293 = vadd.f32 %v4291, %v4292
      %v4294 = vrot.slane %v4293, 1
      %v4295 = vadd.f32 %v4293, %v4294
      %v4296 = vsel %vm3593, %v4171, 0.0
      %v4297 = vsel %vm3593, %v4172, 0.0
      %v4298 = vadd.f32 %v4296, %v4297
      %v4299 = vsel %vm3593, %v4173, 0.0
      %v4300 = vadd.f32 %v4298, %v4299
      %v4301 = vsel %vm3593, %v4174, 0.0
      %v4302 = vadd.f32 %v4300, %v4301
      %v4303 = vsel %vm3593, %v4175, 0.0
      %v4304 = vadd.f32 %v4302, %v4303
      %v4305 = vsel %vm3593, %v4176, 0.0
      %v4306 = vadd.f32 %v4304, %v4305
      %v4307 = vrot.slane %v4306, 4
      %v4308 = vadd.f32 %v4306, %v4307
      %v4309 = vrot.slane %v4308, 2
      %v4310 = vadd.f32 %v4308, %v4309
      %v4311 = vrot.slane %v4310, 1
      %v4312 = vadd.f32 %v4310, %v4311
      %4313 = vset.pattern.permute.xlu0 1
      %4314 = vperm.xlu0 %4313, %v3142
      %v4315 = vpop.permute.xlu0 %4314
      %v4317 = vperm.slane %v2811, 1
      %v4318 = vmul.f32 %v4315, %v4317
      %v4320 = vrot.slane %v4318, 1
      %v4321 = vrot.slane %v4318, 2
      %v4322 = vrot.slane %v4318, 3
      %v4323 = vrot.slane %v4318, 4
      %v4324 = vrot.slane %v4318, 5
      %v4325 = vrot.slane %v4318, 6
      %v4326 = vrot.slane %v4318, 7
      %4327 = vrot.lane.b32.xlu0 %v4318, 3
      %v4328 = vpop.permute.xlu0 %4327
      %4329 = vrot.lane.b32.xlu0 %v4320, 3
      %v4330 = vpop.permute.xlu0 %4329
      %4331 = vrot.lane.b32.xlu0 %v4321, 3
      %v4332 = vpop.permute.xlu0 %4331
      %4333 = vrot.lane.b32.xlu0 %v4322, 3
      %v4334 = vpop.permute.xlu0 %4333
      %4335 = vrot.lane.b32.xlu0 %v4323, 3
      %v4336 = vpop.permute.xlu0 %4335
      %4337 = vrot.lane.b32.xlu0 %v4324, 3
      %v4338 = vpop.permute.xlu0 %4337
      %4339 = vrot.lane.b32.xlu0 %v4325, 3
      %v4340 = vpop.permute.xlu0 %4339
      %4341 = vrot.lane.b32.xlu0 %v4326, 3
      %v4342 = vpop.permute.xlu0 %4341
      %v4351 = vadd.f32 %v4193, %v4328
      %v4352 = vadd.f32 %v4210, %v4330
      %v4353 = vadd.f32 %v4227, %v4332
      %v4354 = vadd.f32 %v4244, %v4334
      %v4355 = vadd.f32 %v4261, %v4336
      %v4356 = vadd.f32 %v4278, %v4338
      %v4357 = vadd.f32 %v4295, %v4340
      %v4358 = vadd.f32 %v4312, %v4342
      %4359 = vset.pattern.permute.xlu0 1
      %4360 = vperm.xlu0 %4359, %v3297
      %v4361 = vpop.permute.xlu0 %4360
      %4363 = vset.pattern.permute.xlu0 1
      %4364 = vperm.xlu0 %4363, %v3298
      %v4365 = vpop.permute.xlu0 %4364
      %4367 = vset.pattern.permute.xlu0 1
      %4368 = vperm.xlu0 %4367, %v3299
      %v4369 = vpop.permute.xlu0 %4368
      %4371 = vset.pattern.permute.xlu0 1
      %4372 = vperm.xlu0 %4371, %v3300
      %v4373 = vpop.permute.xlu0 %4372
      %4375 = vset.pattern.permute.xlu0 1
      %4376 = vperm.xlu0 %4375, %v3301
      %v4377 = vpop.permute.xlu0 %4376
      %4379 = vset.pattern.permute.xlu0 1
      %4380 = vperm.xlu0 %4379, %v3302
      %v4381 = vpop.permute.xlu0 %4380
      %4383 = vset.pattern.permute.xlu0 1
      %4384 = vperm.xlu0 %4383, %v3303
      %v4385 = vpop.permute.xlu0 %4384
      %4387 = vset.pattern.permute.xlu0 1
      %4388 = vperm.xlu0 %4387, %v3304
      %v4389 = vpop.permute.xlu0 %4388
      %v4391 = vrcp.pop %v4361
      %v4392 = vmul.f32 %v4361, %v4391
      %v4393 = vsub.f32 1.0, %v4392
      %v4394 = vmul.f32 %v4391, %v4393
      %v4395 = vadd.f32 %v4391, %v4394
      %vm4396 = vweird.f32 %v4361
      %vm4397 = vweird.f32 %v4391
      %vm4398 = vmor %vm4396, %vm4397
      %v4399 = vsel %vm4398, %v4391, %v4395
      %v4400 = vand.u32 2147483647, %v4361
      %vm4401 = vcmp.eq.f32.partialorder %v4400, 8.507059e+37
      %v4402 = vand.u32 %v4361, 2147483648
      %v4403 = vor.u32 1.1754944e-38, %v4402
      %v4404 = vsel %vm4401, %v4403, %v4399
      %v4405 = vmul.f32 %v4351, %v4404
      %v4406 = vrcp.pop %v4365
      %v4407 = vmul.f32 %v4365, %v4406
      %v4408 = vsub.f32 1.0, %v4407
      %v4409 = vmul.f32 %v4406, %v4408
      %v4410 = vadd.f32 %v4406, %v4409
      %vm4411 = vweird.f32 %v4365
      %vm4412 = vweird.f32 %v4406
      %vm4413 = vmor %vm4411, %vm4412
      %v4414 = vsel %vm4413, %v4406, %v4410
      %v4415 = vand.u32 2147483647, %v4365
      %vm4416 = vcmp.eq.f32.partialorder %v4415, 8.507059e+37
      %v4417 = vand.u32 %v4365, 2147483648
      %v4418 = vor.u32 1.1754944e-38, %v4417
      %v4419 = vsel %vm4416, %v4418, %v4414
      %v4420 = vmul.f32 %v4352, %v4419
      %v4421 = vrcp.pop %v4369
      %v4422 = vmul.f32 %v4369, %v4421
      %v4423 = vsub.f32 1.0, %v4422
      %v4424 = vmul.f32 %v4421, %v4423
      %v4425 = vadd.f32 %v4421, %v4424
      %vm4426 = vweird.f32 %v4369
      %vm4427 = vweird.f32 %v4421
      %vm4428 = vmor %vm4426, %vm4427
      %v4429 = vsel %vm4428, %v4421, %v4425
      %v4430 = vand.u32 2147483647, %v4369
      %vm4431 = vcmp.eq.f32.partialorder %v4430, 8.507059e+37
      %v4432 = vand.u32 %v4369, 2147483648
      %v4433 = vor.u32 1.1754944e-38, %v4432
      %v4434 = vsel %vm4431, %v4433, %v4429
      %v4435 = vmul.f32 %v4353, %v4434
      %v4436 = vrcp.pop %v4373
      %v4437 = vmul.f32 %v4373, %v4436
      %v4438 = vsub.f32 1.0, %v4437
      %v4439 = vmul.f32 %v4436, %v4438
      %v4440 = vadd.f32 %v4436, %v4439
      %vm4441 = vweird.f32 %v4373
      %vm4442 = vweird.f32 %v4436
      %vm4443 = vmor %vm4441, %vm4442
      %v4444 = vsel %vm4443, %v4436, %v4440
      %v4445 = vand.u32 2147483647, %v4373
      %vm4446 = vcmp.eq.f32.partialorder %v4445, 8.507059e+37
      %v4447 = vand.u32 %v4373, 2147483648
      %v4448 = vor.u32 1.1754944e-38, %v4447
      %v4449 = vsel %vm4446, %v4448, %v4444
      %v4450 = vmul.f32 %v4354, %v4449
      %v4451 = vrcp.pop %v4377
      %v4452 = vmul.f32 %v4377, %v4451
      %v4453 = vsub.f32 1.0, %v4452
      %v4454 = vmul.f32 %v4451, %v4453
      %v4455 = vadd.f32 %v4451, %v4454
      %vm4456 = vweird.f32 %v4377
      %vm4457 = vweird.f32 %v4451
      %vm4458 = vmor %vm4456, %vm4457
      %v4459 = vsel %vm4458, %v4451, %v4455
      %v4460 = vand.u32 2147483647, %v4377
      %vm4461 = vcmp.eq.f32.partialorder %v4460, 8.507059e+37
      %v4462 = vand.u32 %v4377, 2147483648
      %v4463 = vor.u32 1.1754944e-38, %v4462
      %v4464 = vsel %vm4461, %v4463, %v4459
      %v4465 = vmul.f32 %v4355, %v4464
      %v4466 = vrcp.pop %v4381
      %v4467 = vmul.f32 %v4381, %v4466
      %v4468 = vsub.f32 1.0, %v4467
      %v4469 = vmul.f32 %v4466, %v4468
      %v4470 = vadd.f32 %v4466, %v4469
      %vm4471 = vweird.f32 %v4381
      %vm4472 = vweird.f32 %v4466
      %vm4473 = vmor %vm4471, %vm4472
      %v4474 = vsel %vm4473, %v4466, %v4470
      %v4475 = vand.u32 2147483647, %v4381
      %vm4476 = vcmp.eq.f32.partialorder %v4475, 8.507059e+37
      %v4477 = vand.u32 %v4381, 2147483648
      %v4478 = vor.u32 1.1754944e-38, %v4477
      %v4479 = vsel %vm4476, %v4478, %v4474
      %v4480 = vmul.f32 %v4356, %v4479
      %v4481 = vrcp.pop %v4385
      %v4482 = vmul.f32 %v4385, %v4481
      %v4483 = vsub.f32 1.0, %v4482
      %v4484 = vmul.f32 %v4481, %v4483
      %v4485 = vadd.f32 %v4481, %v4484
      %vm4486 = vweird.f32 %v4385
      %vm4487 = vweird.f32 %v4481
      %vm4488 = vmor %vm4486, %vm4487
      %v4489 = vsel %vm4488, %v4481, %v4485
      %v4490 = vand.u32 2147483647, %v4385
      %vm4491 = vcmp.eq.f32.partialorder %v4490, 8.507059e+37
      %v4492 = vand.u32 %v4385, 2147483648
      %v4493 = vor.u32 1.1754944e-38, %v4492
      %v4494 = vsel %vm4491, %v4493, %v4489
      %v4495 = vmul.f32 %v4357, %v4494
      %v4496 = vrcp.pop %v4389
      %v4497 = vmul.f32 %v4389, %v4496
      %v4498 = vsub.f32 1.0, %v4497
      %v4499 = vmul.f32 %v4496, %v4498
      %v4500 = vadd.f32 %v4496, %v4499
      %vm4501 = vweird.f32 %v4389
      %vm4502 = vweird.f32 %v4496
      %vm4503 = vmor %vm4501, %vm4502
      %v4504 = vsel %vm4503, %v4496, %v4500
      %v4505 = vand.u32 2147483647, %v4389
      %vm4506 = vcmp.eq.f32.partialorder %v4505, 8.507059e+37
      %v4507 = vand.u32 %v4389, 2147483648
      %v4508 = vor.u32 1.1754944e-38, %v4507
      %v4509 = vsel %vm4506, %v4508, %v4504
      %v4510 = vmul.f32 %v4358, %v4509
      %4511 = vset.pattern.permute.xlu0 2
      %4512 = vperm.xlu0 %4511, %v3015
      %v4513 = vpop.permute.xlu0 %4512
      %4515 = vset.pattern.permute.xlu0 2
      %4516 = vperm.xlu0 %4515, %v3017
      %v4517 = vpop.permute.xlu0 %4516
      %4519 = vset.pattern.permute.xlu0 2
      %4520 = vperm.xlu0 %4519, %v3019
      %v4521 = vpop.permute.xlu0 %4520
      %4523 = vset.pattern.permute.xlu0 2
      %4524 = vperm.xlu0 %4523, %v3021
      %v4525 = vpop.permute.xlu0 %4524
      %4527 = vset.pattern.permute.xlu0 2
      %4528 = vperm.xlu0 %4527, %v3023
      %v4529 = vpop.permute.xlu0 %4528
      %4531 = vset.pattern.permute.xlu0 2
      %4532 = vperm.xlu0 %4531, %v3025
      %v4533 = vpop.permute.xlu0 %4532
      %4535 = vset.pattern.permute.xlu0 2
      %4536 = vperm.xlu0 %4535, %v3027
      %v4537 = vpop.permute.xlu0 %4536
      %4539 = vset.pattern.permute.xlu0 2
      %4540 = vperm.xlu0 %4539, %v3029
      %v4541 = vpop.permute.xlu0 %4540
      %4543 = vset.pattern.permute.xlu0 2
      %4544 = vperm.xlu0 %4543, %v3031
      %v4545 = vpop.permute.xlu0 %4544
      %4547 = vset.pattern.permute.xlu0 2
      %4548 = vperm.xlu0 %4547, %v3033
      %v4549 = vpop.permute.xlu0 %4548
      %4551 = vset.pattern.permute.xlu0 2
      %4552 = vperm.xlu0 %4551, %v3035
      %v4553 = vpop.permute.xlu0 %4552
      %4555 = vset.pattern.permute.xlu0 2
      %4556 = vperm.xlu0 %4555, %v3037
      %v4557 = vpop.permute.xlu0 %4556
      %4559 = vset.pattern.permute.xlu0 2
      %4560 = vperm.xlu0 %4559, %v3039
      %v4561 = vpop.permute.xlu0 %4560
      %4563 = vset.pattern.permute.xlu0 2
      %4564 = vperm.xlu0 %4563, %v3041
      %v4565 = vpop.permute.xlu0 %4564
      %4567 = vset.pattern.permute.xlu0 2
      %4568 = vperm.xlu0 %4567, %v3043
      %v4569 = vpop.permute.xlu0 %4568
      %4571 = vset.pattern.permute.xlu0 2
      %4572 = vperm.xlu0 %4571, %v3045
      %v4573 = vpop.permute.xlu0 %4572
      %4575 = vset.pattern.permute.xlu0 2
      %4576 = vperm.xlu0 %4575, %v3047
      %v4577 = vpop.permute.xlu0 %4576
      %4579 = vset.pattern.permute.xlu0 2
      %4580 = vperm.xlu0 %4579, %v3049
      %v4581 = vpop.permute.xlu0 %4580
      %4583 = vset.pattern.permute.xlu0 2
      %4584 = vperm.xlu0 %4583, %v3051
      %v4585 = vpop.permute.xlu0 %4584
      %4587 = vset.pattern.permute.xlu0 2
      %4588 = vperm.xlu0 %4587, %v3053
      %v4589 = vpop.permute.xlu0 %4588
      %4591 = vset.pattern.permute.xlu0 2
      %4592 = vperm.xlu0 %4591, %v3055
      %v4593 = vpop.permute.xlu0 %4592
      %4595 = vset.pattern.permute.xlu0 2
      %4596 = vperm.xlu0 %4595, %v3057
      %v4597 = vpop.permute.xlu0 %4596
      %4599 = vset.pattern.permute.xlu0 2
      %4600 = vperm.xlu0 %4599, %v3059
      %v4601 = vpop.permute.xlu0 %4600
      %4603 = vset.pattern.permute.xlu0 2
      %4604 = vperm.xlu0 %4603, %v3061
      %v4605 = vpop.permute.xlu0 %4604
      %4607 = vset.pattern.permute.xlu0 2
      %4608 = vperm.xlu0 %4607, %v3063
      %v4609 = vpop.permute.xlu0 %4608
      %4611 = vset.pattern.permute.xlu0 2
      %4612 = vperm.xlu0 %4611, %v3065
      %v4613 = vpop.permute.xlu0 %4612
      %4615 = vset.pattern.permute.xlu0 2
      %4616 = vperm.xlu0 %4615, %v3067
      %v4617 = vpop.permute.xlu0 %4616
      %4619 = vset.pattern.permute.xlu0 2
      %4620 = vperm.xlu0 %4619, %v3069
      %v4621 = vpop.permute.xlu0 %4620
      %4623 = vset.pattern.permute.xlu0 2
      %4624 = vperm.xlu0 %4623, %v3071
      %v4625 = vpop.permute.xlu0 %4624
      %4627 = vset.pattern.permute.xlu0 2
      %4628 = vperm.xlu0 %4627, %v3073
      %v4629 = vpop.permute.xlu0 %4628
      %4631 = vset.pattern.permute.xlu0 2
      %4632 = vperm.xlu0 %4631, %v3075
      %v4633 = vpop.permute.xlu0 %4632
      %4635 = vset.pattern.permute.xlu0 2
      %4636 = vperm.xlu0 %4635, %v3077
      %v4637 = vpop.permute.xlu0 %4636
      %4639 = vset.pattern.permute.xlu0 2
      %4640 = vperm.xlu0 %4639, %v3079
      %v4641 = vpop.permute.xlu0 %4640
      %4643 = vset.pattern.permute.xlu0 2
      %4644 = vperm.xlu0 %4643, %v3081
      %v4645 = vpop.permute.xlu0 %4644
      %4647 = vset.pattern.permute.xlu0 2
      %4648 = vperm.xlu0 %4647, %v3083
      %v4649 = vpop.permute.xlu0 %4648
      %4651 = vset.pattern.permute.xlu0 2
      %4652 = vperm.xlu0 %4651, %v3085
      %v4653 = vpop.permute.xlu0 %4652
      %4655 = vset.pattern.permute.xlu0 2
      %4656 = vperm.xlu0 %4655, %v3087
      %v4657 = vpop.permute.xlu0 %4656
      %4659 = vset.pattern.permute.xlu0 2
      %4660 = vperm.xlu0 %4659, %v3089
      %v4661 = vpop.permute.xlu0 %4660
      %4663 = vset.pattern.permute.xlu0 2
      %4664 = vperm.xlu0 %4663, %v3091
      %v4665 = vpop.permute.xlu0 %4664
      %4667 = vset.pattern.permute.xlu0 2
      %4668 = vperm.xlu0 %4667, %v3093
      %v4669 = vpop.permute.xlu0 %4668
      %4671 = vset.pattern.permute.xlu0 2
      %4672 = vperm.xlu0 %4671, %v3095
      %v4673 = vpop.permute.xlu0 %4672
      %4675 = vset.pattern.permute.xlu0 2
      %4676 = vperm.xlu0 %4675, %v3097
      %v4677 = vpop.permute.xlu0 %4676
      %4679 = vset.pattern.permute.xlu0 2
      %4680 = vperm.xlu0 %4679, %v3099
      %v4681 = vpop.permute.xlu0 %4680
      %4683 = vset.pattern.permute.xlu0 2
      %4684 = vperm.xlu0 %4683, %v3101
      %v4685 = vpop.permute.xlu0 %4684
      %4687 = vset.pattern.permute.xlu0 2
      %4688 = vperm.xlu0 %4687, %v3103
      %v4689 = vpop.permute.xlu0 %4688
      %4691 = vset.pattern.permute.xlu0 2
      %4692 = vperm.xlu0 %4691, %v3105
      %v4693 = vpop.permute.xlu0 %4692
      %4695 = vset.pattern.permute.xlu0 2
      %4696 = vperm.xlu0 %4695, %v3107
      %v4697 = vpop.permute.xlu0 %4696
      %4699 = vset.pattern.permute.xlu0 2
      %4700 = vperm.xlu0 %4699, %v3109
      %v4701 = vpop.permute.xlu0 %4700
      %v4703 = vmul.f32 %v4513, %v2666
      %v4704 = vmul.f32 %v4517, %v2669
      %v4705 = vmul.f32 %v4521, %v2672
      %v4706 = vmul.f32 %v4525, %v2675
      %v4707 = vmul.f32 %v4529, %v2678
      %v4708 = vmul.f32 %v4533, %v2681
      %v4709 = vmul.f32 %v4537, %v2684
      %v4710 = vmul.f32 %v4541, %v2687
      %v4711 = vmul.f32 %v4545, %v2690
      %v4712 = vmul.f32 %v4549, %v2693
      %v4713 = vmul.f32 %v4553, %v2696
      %v4714 = vmul.f32 %v4557, %v2699
      %v4715 = vmul.f32 %v4561, %v2702
      %v4716 = vmul.f32 %v4565, %v2705
      %v4717 = vmul.f32 %v4569, %v2708
      %v4718 = vmul.f32 %v4573, %v2711
      %v4719 = vmul.f32 %v4577, %v2714
      %v4720 = vmul.f32 %v4581, %v2717
      %v4721 = vmul.f32 %v4585, %v2720
      %v4722 = vmul.f32 %v4589, %v2723
      %v4723 = vmul.f32 %v4593, %v2726
      %v4724 = vmul.f32 %v4597, %v2729
      %v4725 = vmul.f32 %v4601, %v2732
      %v4726 = vmul.f32 %v4605, %v2735
      %v4727 = vmul.f32 %v4609, %v2738
      %v4728 = vmul.f32 %v4613, %v2741
      %v4729 = vmul.f32 %v4617, %v2744
      %v4730 = vmul.f32 %v4621, %v2747
      %v4731 = vmul.f32 %v4625, %v2750
      %v4732 = vmul.f32 %v4629, %v2753
      %v4733 = vmul.f32 %v4633, %v2756
      %v4734 = vmul.f32 %v4637, %v2759
      %v4735 = vmul.f32 %v4641, %v2762
      %v4736 = vmul.f32 %v4645, %v2765
      %v4737 = vmul.f32 %v4649, %v2768
      %v4738 = vmul.f32 %v4653, %v2771
      %v4739 = vmul.f32 %v4657, %v2774
      %v4740 = vmul.f32 %v4661, %v2777
      %v4741 = vmul.f32 %v4665, %v2780
      %v4742 = vmul.f32 %v4669, %v2783
      %v4743 = vmul.f32 %v4673, %v2786
      %v4744 = vmul.f32 %v4677, %v2789
      %v4745 = vmul.f32 %v4681, %v2792
      %v4746 = vmul.f32 %v4685, %v2795
      %v4747 = vmul.f32 %v4689, %v2798
      %v4748 = vmul.f32 %v4693, %v2801
      %v4749 = vmul.f32 %v4697, %v2804
      %v4750 = vmul.f32 %v4701, %v2807
      %v4751 = vsel %vm3593, %v4703, 0.0
      %v4752 = vsel %vm3593, %v4704, 0.0
      %v4753 = vadd.f32 %v4751, %v4752
      %v4754 = vsel %vm3593, %v4705, 0.0
      %v4755 = vadd.f32 %v4753, %v4754
      %v4756 = vsel %vm3593, %v4706, 0.0
      %v4757 = vadd.f32 %v4755, %v4756
      %v4758 = vsel %vm3593, %v4707, 0.0
      %v4759 = vadd.f32 %v4757, %v4758
      %v4760 = vsel %vm3593, %v4708, 0.0
      %v4761 = vadd.f32 %v4759, %v4760
      %v4762 = vrot.slane %v4761, 4
      %v4763 = vadd.f32 %v4761, %v4762
      %v4764 = vrot.slane %v4763, 2
      %v4765 = vadd.f32 %v4763, %v4764
      %v4766 = vrot.slane %v4765, 1
      %v4767 = vadd.f32 %v4765, %v4766
      %v4768 = vsel %vm3593, %v4709, 0.0
      %v4769 = vsel %vm3593, %v4710, 0.0
      %v4770 = vadd.f32 %v4768, %v4769
      %v4771 = vsel %vm3593, %v4711, 0.0
      %v4772 = vadd.f32 %v4770, %v4771
      %v4773 = vsel %vm3593, %v4712, 0.0
      %v4774 = vadd.f32 %v4772, %v4773
      %v4775 = vsel %vm3593, %v4713, 0.0
      %v4776 = vadd.f32 %v4774, %v4775
      %v4777 = vsel %vm3593, %v4714, 0.0
      %v4778 = vadd.f32 %v4776, %v4777
      %v4779 = vrot.slane %v4778, 4
      %v4780 = vadd.f32 %v4778, %v4779
      %v4781 = vrot.slane %v4780, 2
      %v4782 = vadd.f32 %v4780, %v4781
      %v4783 = vrot.slane %v4782, 1
      %v4784 = vadd.f32 %v4782, %v4783
      %v4785 = vsel %vm3593, %v4715, 0.0
      %v4786 = vsel %vm3593, %v4716, 0.0
      %v4787 = vadd.f32 %v4785, %v4786
      %v4788 = vsel %vm3593, %v4717, 0.0
      %v4789 = vadd.f32 %v4787, %v4788
      %v4790 = vsel %vm3593, %v4718, 0.0
      %v4791 = vadd.f32 %v4789, %v4790
      %v4792 = vsel %vm3593, %v4719, 0.0
      %v4793 = vadd.f32 %v4791, %v4792
      %v4794 = vsel %vm3593, %v4720, 0.0
      %v4795 = vadd.f32 %v4793, %v4794
      %v4796 = vrot.slane %v4795, 4
      %v4797 = vadd.f32 %v4795, %v4796
      %v4798 = vrot.slane %v4797, 2
      %v4799 = vadd.f32 %v4797, %v4798
      %v4800 = vrot.slane %v4799, 1
      %v4801 = vadd.f32 %v4799, %v4800
      %v4802 = vsel %vm3593, %v4721, 0.0
      %v4803 = vsel %vm3593, %v4722, 0.0
      %v4804 = vadd.f32 %v4802, %v4803
      %v4805 = vsel %vm3593, %v4723, 0.0
      %v4806 = vadd.f32 %v4804, %v4805
      %v4807 = vsel %vm3593, %v4724, 0.0
      %v4808 = vadd.f32 %v4806, %v4807
      %v4809 = vsel %vm3593, %v4725, 0.0
      %v4810 = vadd.f32 %v4808, %v4809
      %v4811 = vsel %vm3593, %v4726, 0.0
      %v4812 = vadd.f32 %v4810, %v4811
      %v4813 = vrot.slane %v4812, 4
      %v4814 = vadd.f32 %v4812, %v4813
      %v4815 = vrot.slane %v4814, 2
      %v4816 = vadd.f32 %v4814, %v4815
      %v4817 = vrot.slane %v4816, 1
      %v4818 = vadd.f32 %v4816, %v4817
      %v4819 = vsel %vm3593, %v4727, 0.0
      %v4820 = vsel %vm3593, %v4728, 0.0
      %v4821 = vadd.f32 %v4819, %v4820
      %v4822 = vsel %vm3593, %v4729, 0.0
      %v4823 = vadd.f32 %v4821, %v4822
      %v4824 = vsel %vm3593, %v4730, 0.0
      %v4825 = vadd.f32 %v4823, %v4824
      %v4826 = vsel %vm3593, %v4731, 0.0
      %v4827 = vadd.f32 %v4825, %v4826
      %v4828 = vsel %vm3593, %v4732, 0.0
      %v4829 = vadd.f32 %v4827, %v4828
      %v4830 = vrot.slane %v4829, 4
      %v4831 = vadd.f32 %v4829, %v4830
      %v4832 = vrot.slane %v4831, 2
      %v4833 = vadd.f32 %v4831, %v4832
      %v4834 = vrot.slane %v4833, 1
      %v4835 = vadd.f32 %v4833, %v4834
      %v4836 = vsel %vm3593, %v4733, 0.0
      %v4837 = vsel %vm3593, %v4734, 0.0
      %v4838 = vadd.f32 %v4836, %v4837
      %v4839 = vsel %vm3593, %v4735, 0.0
      %v4840 = vadd.f32 %v4838, %v4839
      %v4841 = vsel %vm3593, %v4736, 0.0
      %v4842 = vadd.f32 %v4840, %v4841
      %v4843 = vsel %vm3593, %v4737, 0.0
      %v4844 = vadd.f32 %v4842, %v4843
      %v4845 = vsel %vm3593, %v4738, 0.0
      %v4846 = vadd.f32 %v4844, %v4845
      %v4847 = vrot.slane %v4846, 4
      %v4848 = vadd.f32 %v4846, %v4847
      %v4849 = vrot.slane %v4848, 2
      %v4850 = vadd.f32 %v4848, %v4849
      %v4851 = vrot.slane %v4850, 1
      %v4852 = vadd.f32 %v4850, %v4851
      %v4853 = vsel %vm3593, %v4739, 0.0
      %v4854 = vsel %vm3593, %v4740, 0.0
      %v4855 = vadd.f32 %v4853, %v4854
      %v4856 = vsel %vm3593, %v4741, 0.0
      %v4857 = vadd.f32 %v4855, %v4856
      %v4858 = vsel %vm3593, %v4742, 0.0
      %v4859 = vadd.f32 %v4857, %v4858
      %v4860 = vsel %vm3593, %v4743, 0.0
      %v4861 = vadd.f32 %v4859, %v4860
      %v4862 = vsel %vm3593, %v4744, 0.0
      %v4863 = vadd.f32 %v4861, %v4862
      %v4864 = vrot.slane %v4863, 4
      %v4865 = vadd.f32 %v4863, %v4864
      %v4866 = vrot.slane %v4865, 2
      %v4867 = vadd.f32 %v4865, %v4866
      %v4868 = vrot.slane %v4867, 1
      %v4869 = vadd.f32 %v4867, %v4868
      %v4870 = vsel %vm3593, %v4745, 0.0
      %v4871 = vsel %vm3593, %v4746, 0.0
      %v4872 = vadd.f32 %v4870, %v4871
      %v4873 = vsel %vm3593, %v4747, 0.0
      %v4874 = vadd.f32 %v4872, %v4873
      %v4875 = vsel %vm3593, %v4748, 0.0
      %v4876 = vadd.f32 %v4874, %v4875
      %v4877 = vsel %vm3593, %v4749, 0.0
      %v4878 = vadd.f32 %v4876, %v4877
      %v4879 = vsel %vm3593, %v4750, 0.0
      %v4880 = vadd.f32 %v4878, %v4879
      %v4881 = vrot.slane %v4880, 4
      %v4882 = vadd.f32 %v4880, %v4881
      %v4883 = vrot.slane %v4882, 2
      %v4884 = vadd.f32 %v4882, %v4883
      %v4885 = vrot.slane %v4884, 1
      %v4886 = vadd.f32 %v4884, %v4885
      %4887 = vset.pattern.permute.xlu0 2
      %4888 = vperm.xlu0 %4887, %v3142
      %v4889 = vpop.permute.xlu0 %4888
      %v4891 = vperm.slane %v2811, 2
      %v4892 = vmul.f32 %v4889, %v4891
      %v4894 = vrot.slane %v4892, 1
      %v4895 = vrot.slane %v4892, 2
      %v4896 = vrot.slane %v4892, 3
      %v4897 = vrot.slane %v4892, 4
      %v4898 = vrot.slane %v4892, 5
      %v4899 = vrot.slane %v4892, 6
      %v4900 = vrot.slane %v4892, 7
      %4901 = vrot.lane.b32.xlu0 %v4892, 3
      %v4902 = vpop.permute.xlu0 %4901
      %4903 = vrot.lane.b32.xlu0 %v4894, 3
      %v4904 = vpop.permute.xlu0 %4903
      %4905 = vrot.lane.b32.xlu0 %v4895, 3
      %v4906 = vpop.permute.xlu0 %4905
      %4907 = vrot.lane.b32.xlu0 %v4896, 3
      %v4908 = vpop.permute.xlu0 %4907
      %4909 = vrot.lane.b32.xlu0 %v4897, 3
      %v4910 = vpop.permute.xlu0 %4909
      %4911 = vrot.lane.b32.xlu0 %v4898, 3
      %v4912 = vpop.permute.xlu0 %4911
      %4913 = vrot.lane.b32.xlu0 %v4899, 3
      %v4914 = vpop.permute.xlu0 %4913
      %4915 = vrot.lane.b32.xlu0 %v4900, 3
      %v4916 = vpop.permute.xlu0 %4915
      %v4925 = vadd.f32 %v4767, %v4902
      %v4926 = vadd.f32 %v4784, %v4904
      %v4927 = vadd.f32 %v4801, %v4906
      %v4928 = vadd.f32 %v4818, %v4908
      %v4929 = vadd.f32 %v4835, %v4910
      %v4930 = vadd.f32 %v4852, %v4912
      %v4931 = vadd.f32 %v4869, %v4914
      %v4932 = vadd.f32 %v4886, %v4916
      %4933 = vset.pattern.permute.xlu0 2
      %4934 = vperm.xlu0 %4933, %v3297
      %v4935 = vpop.permute.xlu0 %4934
      %4937 = vset.pattern.permute.xlu0 2
      %4938 = vperm.xlu0 %4937, %v3298
      %v4939 = vpop.permute.xlu0 %4938
      %4941 = vset.pattern.permute.xlu0 2
      %4942 = vperm.xlu0 %4941, %v3299
      %v4943 = vpop.permute.xlu0 %4942
      %4945 = vset.pattern.permute.xlu0 2
      %4946 = vperm.xlu0 %4945, %v3300
      %v4947 = vpop.permute.xlu0 %4946
      %4949 = vset.pattern.permute.xlu0 2
      %4950 = vperm.xlu0 %4949, %v3301
      %v4951 = vpop.permute.xlu0 %4950
      %4953 = vset.pattern.permute.xlu0 2
      %4954 = vperm.xlu0 %4953, %v3302
      %v4955 = vpop.permute.xlu0 %4954
      %4957 = vset.pattern.permute.xlu0 2
      %4958 = vperm.xlu0 %4957, %v3303
      %v4959 = vpop.permute.xlu0 %4958
      %4961 = vset.pattern.permute.xlu0 2
      %4962 = vperm.xlu0 %4961, %v3304
      %v4963 = vpop.permute.xlu0 %4962
      %v4965 = vrcp.pop %v4935
      %v4966 = vmul.f32 %v4935, %v4965
      %v4967 = vsub.f32 1.0, %v4966
      %v4968 = vmul.f32 %v4965, %v4967
      %v4969 = vadd.f32 %v4965, %v4968
      %vm4970 = vweird.f32 %v4935
      %vm4971 = vweird.f32 %v4965
      %vm4972 = vmor %vm4970, %vm4971
      %v4973 = vsel %vm4972, %v4965, %v4969
      %v4974 = vand.u32 2147483647, %v4935
      %vm4975 = vcmp.eq.f32.partialorder %v4974, 8.507059e+37
      %v4976 = vand.u32 %v4935, 2147483648
      %v4977 = vor.u32 1.1754944e-38, %v4976
      %v4978 = vsel %vm4975, %v4977, %v4973
      %v4979 = vmul.f32 %v4925, %v4978
      %v4980 = vrcp.pop %v4939
      %v4981 = vmul.f32 %v4939, %v4980
      %v4982 = vsub.f32 1.0, %v4981
      %v4983 = vmul.f32 %v4980, %v4982
      %v4984 = vadd.f32 %v4980, %v4983
      %vm4985 = vweird.f32 %v4939
      %vm4986 = vweird.f32 %v4980
      %vm4987 = vmor %vm4985, %vm4986
      %v4988 = vsel %vm4987, %v4980, %v4984
      %v4989 = vand.u32 2147483647, %v4939
      %vm4990 = vcmp.eq.f32.partialorder %v4989, 8.507059e+37
      %v4991 = vand.u32 %v4939, 2147483648
      %v4992 = vor.u32 1.1754944e-38, %v4991
      %v4993 = vsel %vm4990, %v4992, %v4988
      %v4994 = vmul.f32 %v4926, %v4993
      %v4995 = vrcp.pop %v4943
      %v4996 = vmul.f32 %v4943, %v4995
      %v4997 = vsub.f32 1.0, %v4996
      %v4998 = vmul.f32 %v4995, %v4997
      %v4999 = vadd.f32 %v4995, %v4998
      %vm5000 = vweird.f32 %v4943
      %vm5001 = vweird.f32 %v4995
      %vm5002 = vmor %vm5000, %vm5001
      %v5003 = vsel %vm5002, %v4995, %v4999
      %v5004 = vand.u32 2147483647, %v4943
      %vm5005 = vcmp.eq.f32.partialorder %v5004, 8.507059e+37
      %v5006 = vand.u32 %v4943, 2147483648
      %v5007 = vor.u32 1.1754944e-38, %v5006
      %v5008 = vsel %vm5005, %v5007, %v5003
      %v5009 = vmul.f32 %v4927, %v5008
      %v5010 = vrcp.pop %v4947
      %v5011 = vmul.f32 %v4947, %v5010
      %v5012 = vsub.f32 1.0, %v5011
      %v5013 = vmul.f32 %v5010, %v5012
      %v5014 = vadd.f32 %v5010, %v5013
      %vm5015 = vweird.f32 %v4947
      %vm5016 = vweird.f32 %v5010
      %vm5017 = vmor %vm5015, %vm5016
      %v5018 = vsel %vm5017, %v5010, %v5014
      %v5019 = vand.u32 2147483647, %v4947
      %vm5020 = vcmp.eq.f32.partialorder %v5019, 8.507059e+37
      %v5021 = vand.u32 %v4947, 2147483648
      %v5022 = vor.u32 1.1754944e-38, %v5021
      %v5023 = vsel %vm5020, %v5022, %v5018
      %v5024 = vmul.f32 %v4928, %v5023
      %v5025 = vrcp.pop %v4951
      %v5026 = vmul.f32 %v4951, %v5025
      %v5027 = vsub.f32 1.0, %v5026
      %v5028 = vmul.f32 %v5025, %v5027
      %v5029 = vadd.f32 %v5025, %v5028
      %vm5030 = vweird.f32 %v4951
      %vm5031 = vweird.f32 %v5025
      %vm5032 = vmor %vm5030, %vm5031
      %v5033 = vsel %vm5032, %v5025, %v5029
      %v5034 = vand.u32 2147483647, %v4951
      %vm5035 = vcmp.eq.f32.partialorder %v5034, 8.507059e+37
      %v5036 = vand.u32 %v4951, 2147483648
      %v5037 = vor.u32 1.1754944e-38, %v5036
      %v5038 = vsel %vm5035, %v5037, %v5033
      %v5039 = vmul.f32 %v4929, %v5038
      %v5040 = vrcp.pop %v4955
      %v5041 = vmul.f32 %v4955, %v5040
      %v5042 = vsub.f32 1.0, %v5041
      %v5043 = vmul.f32 %v5040, %v5042
      %v5044 = vadd.f32 %v5040, %v5043
      %vm5045 = vweird.f32 %v4955
      %vm5046 = vweird.f32 %v5040
      %vm5047 = vmor %vm5045, %vm5046
      %v5048 = vsel %vm5047, %v5040, %v5044
      %v5049 = vand.u32 2147483647, %v4955
      %vm5050 = vcmp.eq.f32.partialorder %v5049, 8.507059e+37
      %v5051 = vand.u32 %v4955, 2147483648
      %v5052 = vor.u32 1.1754944e-38, %v5051
      %v5053 = vsel %vm5050, %v5052, %v5048
      %v5054 = vmul.f32 %v4930, %v5053
      %v5055 = vrcp.pop %v4959
      %v5056 = vmul.f32 %v4959, %v5055
      %v5057 = vsub.f32 1.0, %v5056
      %v5058 = vmul.f32 %v5055, %v5057
      %v5059 = vadd.f32 %v5055, %v5058
      %vm5060 = vweird.f32 %v4959
      %vm5061 = vweird.f32 %v5055
      %vm5062 = vmor %vm5060, %vm5061
      %v5063 = vsel %vm5062, %v5055, %v5059
      %v5064 = vand.u32 2147483647, %v4959
      %vm5065 = vcmp.eq.f32.partialorder %v5064, 8.507059e+37
      %v5066 = vand.u32 %v4959, 2147483648
      %v5067 = vor.u32 1.1754944e-38, %v5066
      %v5068 = vsel %vm5065, %v5067, %v5063
      %v5069 = vmul.f32 %v4931, %v5068
      %v5070 = vrcp.pop %v4963
      %v5071 = vmul.f32 %v4963, %v5070
      %v5072 = vsub.f32 1.0, %v5071
      %v5073 = vmul.f32 %v5070, %v5072
      %v5074 = vadd.f32 %v5070, %v5073
      %vm5075 = vweird.f32 %v4963
      %vm5076 = vweird.f32 %v5070
      %vm5077 = vmor %vm5075, %vm5076
      %v5078 = vsel %vm5077, %v5070, %v5074
      %v5079 = vand.u32 2147483647, %v4963
      %vm5080 = vcmp.eq.f32.partialorder %v5079, 8.507059e+37
      %v5081 = vand.u32 %v4963, 2147483648
      %v5082 = vor.u32 1.1754944e-38, %v5081
      %v5083 = vsel %vm5080, %v5082, %v5078
      %v5084 = vmul.f32 %v4932, %v5083
      %v5093 = vrot.slane %v4405, 7
      %v5094 = vrot.slane %v4420, 7
      %v5095 = vrot.slane %v4435, 7
      %v5096 = vrot.slane %v4450, 7
      %v5097 = vrot.slane %v4465, 7
      %v5098 = vrot.slane %v4480, 7
      %v5099 = vrot.slane %v4495, 7
      %v5100 = vrot.slane %v4510, 7
      %v5117 = vrot.slane %v4979, 6
      %v5118 = vrot.slane %v4994, 6
      %v5119 = vrot.slane %v5009, 6
      %v5120 = vrot.slane %v5024, 6
      %v5121 = vrot.slane %v5039, 6
      %v5122 = vrot.slane %v5054, 6
      %v5123 = vrot.slane %v5069, 6
      %v5124 = vrot.slane %v5084, 6
      %vm5133 = vcmask 1040384
      %v5134 = vsel %vm5133, %v3831, %v5093
      %v5135 = vsel %vm5133, %v3846, %v5094
      %v5136 = vsel %vm5133, %v3861, %v5095
      %v5137 = vsel %vm5133, %v3876, %v5096
      %v5138 = vsel %vm5133, %v3891, %v5097
      %v5139 = vsel %vm5133, %v3906, %v5098
      %v5140 = vsel %vm5133, %v3921, %v5099
      %v5141 = vsel %vm5133, %v3936, %v5100
      %vm5142 = vcmask 1041408
      %v5143 = vsel %vm5142, %v5134, %v5117
      %v5144 = vsel %vm5142, %v5135, %v5118
      %v5145 = vsel %vm5142, %v5136, %v5119
      %v5146 = vsel %vm5142, %v5137, %v5120
      %v5147 = vsel %vm5142, %v5138, %v5121
      %v5148 = vsel %vm5142, %v5139, %v5122
      %v5149 = vsel %vm5142, %v5140, %v5123
      %v5150 = vsel %vm5142, %v5141, %v5124
      %5159 = vrot.lane.b32.xlu0 %v5143, 125
      %v5160 = vpop.permute.xlu0 %5159
      %5161 = vrot.lane.b32.xlu0 %v5144, 125
      %v5162 = vpop.permute.xlu0 %5161
      %5163 = vrot.lane.b32.xlu0 %v5145, 125
      %v5164 = vpop.permute.xlu0 %5163
      %5165 = vrot.lane.b32.xlu0 %v5146, 125
      %v5166 = vpop.permute.xlu0 %5165
      %5167 = vrot.lane.b32.xlu0 %v5147, 125
      %v5168 = vpop.permute.xlu0 %5167
      %5169 = vrot.lane.b32.xlu0 %v5148, 125
      %v5170 = vpop.permute.xlu0 %5169
      %5171 = vrot.lane.b32.xlu0 %v5149, 125
      %v5172 = vpop.permute.xlu0 %5171
      %5173 = vrot.lane.b32.xlu0 %v5150, 125
      %v5174 = vpop.permute.xlu0 %5173
      %vm5183 = vcmask 518144
      %5184 = vst.msk [vmem:[%s229] sm:$0x7] %vm5183, %v5160
      %5185 = vst.msk [vmem:[%s229 + $0x4] sm:$0x7] %vm5183, %v5162
      %5186 = vst.msk [vmem:[%s229 + $0x8] sm:$0x7] %vm5183, %v5164
      %5187 = vst.msk [vmem:[%s229 + $0xc] sm:$0x7] %vm5183, %v5166
      %5188 = vst.msk [vmem:[%s229 + $0x10] sm:$0x7] %vm5183, %v5168
      %5189 = vst.msk [vmem:[%s229 + $0x14] sm:$0x7] %vm5183, %v5170
      %5190 = vst.msk [vmem:[%s229 + $0x18] sm:$0x7] %vm5183, %v5172
      %5191 = vst.msk [vmem:[%s229 + $0x1c] sm:$0x7] %vm5183, %v5174
      %s5192 = smul.u32 8, %s16
      %p5193 = scmp.lt.s32.totalorder %s5192, 15
      %s5194 = scalar_select %p5193, %s5192, 15
      %s5195 = smul.addr %s5194, 4
      %s5196 = scalar_lea.vmem %s5, %s5195
      // Predicated region
      $region41: #{edge_tokenizer_forward.1} parent=39 // pred_check
        %p5197 = pneg %p144
      $region42: #{edge_tokenizer_forward.1} parent=39 // pred_check_branch
        %5199 = sbr.rel (%p5197) target = $region44
      $region43: #{edge_tokenizer_forward.1} parent=39 // pred_region
        %s5200 = smul.u32 8, %s16
      $region44: #{edge_tokenizer_forward.1} parent=39 // pred_fallthru
        _
    $region40: #{edge_tokenizer_forward.1} parent=5 // pred_fallthru
      _
    %p5201 = scmp.le.s32.totalorder 2, %s11
    // Predicated region
    $region45: #{edge_tokenizer_forward.1} parent=5 // pred_check
      %p5202 = pneg %p5201
    $region46: #{edge_tokenizer_forward.1} parent=5 // pred_check_branch
      %5204 = sbr.rel (%p5202) target = $region48
    $region47: #{edge_tokenizer_forward.1} parent=5 // pred_region
      %s5205 = ssub.s32 %s11, 2
      // Predicated region
      $region49: #{edge_tokenizer_forward.1} parent=47 // pred_check
        %p5206 = pneg %p150
      $region50: #{edge_tokenizer_forward.1} parent=47 // pred_check_branch
        %5208 = sbr.rel (%p5206) target = $region52
      $region51: #{edge_tokenizer_forward.1} parent=47 // pred_region
        %s5209 = smul.u32 8, %s17
        %p5210 = scmp.lt.s32.totalorder %s5209, 15
        %s5211 = scalar_select %p5210, %s5209, 15
        %s5212 = smul.addr %s5211, 4
        %s5213 = scalar_lea.vmem %s5, %s5212
      $region52: #{edge_tokenizer_forward.1} parent=47 // pred_fallthru
        _
    $region48: #{edge_tokenizer_forward.1} parent=5 // pred_fallthru
      _
  $region6: #{edge_tokenizer_forward.1} parent=0 // loop_footer
    %s15 = sadd.s32 1, %s11
  $region7: #{edge_tokenizer_forward.1} parent=0 // loop_footer_branch
    %10 = sbr.rel target = $region3
  $region8: #{edge_tokenizer_forward.1} parent=0 // loop_exit
    _

</llo_original>
